<compile_context>
chip_gen: v7x
topology: tpu7x:2x2x1
jax: 0.10.0
libtpu: 0.0.40
codegen_flags: <defaults>
</compile_context>

<pallas_src>
import functools

import jax
import jax.numpy as jnp
from jax.experimental import pallas as pl
from jax.experimental.pallas import tpu as pltpu

_VMEM_LIMIT = 64 * 1024 * 1024  # within physical VMEM on v5e/v6e/v7x


def _largest_divisor(n, candidates):
    for c in candidates:
        if n % c == 0:
            return c
    return n


# ----------------------------------------------------------------------------
# Kernel 1: hoisted input projection (both directions in one matmul)
# ----------------------------------------------------------------------------
def _input_proj_kernel(x_ref, w_ref, b_ref, o_ref):
    x = x_ref[...].astype(jnp.bfloat16)       # bf16 operands -> full MXU rate
    o_ref[...] = (jnp.dot(x, w_ref[...], preferred_element_type=jnp.float32)
                  + b_ref[...])


def input_projection(x_tbf, w_both, b_both):
    """(T,B,F) f32 -> (T,B,8H) f32 gate pre-activations for fwd+bwd directions.

    w_both: (F, 8H) bf16 = concat([W_ih_fwd, W_ih_bwd], axis=1)
    b_both: (1, 8H) f32  = concat([b_fwd, b_bwd], axis=1)   (b_ih + b_hh folded)
    """
    T, B, F = x_tbf.shape
    N = w_both.shape[1]
    R = T * B
    x2d = x_tbf.reshape(R, F)
    Rb = _largest_divisor(R, (512, 256, 128, 64, 32, 16, 8))
    out = pl.pallas_call(
        _input_proj_kernel,
        out_shape=jax.ShapeDtypeStruct((R, N), jnp.float32),
        grid_spec=pltpu.PrefetchScalarGridSpec(
            num_scalar_prefetch=0,
            grid=(R // Rb,),
            in_specs=[
                pl.BlockSpec((Rb, F), lambda i: (i, 0)),
                pl.BlockSpec((F, N), lambda i: (0, 0)),   # constant -> resident
                pl.BlockSpec((1, N), lambda i: (0, 0)),
            ],
            out_specs=pl.BlockSpec((Rb, N), lambda i: (i, 0)),
        ),
        compiler_params=pltpu.CompilerParams(
            dimension_semantics=("parallel",),
            vmem_limit_bytes=_VMEM_LIMIT),
    )(x2d, w_both, b_both)
    return out.reshape(T, B, N)


# ----------------------------------------------------------------------------
# Kernel 2: fused bidirectional LSTM recurrence (time-blocked)
# ----------------------------------------------------------------------------
def _bilstm_kernel(gf_ref, gb_ref, whf_ref, whb_ref,
                   yf_ref, yb_ref, hNf_ref, hNb_ref,
                   hf_sc, cf_sc, hb_sc, cb_sc, *, hidden, tt):
    """One layer, both directions, Tt time steps per grid iteration.

    gf_ref : (Tt, B, 4H) fwd gate pre-activations (time block tb, ascending time)
    gb_ref : (Tt, B, 4H) bwd gate pre-activations (time block nt-1-tb)
    whf/whb: (H, 4H)     bf16 hidden->gates weights (fwd / bwd)
    yf/yb  : (Tt, B, H)  per-step hidden outputs, written to original time slots
    hNf/hNb: (B, H)      final hidden states (written on last grid step only)
    *_sc   : (B, H)      f32 VMEM carries across grid steps.
    Gate order follows PyTorch: [i, f, g, o].
    """
    tb = pl.program_id(0)
    H = hidden

    @pl.when(tb == 0)
    def _():
        hf_sc[...] = jnp.zeros_like(hf_sc)
        cf_sc[...] = jnp.zeros_like(cf_sc)
        hb_sc[...] = jnp.zeros_like(hb_sc)
        cb_sc[...] = jnp.zeros_like(cb_sc)

    whf = whf_ref[...]
    whb = whb_ref[...]

    def gates(pre):
        i_g = jax.nn.sigmoid(pre[:, 0 * H:1 * H])
        f_g = jax.nn.sigmoid(pre[:, 1 * H:2 * H])
        g_g = jnp.tanh(pre[:, 2 * H:3 * H])
        o_g = jax.nn.sigmoid(pre[:, 3 * H:4 * H])
        return i_g, f_g, g_g, o_g

    h_f, c_f = hf_sc[...], cf_sc[...]
    h_b, c_b = hb_sc[...], cb_sc[...]

    # Fully unrolled at trace time (static Tt) -> straight-line code for the
    # whole block; the two independent recurrence chains interleave.
    for j in range(tt):
        jb = tt - 1 - j   # backward chain walks its (time-reversed) block backwards

        pre_f = gf_ref[j, :, :] + jnp.dot(
            h_f.astype(jnp.bfloat16), whf, preferred_element_type=jnp.float32)
        pre_b = gb_ref[jb, :, :] + jnp.dot(
            h_b.astype(jnp.bfloat16), whb, preferred_element_type=jnp.float32)

        i_f, f_f, g_f, o_f = gates(pre_f)
        i_b, f_b, g_b, o_b = gates(pre_b)

        c_f = f_f * c_f + i_f * g_f
        h_f = o_f * jnp.tanh(c_f)
        c_b = f_b * c_b + i_b * g_b
        h_b = o_b * jnp.tanh(c_b)

        yf_ref[j, :, :] = h_f
        yb_ref[jb, :, :] = h_b

    hf_sc[...], cf_sc[...] = h_f, c_f
    hb_sc[...], cb_sc[...] = h_b, c_b

    @pl.when(tb == pl.num_programs(0) - 1)
    def _():
        hNf_ref[...] = h_f   # final fwd hidden (t = T-1)
        hNb_ref[...] = h_b   # final bwd hidden (t = 0)


def bilstm_layer(x_tbf, w_ih_both, b_both, w_hh_f, w_hh_b):
    """One bidirectional LSTM layer.

    x_tbf: (T, B, F) f32.  Returns (y (T,B,2H) f32, h_fwd (B,H), h_bwd (B,H)).
    Per-step outputs of the backward direction are written back to their original
    time positions (PyTorch convention).
    """
    T, B, F = x_tbf.shape
    H = w_hh_f.shape[0]
    assert 4 * H == w_hh_f.shape[1] and H % 128 == 0  # keep gate slices lane-aligned

    # Hoisted input projection (one MXU-efficient matmul over T*B rows).
    gates_in = input_projection(x_tbf, w_ih_both, b_both)   # (T, B, 8H) f32
    g_f = gates_in[:, :, :4 * H]
    g_b = gates_in[:, :, 4 * H:]

    Tt = _largest_divisor(T, (16, 8, 4, 2, 1))
    nt = T // Tt
    kernel = functools.partial(_bilstm_kernel, hidden=H, tt=Tt)

    y_f, y_b, h_fwd, h_bwd = pl.pallas_call(
        kernel,
        out_shape=(
            jax.ShapeDtypeStruct((T, B, H), jnp.float32),
            jax.ShapeDtypeStruct((T, B, H), jnp.float32),
            jax.ShapeDtypeStruct((B, H), jnp.float32),
            jax.ShapeDtypeStruct((B, H), jnp.float32),
        ),
        grid_spec=pltpu.PrefetchScalarGridSpec(
            num_scalar_prefetch=0,
            grid=(nt,),
            in_specs=[
                pl.BlockSpec((Tt, B, 4 * H), lambda tb: (tb, 0, 0)),
                pl.BlockSpec((Tt, B, 4 * H), lambda tb: (nt - 1 - tb, 0, 0)),
                pl.BlockSpec((H, 4 * H), lambda tb: (0, 0)),   # constant -> resident
                pl.BlockSpec((H, 4 * H), lambda tb: (0, 0)),
            ],
            out_specs=(
                pl.BlockSpec((Tt, B, H), lambda tb: (tb, 0, 0)),
                pl.BlockSpec((Tt, B, H), lambda tb: (nt - 1 - tb, 0, 0)),
                pl.BlockSpec((B, H), lambda tb: (0, 0)),
                pl.BlockSpec((B, H), lambda tb: (0, 0)),
            ),
            scratch_shapes=[pltpu.VMEM((B, H), jnp.float32)] * 4,  # h/c fwd, h/c bwd
        ),
        compiler_params=pltpu.CompilerParams(
            dimension_semantics=("arbitrary",),   # sequential recurrence over time
            vmem_limit_bytes=_VMEM_LIMIT),
    )(g_f, g_b, w_hh_f, w_hh_b)

    y = jnp.concatenate([y_f, y_b], axis=-1)                 # (T, B, 2H)
    return y, h_fwd, h_bwd


# ----------------------------------------------------------------------------
# Kernel 3: final Linear (lane-dense padded output)
# ----------------------------------------------------------------------------
def _dense_kernel(x_ref, w_ref, b_ref, o_ref):
    o_ref[...] = (jnp.dot(x_ref[...], w_ref[...],
                          preferred_element_type=jnp.float32) + b_ref[...])


def dense(x, w, b):
    """x: (B, Din), w: (Din, Dout), b: (1, Dout) -> (B, Dout).
    Output last dim is padded to 128 lanes inside the kernel (unmasked stores)
    and sliced back here."""
    B, Din = x.shape
    Dout = w.shape[1]
    Np = max(128, ((Dout + 127) // 128) * 128)
    w_p = jnp.pad(w, ((0, 0), (0, Np - Dout)))
    b_p = jnp.pad(b, ((0, 0), (0, Np - Dout)))
    out = pl.pallas_call(
        _dense_kernel,
        out_shape=jax.ShapeDtypeStruct((B, Np), jnp.float32),
        grid_spec=pltpu.PrefetchScalarGridSpec(
            num_scalar_prefetch=0,
            grid=(1,),
            in_specs=[
                pl.BlockSpec((B, Din), lambda i: (0, 0)),
                pl.BlockSpec((Din, Np), lambda i: (0, 0)),
                pl.BlockSpec((1, Np), lambda i: (0, 0)),
            ],
            out_specs=pl.BlockSpec((B, Np), lambda i: (0, 0)),
        ),
        compiler_params=pltpu.CompilerParams(
            dimension_semantics=("arbitrary",)),
    )(x, w_p, b_p)
    return out[:, :Dout]


# ----------------------------------------------------------------------------
# Model forward (inference mode)
# ----------------------------------------------------------------------------
def rnn_model_forward(tokens, params):
    """tokens: (B, T) int32 -> logits (B, 2) float32."""
    B, T = tokens.shape
    # Embedding lookup (glue: gather in plain JAX). dropout(0.3) -> identity.
    emb = jnp.take(params["embedding"], tokens, axis=0)        # (B, T, E) f32

    # Pad batch once to the 8-row sublane quantum so every (B, .) tile is dense.
    Bp = max(8, ((B + 7) // 8) * 8)
    if Bp != B:
        emb = jnp.pad(emb, ((0, Bp - B), (0, 0), (0, 0)))

    x = jnp.transpose(emb, (1, 0, 2)).astype(jnp.float32)      # time-major (T, Bp, E)

    h_fwd = h_bwd = None
    layer_in = x
    for layer in range(2):                                     # n_layers = 2
        p = params["lstm"][layer]
        layer_in, h_fwd, h_bwd = bilstm_layer(
            layer_in, p["w_ih_both"], p["b_both"], p["w_hh_f"], p["w_hh_b"])
        # inter-layer dropout(p=0.3) -> identity at inference.

    # hidden.view(L,2,B,H); cat([hidden[-1,-1], hidden[-1,-2]]) == [bwd, fwd] of last layer
    hidden = jnp.concatenate([h_bwd, h_fwd], axis=1)           # (Bp, 2H)
    logits = dense(hidden, params["out_w"], params["out_b"])   # (Bp, 2)
    return logits[:B]                                          # drop batch padding


# ----------------------------------------------------------------------------
# Deterministic synthetic parameter init (shapes follow the nn.Module)
# ----------------------------------------------------------------------------
def init_params(key, vocab_size, embed_dim, hidden_size):
    keys = iter(jax.random.split(key, 64))
    H = hidden_size
    k = 1.0 / jnp.sqrt(jnp.float32(H))

    def uni(shape, dtype=jnp.float32):
        return jax.random.uniform(next(keys), shape, jnp.float32, -k, k).astype(dtype)

    params = {
        "embedding": jax.random.normal(next(keys), (vocab_size, embed_dim),
                                       jnp.float32),
        "lstm": {},
        # nn.Linear(2H, 2): stored as (2H, 2) for x @ W layout.
        "out_w": uni((2 * H, 2)),
        "out_b": uni((1, 2)),
    }
    for layer in range(2):
        in_dim = embed_dim if layer == 0 else 2 * H
        wih_f = uni((in_dim, 4 * H), jnp.bfloat16)   # bf16 weights: half the VMEM/DMA,
        wih_b = uni((in_dim, 4 * H), jnp.bfloat16)   # full MXU rate on v6e/v7x
        b_f = uni((1, 4 * H))                        # b_ih + b_hh combined (fwd)
        b_b = uni((1, 4 * H))                        # b_ih + b_hh combined (bwd)
        params["lstm"][layer] = {
            "w_ih_both": jnp.concatenate([wih_f, wih_b], axis=1),   # (F, 8H) bf16
            "b_both": jnp.concatenate([b_f, b_b], axis=1),          # (1, 8H) f32
            "w_hh_f": uni((H, 4 * H), jnp.bfloat16),
            "w_hh_b": uni((H, 4 * H), jnp.bfloat16),
        }
    return params


if __name__ == "__main__":
    # Scaled-down demo config (module defaults: embed=300, hidden=1024).
    B, T = 2, 8
    VOCAB, E, H = 50, 64, 128

    key = jax.random.PRNGKey(0)
    params = init_params(key, VOCAB, E, H)
    tokens = jax.random.randint(jax.random.fold_in(key, 999), (B, T), 0, VOCAB,
                                dtype=jnp.int32)

    logits = jax.jit(rnn_model_forward)(tokens, params)
    logits = jax.block_until_ready(logits)
    assert logits.shape == (B, 2) and logits.dtype == jnp.float32
    print("KERNEL_OK")
</pallas_src>

<mosaic_0001>
module attributes {stable_mosaic.version = 11 : i64} {
  func.func @_input_proj_kernel(%arg0: i32, %arg1: memref<64x64xf32, #tpu.memory_space<vmem>>, %arg2: memref<64x1024xbf16, #tpu.memory_space<vmem>>, %arg3: memref<1x1024xf32, #tpu.memory_space<vmem>>, %arg4: memref<64x1024xf32, #tpu.memory_space<vmem>>) attributes {dimension_semantics = [#tpu.dimension_semantics<parallel>], iteration_bounds = array<i64: 1>, scalar_prefetch = 0 : i64, scratch_operands = 0 : i64, tpu.core_type = #tpu.core_type<tc>, window_params = [{transform_indices = @transform_0, window_bounds = array<i64: 64, 64>}, {pipeline_mode = #tpu.pipeline_mode<synchronous>, transform_indices = @transform_1, window_bounds = array<i64: 64, 1024>}, {pipeline_mode = #tpu.pipeline_mode<synchronous>, transform_indices = @transform_2, window_bounds = array<i64: 1, 1024>}, {transform_indices = @transform_3, window_bounds = array<i64: 64, 1024>}]} {
    %c0 = arith.constant 0 : index
    %c0_0 = arith.constant 0 : index
    %0 = vector.load %arg1[%c0, %c0_0] : memref<64x64xf32, #tpu.memory_space<vmem>>, vector<64x64xf32>
    %1 = arith.truncf %0 : vector<64x64xf32> to vector<64x64xbf16>
    %c0_1 = arith.constant 0 : index
    %c0_2 = arith.constant 0 : index
    %2 = vector.load %arg2[%c0_1, %c0_2] : memref<64x1024xbf16, #tpu.memory_space<vmem>>, vector<64x1024xbf16>
    %cst = arith.constant dense<0.000000e+00> : vector<64x1024xf32>
    %3 = tpu.matmul %1, %2, %cst {dimension_numbers = #tpu.dot_dimension_numbers<[1], [0], [0], [1], [0, 0, 1, 1], [], []>} : vector<64x64xbf16>, vector<64x1024xbf16>, vector<64x1024xf32> -> vector<64x1024xf32>
    %c0_3 = arith.constant 0 : index
    %c0_4 = arith.constant 0 : index
    %4 = vector.load %arg3[%c0_3, %c0_4] : memref<1x1024xf32, #tpu.memory_space<vmem>>, vector<1x1024xf32>
    %5 = vector.broadcast %4 : vector<1x1024xf32> to vector<64x1024xf32>
    %6 = arith.addf %3, %5 : vector<64x1024xf32>
    %c0_5 = arith.constant 0 : index
    %c0_6 = arith.constant 0 : index
    %7 = vector.load %arg4[%c0_5, %c0_6] : memref<64x1024xf32, #tpu.memory_space<vmem>>, vector<64x1024xf32>
    tpu.vector_store %arg4[%c0_5, %c0_6], %6 {strides = array<i32>} : memref<64x1024xf32, #tpu.memory_space<vmem>>, vector<64x1024xf32>,
    return
  }
  func.func @transform_0(%arg0: i32) -> (i32, i32) {
    %c0_i32 = arith.constant 0 : i32
    %c0_i32_0 = arith.constant 0 : i32
    return %arg0, %c0_i32 : i32, i32
  }
  func.func @transform_1(%arg0: i32) -> (i32, i32) {
    %c0_i32 = arith.constant 0 : i32
    %c0_i32_0 = arith.constant 0 : i32
    %c0_i32_1 = arith.constant 0 : i32
    return %c0_i32, %c0_i32_0 : i32, i32
  }
  func.func @transform_2(%arg0: i32) -> (i32, i32) {
    %c0_i32 = arith.constant 0 : i32
    %c0_i32_0 = arith.constant 0 : i32
    %c0_i32_1 = arith.constant 0 : i32
    return %c0_i32, %c0_i32_0 : i32, i32
  }
  func.func @transform_3(%arg0: i32) -> (i32, i32) {
    %c0_i32 = arith.constant 0 : i32
    %c0_i32_0 = arith.constant 0 : i32
    return %arg0, %c0_i32 : i32, i32
  }
}

module attributes {stable_mosaic.version = 11 : i64} {
  func.func @_input_proj_kernel(%arg0: i32, %arg1: memref<64x256xf32, #tpu.memory_space<vmem>>, %arg2: memref<256x1024xbf16, #tpu.memory_space<vmem>>, %arg3: memref<1x1024xf32, #tpu.memory_space<vmem>>, %arg4: memref<64x1024xf32, #tpu.memory_space<vmem>>) attributes {dimension_semantics = [#tpu.dimension_semantics<parallel>], iteration_bounds = array<i64: 1>, scalar_prefetch = 0 : i64, scratch_operands = 0 : i64, tpu.core_type = #tpu.core_type<tc>, window_params = [{transform_indices = @transform_0, window_bounds = array<i64: 64, 256>}, {pipeline_mode = #tpu.pipeline_mode<synchronous>, transform_indices = @transform_1, window_bounds = array<i64: 256, 1024>}, {pipeline_mode = #tpu.pipeline_mode<synchronous>, transform_indices = @transform_2, window_bounds = array<i64: 1, 1024>}, {transform_indices = @transform_3, window_bounds = array<i64: 64, 1024>}]} {
    %c0 = arith.constant 0 : index
    %c0_0 = arith.constant 0 : index
    %0 = vector.load %arg1[%c0, %c0_0] : memref<64x256xf32, #tpu.memory_space<vmem>>, vector<64x256xf32>
    %1 = arith.truncf %0 : vector<64x256xf32> to vector<64x256xbf16>
    %c0_1 = arith.constant 0 : index
    %c0_2 = arith.constant 0 : index
    %2 = vector.load %arg2[%c0_1, %c0_2] : memref<256x1024xbf16, #tpu.memory_space<vmem>>, vector<256x1024xbf16>
    %cst = arith.constant dense<0.000000e+00> : vector<64x1024xf32>
    %3 = tpu.matmul %1, %2, %cst {dimension_numbers = #tpu.dot_dimension_numbers<[1], [0], [0], [1], [0, 0, 1, 1], [], []>} : vector<64x256xbf16>, vector<256x1024xbf16>, vector<64x1024xf32> -> vector<64x1024xf32>
    %c0_3 = arith.constant 0 : index
    %c0_4 = arith.constant 0 : index
    %4 = vector.load %arg3[%c0_3, %c0_4] : memref<1x1024xf32, #tpu.memory_space<vmem>>, vector<1x1024xf32>
    %5 = vector.broadcast %4 : vector<1x1024xf32> to vector<64x1024xf32>
    %6 = arith.addf %3, %5 : vector<64x1024xf32>
    %c0_5 = arith.constant 0 : index
    %c0_6 = arith.constant 0 : index
    %7 = vector.load %arg4[%c0_5, %c0_6] : memref<64x1024xf32, #tpu.memory_space<vmem>>, vector<64x1024xf32>
    tpu.vector_store %arg4[%c0_5, %c0_6], %6 {strides = array<i32>} : memref<64x1024xf32, #tpu.memory_space<vmem>>, vector<64x1024xf32>,
    return
  }
  func.func @transform_0(%arg0: i32) -> (i32, i32) {
    %c0_i32 = arith.constant 0 : i32
    %c0_i32_0 = arith.constant 0 : i32
    return %arg0, %c0_i32 : i32, i32
  }
  func.func @transform_1(%arg0: i32) -> (i32, i32) {
    %c0_i32 = arith.constant 0 : i32
    %c0_i32_0 = arith.constant 0 : i32
    %c0_i32_1 = arith.constant 0 : i32
    return %c0_i32, %c0_i32_0 : i32, i32
  }
  func.func @transform_2(%arg0: i32) -> (i32, i32) {
    %c0_i32 = arith.constant 0 : i32
    %c0_i32_0 = arith.constant 0 : i32
    %c0_i32_1 = arith.constant 0 : i32
    return %c0_i32, %c0_i32_0 : i32, i32
  }
  func.func @transform_3(%arg0: i32) -> (i32, i32) {
    %c0_i32 = arith.constant 0 : i32
    %c0_i32_0 = arith.constant 0 : i32
    return %arg0, %c0_i32 : i32, i32
  }
}

module attributes {stable_mosaic.version = 11 : i64} {
  func.func @_bilstm_kernel(%arg0: i32, %arg1: memref<8x8x512xf32, #tpu.memory_space<vmem>>, %arg2: memref<8x8x512xf32, #tpu.memory_space<vmem>>, %arg3: memref<128x512xbf16, #tpu.memory_space<vmem>>, %arg4: memref<128x512xbf16, #tpu.memory_space<vmem>>, %arg5: memref<8x8x128xf32, #tpu.memory_space<vmem>>, %arg6: memref<8x8x128xf32, #tpu.memory_space<vmem>>, %arg7: memref<8x128xf32, #tpu.memory_space<vmem>>, %arg8: memref<8x128xf32, #tpu.memory_space<vmem>>, %arg9: memref<8x128xf32, #tpu.memory_space<vmem>>, %arg10: memref<8x128xf32, #tpu.memory_space<vmem>>, %arg11: memref<8x128xf32, #tpu.memory_space<vmem>>, %arg12: memref<8x128xf32, #tpu.memory_space<vmem>>) attributes {dimension_semantics = [#tpu.dimension_semantics<arbitrary>], iteration_bounds = array<i64: 1>, scalar_prefetch = 0 : i64, scratch_operands = 4 : i64, tpu.core_type = #tpu.core_type<tc>, window_params = [{transform_indices = @transform_0, window_bounds = array<i64: 8, 8, 512>}, {transform_indices = @transform_1, window_bounds = array<i64: 8, 8, 512>}, {pipeline_mode = #tpu.pipeline_mode<synchronous>, transform_indices = @transform_2, window_bounds = array<i64: 128, 512>}, {pipeline_mode = #tpu.pipeline_mode<synchronous>, transform_indices = @transform_3, window_bounds = array<i64: 128, 512>}, {transform_indices = @transform_4, window_bounds = array<i64: 8, 8, 128>}, {transform_indices = @transform_5, window_bounds = array<i64: 8, 8, 128>}, {pipeline_mode = #tpu.pipeline_mode<synchronous>, transform_indices = @transform_6, window_bounds = array<i64: 8, 128>}, {pipeline_mode = #tpu.pipeline_mode<synchronous>, transform_indices = @transform_7, window_bounds = array<i64: 8, 128>}]} {
    %c0_i32 = arith.constant 0 : i32
    %0 = arith.cmpi eq, %arg0, %c0_i32 : i32
    %1 = arith.extui %0 : i1 to i32
    %c0_i32_0 = arith.constant 0 : i32
    %2 = arith.cmpi ne, %1, %c0_i32_0 : i32
    scf.if %2 {
      %cst_174 = arith.constant 0.000000e+00 : f32
      %544 = vector.broadcast %cst_174 : f32 to vector<8x128xf32>
      %c0_175 = arith.constant 0 : index
      %c0_176 = arith.constant 0 : index
      %545 = vector.load %arg9[%c0_175, %c0_176] : memref<8x128xf32, #tpu.memory_space<vmem>>, vector<8x128xf32>
      tpu.vector_store %arg9[%c0_175, %c0_176], %544 {strides = array<i32>} : memref<8x128xf32, #tpu.memory_space<vmem>>, vector<8x128xf32>,
      %cst_177 = arith.constant 0.000000e+00 : f32
      %546 = vector.broadcast %cst_177 : f32 to vector<8x128xf32>
      %c0_178 = arith.constant 0 : index
      %c0_179 = arith.constant 0 : index
      %547 = vector.load %arg10[%c0_178, %c0_179] : memref<8x128xf32, #tpu.memory_space<vmem>>, vector<8x128xf32>
      tpu.vector_store %arg10[%c0_178, %c0_179], %546 {strides = array<i32>} : memref<8x128xf32, #tpu.memory_space<vmem>>, vector<8x128xf32>,
      %cst_180 = arith.constant 0.000000e+00 : f32
      %548 = vector.broadcast %cst_180 : f32 to vector<8x128xf32>
      %c0_181 = arith.constant 0 : index
      %c0_182 = arith.constant 0 : index
      %549 = vector.load %arg11[%c0_181, %c0_182] : memref<8x128xf32, #tpu.memory_space<vmem>>, vector<8x128xf32>
      tpu.vector_store %arg11[%c0_181, %c0_182], %548 {strides = array<i32>} : memref<8x128xf32, #tpu.memory_space<vmem>>, vector<8x128xf32>,
      %cst_183 = arith.constant 0.000000e+00 : f32
      %550 = vector.broadcast %cst_183 : f32 to vector<8x128xf32>
      %c0_184 = arith.constant 0 : index
      %c0_185 = arith.constant 0 : index
      %551 = vector.load %arg12[%c0_184, %c0_185] : memref<8x128xf32, #tpu.memory_space<vmem>>, vector<8x128xf32>
      tpu.vector_store %arg12[%c0_184, %c0_185], %550 {strides = array<i32>} : memref<8x128xf32, #tpu.memory_space<vmem>>, vector<8x128xf32>,
    } else {
    }
    %c0 = arith.constant 0 : index
    %c0_1 = arith.constant 0 : index
    %3 = vector.load %arg3[%c0, %c0_1] : memref<128x512xbf16, #tpu.memory_space<vmem>>, vector<128x512xbf16>
    %c0_2 = arith.constant 0 : index
    %c0_3 = arith.constant 0 : index
    %4 = vector.load %arg4[%c0_2, %c0_3] : memref<128x512xbf16, #tpu.memory_space<vmem>>, vector<128x512xbf16>
    %c0_4 = arith.constant 0 : index
    %c0_5 = arith.constant 0 : index
    %5 = vector.load %arg9[%c0_4, %c0_5] : memref<8x128xf32, #tpu.memory_space<vmem>>, vector<8x128xf32>
    %c0_6 = arith.constant 0 : index
    %c0_7 = arith.constant 0 : index
    %6 = vector.load %arg10[%c0_6, %c0_7] : memref<8x128xf32, #tpu.memory_space<vmem>>, vector<8x128xf32>
    %c0_8 = arith.constant 0 : index
    %c0_9 = arith.constant 0 : index
    %7 = vector.load %arg11[%c0_8, %c0_9] : memref<8x128xf32, #tpu.memory_space<vmem>>, vector<8x128xf32>
    %c0_10 = arith.constant 0 : index
    %c0_11 = arith.constant 0 : index
    %8 = vector.load %arg12[%c0_10, %c0_11] : memref<8x128xf32, #tpu.memory_space<vmem>>, vector<8x128xf32>
    %c0_12 = arith.constant 0 : index
    %c0_13 = arith.constant 0 : index
    %c0_14 = arith.constant 0 : index
    %9 = vector.load %arg1[%c0_12, %c0_13, %c0_14] : memref<8x8x512xf32, #tpu.memory_space<vmem>>, vector<1x8x512xf32>
    %10 = vector.shape_cast %9 : vector<1x8x512xf32> to vector<8x512xf32>
    %11 = arith.truncf %5 : vector<8x128xf32> to vector<8x128xbf16>
    %cst = arith.constant dense<0.000000e+00> : vector<8x512xf32>
    %12 = tpu.matmul %11, %3, %cst {dimension_numbers = #tpu.dot_dimension_numbers<[1], [0], [0], [1], [0, 0, 1, 1], [], []>} : vector<8x128xbf16>, vector<128x512xbf16>, vector<8x512xf32> -> vector<8x512xf32>
    %13 = arith.addf %10, %12 : vector<8x512xf32>
    %c7 = arith.constant 7 : index
    %c0_15 = arith.constant 0 : index
    %c0_16 = arith.constant 0 : index
    %14 = vector.load %arg2[%c7, %c0_15, %c0_16] : memref<8x8x512xf32, #tpu.memory_space<vmem>>, vector<1x8x512xf32>
    %15 = vector.shape_cast %14 : vector<1x8x512xf32> to vector<8x512xf32>
    %16 = arith.truncf %7 : vector<8x128xf32> to vector<8x128xbf16>
    %cst_17 = arith.constant dense<0.000000e+00> : vector<8x512xf32>
    %17 = tpu.matmul %16, %4, %cst_17 {dimension_numbers = #tpu.dot_dimension_numbers<[1], [0], [0], [1], [0, 0, 1, 1], [], []>} : vector<8x128xbf16>, vector<128x512xbf16>, vector<8x512xf32> -> vector<8x512xf32>
    %18 = arith.addf %15, %17 : vector<8x512xf32>
    %19 = vector.extract_strided_slice %13 {offsets = [0, 0], sizes = [8, 128], strides = [1, 1]} : vector<8x512xf32> to vector<8x128xf32>
    %20 = arith.negf %19 : vector<8x128xf32>
    %21 = math.exp %20 : vector<8x128xf32>
    %cst_18 = arith.constant 1.000000e+00 : f32
    %22 = vector.broadcast %cst_18 : f32 to vector<8x128xf32>
    %23 = arith.addf %22, %21 : vector<8x128xf32>
    %24 = arith.divf %22, %23 : vector<8x128xf32>
    %25 = vector.extract_strided_slice %13 {offsets = [0, 128], sizes = [8, 128], strides = [1, 1]} : vector<8x512xf32> to vector<8x128xf32>
    %26 = arith.negf %25 : vector<8x128xf32>
    %27 = math.exp %26 : vector<8x128xf32>
    %cst_19 = arith.constant 1.000000e+00 : f32
    %28 = vector.broadcast %cst_19 : f32 to vector<8x128xf32>
    %29 = arith.addf %28, %27 : vector<8x128xf32>
    %30 = arith.divf %28, %29 : vector<8x128xf32>
    %31 = vector.extract_strided_slice %13 {offsets = [0, 256], sizes = [8, 128], strides = [1, 1]} : vector<8x512xf32> to vector<8x128xf32>
    %32 = math.tanh %31 : vector<8x128xf32>
    %33 = vector.extract_strided_slice %13 {offsets = [0, 384], sizes = [8, 128], strides = [1, 1]} : vector<8x512xf32> to vector<8x128xf32>
    %34 = arith.negf %33 : vector<8x128xf32>
    %35 = math.exp %34 : vector<8x128xf32>
    %cst_20 = arith.constant 1.000000e+00 : f32
    %36 = vector.broadcast %cst_20 : f32 to vector<8x128xf32>
    %37 = arith.addf %36, %35 : vector<8x128xf32>
    %38 = arith.divf %36, %37 : vector<8x128xf32>
    %39 = vector.extract_strided_slice %18 {offsets = [0, 0], sizes = [8, 128], strides = [1, 1]} : vector<8x512xf32> to vector<8x128xf32>
    %40 = arith.negf %39 : vector<8x128xf32>
    %41 = math.exp %40 : vector<8x128xf32>
    %cst_21 = arith.constant 1.000000e+00 : f32
    %42 = vector.broadcast %cst_21 : f32 to vector<8x128xf32>
    %43 = arith.addf %42, %41 : vector<8x128xf32>
    %44 = arith.divf %42, %43 : vector<8x128xf32>
    %45 = vector.extract_strided_slice %18 {offsets = [0, 128], sizes = [8, 128], strides = [1, 1]} : vector<8x512xf32> to vector<8x128xf32>
    %46 = arith.negf %45 : vector<8x128xf32>
    %47 = math.exp %46 : vector<8x128xf32>
    %cst_22 = arith.constant 1.000000e+00 : f32
    %48 = vector.broadcast %cst_22 : f32 to vector<8x128xf32>
    %49 = arith.addf %48, %47 : vector<8x128xf32>
    %50 = arith.divf %48, %49 : vector<8x128xf32>
    %51 = vector.extract_strided_slice %18 {offsets = [0, 256], sizes = [8, 128], strides = [1, 1]} : vector<8x512xf32> to vector<8x128xf32>
    %52 = math.tanh %51 : vector<8x128xf32>
    %53 = vector.extract_strided_slice %18 {offsets = [0, 384], sizes = [8, 128], strides = [1, 1]} : vector<8x512xf32> to vector<8x128xf32>
    %54 = arith.negf %53 : vector<8x128xf32>
    %55 = math.exp %54 : vector<8x128xf32>
    %cst_23 = arith.constant 1.000000e+00 : f32
    %56 = vector.broadcast %cst_23 : f32 to vector<8x128xf32>
    %57 = arith.addf %56, %55 : vector<8x128xf32>
    %58 = arith.divf %56, %57 : vector<8x128xf32>
    %59 = arith.mulf %30, %6 : vector<8x128xf32>
    %60 = arith.mulf %24, %32 : vector<8x128xf32>
    %61 = arith.addf %59, %60 : vector<8x128xf32>
    %62 = math.tanh %61 : vector<8x128xf32>
    %63 = arith.mulf %38, %62 : vector<8x128xf32>
    %64 = arith.mulf %50, %8 : vector<8x128xf32>
    %65 = arith.mulf %44, %52 : vector<8x128xf32>
    %66 = arith.addf %64, %65 : vector<8x128xf32>
    %67 = math.tanh %66 : vector<8x128xf32>
    %68 = arith.mulf %58, %67 : vector<8x128xf32>
    %c0_24 = arith.constant 0 : index
    %c0_25 = arith.constant 0 : index
    %c0_26 = arith.constant 0 : index
    %69 = vector.load %arg5[%c0_24, %c0_25, %c0_26] : memref<8x8x128xf32, #tpu.memory_space<vmem>>, vector<1x8x128xf32>
    %70 = vector.shape_cast %69 : vector<1x8x128xf32> to vector<8x128xf32>
    %71 = vector.shape_cast %63 : vector<8x128xf32> to vector<1x8x128xf32>
    tpu.vector_store %arg5[%c0_24, %c0_25, %c0_26], %71 {strides = array<i32>} : memref<8x8x128xf32, #tpu.memory_space<vmem>>, vector<1x8x128xf32>,
    %c7_27 = arith.constant 7 : index
    %c0_28 = arith.constant 0 : index
    %c0_29 = arith.constant 0 : index
    %72 = vector.load %arg6[%c7_27, %c0_28, %c0_29] : memref<8x8x128xf32, #tpu.memory_space<vmem>>, vector<1x8x128xf32>
    %73 = vector.shape_cast %72 : vector<1x8x128xf32> to vector<8x128xf32>
    %74 = vector.shape_cast %68 : vector<8x128xf32> to vector<1x8x128xf32>
    tpu.vector_store %arg6[%c7_27, %c0_28, %c0_29], %74 {strides = array<i32>} : memref<8x8x128xf32, #tpu.memory_space<vmem>>, vector<1x8x128xf32>,
    %c1 = arith.constant 1 : index
    %c0_30 = arith.constant 0 : index
    %c0_31 = arith.constant 0 : index
    %75 = vector.load %arg1[%c1, %c0_30, %c0_31] : memref<8x8x512xf32, #tpu.memory_space<vmem>>, vector<1x8x512xf32>
    %76 = vector.shape_cast %75 : vector<1x8x512xf32> to vector<8x512xf32>
    %77 = arith.truncf %63 : vector<8x128xf32> to vector<8x128xbf16>
    %cst_32 = arith.constant dense<0.000000e+00> : vector<8x512xf32>
    %78 = tpu.matmul %77, %3, %cst_32 {dimension_numbers = #tpu.dot_dimension_numbers<[1], [0], [0], [1], [0, 0, 1, 1], [], []>} : vector<8x128xbf16>, vector<128x512xbf16>, vector<8x512xf32> -> vector<8x512xf32>
    %79 = arith.addf %76, %78 : vector<8x512xf32>
    %c6 = arith.constant 6 : index
    %c0_33 = arith.constant 0 : index
    %c0_34 = arith.constant 0 : index
    %80 = vector.load %arg2[%c6, %c0_33, %c0_34] : memref<8x8x512xf32, #tpu.memory_space<vmem>>, vector<1x8x512xf32>
    %81 = vector.shape_cast %80 : vector<1x8x512xf32> to vector<8x512xf32>
    %82 = arith.truncf %68 : vector<8x128xf32> to vector<8x128xbf16>
    %cst_35 = arith.constant dense<0.000000e+00> : vector<8x512xf32>
    %83 = tpu.matmul %82, %4, %cst_35 {dimension_numbers = #tpu.dot_dimension_numbers<[1], [0], [0], [1], [0, 0, 1, 1], [], []>} : vector<8x128xbf16>, vector<128x512xbf16>, vector<8x512xf32> -> vector<8x512xf32>
    %84 = arith.addf %81, %83 : vector<8x512xf32>
    %85 = vector.extract_strided_slice %79 {offsets = [0, 0], sizes = [8, 128], strides = [1, 1]} : vector<8x512xf32> to vector<8x128xf32>
    %86 = arith.negf %85 : vector<8x128xf32>
    %87 = math.exp %86 : vector<8x128xf32>
    %cst_36 = arith.constant 1.000000e+00 : f32
    %88 = vector.broadcast %cst_36 : f32 to vector<8x128xf32>
    %89 = arith.addf %88, %87 : vector<8x128xf32>
    %90 = arith.divf %88, %89 : vector<8x128xf32>
    %91 = vector.extract_strided_slice %79 {offsets = [0, 128], sizes = [8, 128], strides = [1, 1]} : vector<8x512xf32> to vector<8x128xf32>
    %92 = arith.negf %91 : vector<8x128xf32>
    %93 = math.exp %92 : vector<8x128xf32>
    %cst_37 = arith.constant 1.000000e+00 : f32
    %94 = vector.broadcast %cst_37 : f32 to vector<8x128xf32>
    %95 = arith.addf %94, %93 : vector<8x128xf32>
    %96 = arith.divf %94, %95 : vector<8x128xf32>
    %97 = vector.extract_strided_slice %79 {offsets = [0, 256], sizes = [8, 128], strides = [1, 1]} : vector<8x512xf32> to vector<8x128xf32>
    %98 = math.tanh %97 : vector<8x128xf32>
    %99 = vector.extract_strided_slice %79 {offsets = [0, 384], sizes = [8, 128], strides = [1, 1]} : vector<8x512xf32> to vector<8x128xf32>
    %100 = arith.negf %99 : vector<8x128xf32>
    %101 = math.exp %100 : vector<8x128xf32>
    %cst_38 = arith.constant 1.000000e+00 : f32
    %102 = vector.broadcast %cst_38 : f32 to vector<8x128xf32>
    %103 = arith.addf %102, %101 : vector<8x128xf32>
    %104 = arith.divf %102, %103 : vector<8x128xf32>
    %105 = vector.extract_strided_slice %84 {offsets = [0, 0], sizes = [8, 128], strides = [1, 1]} : vector<8x512xf32> to vector<8x128xf32>
    %106 = arith.negf %105 : vector<8x128xf32>
    %107 = math.exp %106 : vector<8x128xf32>
    %cst_39 = arith.constant 1.000000e+00 : f32
    %108 = vector.broadcast %cst_39 : f32 to vector<8x128xf32>
    %109 = arith.addf %108, %107 : vector<8x128xf32>
    %110 = arith.divf %108, %109 : vector<8x128xf32>
    %111 = vector.extract_strided_slice %84 {offsets = [0, 128], sizes = [8, 128], strides = [1, 1]} : vector<8x512xf32> to vector<8x128xf32>
    %112 = arith.negf %111 : vector<8x128xf32>
    %113 = math.exp %112 : vector<8x128xf32>
    %cst_40 = arith.constant 1.000000e+00 : f32
    %114 = vector.broadcast %cst_40 : f32 to vector<8x128xf32>
    %115 = arith.addf %114, %113 : vector<8x128xf32>
    %116 = arith.divf %114, %115 : vector<8x128xf32>
    %117 = vector.extract_strided_slice %84 {offsets = [0, 256], sizes = [8, 128], strides = [1, 1]} : vector<8x512xf32> to vector<8x128xf32>
    %118 = math.tanh %117 : vector<8x128xf32>
    %119 = vector.extract_strided_slice %84 {offsets = [0, 384], sizes = [8, 128], strides = [1, 1]} : vector<8x512xf32> to vector<8x128xf32>
    %120 = arith.negf %119 : vector<8x128xf32>
    %121 = math.exp %120 : vector<8x128xf32>
    %cst_41 = arith.constant 1.000000e+00 : f32
    %122 = vector.broadcast %cst_41 : f32 to vector<8x128xf32>
    %123 = arith.addf %122, %121 : vector<8x128xf32>
    %124 = arith.divf %122, %123 : vector<8x128xf32>
    %125 = arith.mulf %96, %61 : vector<8x128xf32>
    %126 = arith.mulf %90, %98 : vector<8x128xf32>
    %127 = arith.addf %125, %126 : vector<8x128xf32>
    %128 = math.tanh %127 : vector<8x128xf32>
    %129 = arith.mulf %104, %128 : vector<8x128xf32>
    %130 = arith.mulf %116, %66 : vector<8x128xf32>
    %131 = arith.mulf %110, %118 : vector<8x128xf32>
    %132 = arith.addf %130, %131 : vector<8x128xf32>
    %133 = math.tanh %132 : vector<8x128xf32>
    %134 = arith.mulf %124, %133 : vector<8x128xf32>
    %c1_42 = arith.constant 1 : index
    %c0_43 = arith.constant 0 : index
    %c0_44 = arith.constant 0 : index
    %135 = vector.load %arg5[%c1_42, %c0_43, %c0_44] : memref<8x8x128xf32, #tpu.memory_space<vmem>>, vector<1x8x128xf32>
    %136 = vector.shape_cast %135 : vector<1x8x128xf32> to vector<8x128xf32>
    %137 = vector.shape_cast %129 : vector<8x128xf32> to vector<1x8x128xf32>
    tpu.vector_store %arg5[%c1_42, %c0_43, %c0_44], %137 {strides = array<i32>} : memref<8x8x128xf32, #tpu.memory_space<vmem>>, vector<1x8x128xf32>,
    %c6_45 = arith.constant 6 : index
    %c0_46 = arith.constant 0 : index
    %c0_47 = arith.constant 0 : index
    %138 = vector.load %arg6[%c6_45, %c0_46, %c0_47] : memref<8x8x128xf32, #tpu.memory_space<vmem>>, vector<1x8x128xf32>
    %139 = vector.shape_cast %138 : vector<1x8x128xf32> to vector<8x128xf32>
    %140 = vector.shape_cast %134 : vector<8x128xf32> to vector<1x8x128xf32>
    tpu.vector_store %arg6[%c6_45, %c0_46, %c0_47], %140 {strides = array<i32>} : memref<8x8x128xf32, #tpu.memory_space<vmem>>, vector<1x8x128xf32>,
    %c2 = arith.constant 2 : index
    %c0_48 = arith.constant 0 : index
    %c0_49 = arith.constant 0 : index
    %141 = vector.load %arg1[%c2, %c0_48, %c0_49] : memref<8x8x512xf32, #tpu.memory_space<vmem>>, vector<1x8x512xf32>
    %142 = vector.shape_cast %141 : vector<1x8x512xf32> to vector<8x512xf32>
    %143 = arith.truncf %129 : vector<8x128xf32> to vector<8x128xbf16>
    %cst_50 = arith.constant dense<0.000000e+00> : vector<8x512xf32>
    %144 = tpu.matmul %143, %3, %cst_50 {dimension_numbers = #tpu.dot_dimension_numbers<[1], [0], [0], [1], [0, 0, 1, 1], [], []>} : vector<8x128xbf16>, vector<128x512xbf16>, vector<8x512xf32> -> vector<8x512xf32>
    %145 = arith.addf %142, %144 : vector<8x512xf32>
    %c5 = arith.constant 5 : index
    %c0_51 = arith.constant 0 : index
    %c0_52 = arith.constant 0 : index
    %146 = vector.load %arg2[%c5, %c0_51, %c0_52] : memref<8x8x512xf32, #tpu.memory_space<vmem>>, vector<1x8x512xf32>
    %147 = vector.shape_cast %146 : vector<1x8x512xf32> to vector<8x512xf32>
    %148 = arith.truncf %134 : vector<8x128xf32> to vector<8x128xbf16>
    %cst_53 = arith.constant dense<0.000000e+00> : vector<8x512xf32>
    %149 = tpu.matmul %148, %4, %cst_53 {dimension_numbers = #tpu.dot_dimension_numbers<[1], [0], [0], [1], [0, 0, 1, 1], [], []>} : vector<8x128xbf16>, vector<128x512xbf16>, vector<8x512xf32> -> vector<8x512xf32>
    %150 = arith.addf %147, %149 : vector<8x512xf32>
    %151 = vector.extract_strided_slice %145 {offsets = [0, 0], sizes = [8, 128], strides = [1, 1]} : vector<8x512xf32> to vector<8x128xf32>
    %152 = arith.negf %151 : vector<8x128xf32>
    %153 = math.exp %152 : vector<8x128xf32>
    %cst_54 = arith.constant 1.000000e+00 : f32
    %154 = vector.broadcast %cst_54 : f32 to vector<8x128xf32>
    %155 = arith.addf %154, %153 : vector<8x128xf32>
    %156 = arith.divf %154, %155 : vector<8x128xf32>
    %157 = vector.extract_strided_slice %145 {offsets = [0, 128], sizes = [8, 128], strides = [1, 1]} : vector<8x512xf32> to vector<8x128xf32>
    %158 = arith.negf %157 : vector<8x128xf32>
    %159 = math.exp %158 : vector<8x128xf32>
    %cst_55 = arith.constant 1.000000e+00 : f32
    %160 = vector.broadcast %cst_55 : f32 to vector<8x128xf32>
    %161 = arith.addf %160, %159 : vector<8x128xf32>
    %162 = arith.divf %160, %161 : vector<8x128xf32>
    %163 = vector.extract_strided_slice %145 {offsets = [0, 256], sizes = [8, 128], strides = [1, 1]} : vector<8x512xf32> to vector<8x128xf32>
    %164 = math.tanh %163 : vector<8x128xf32>
    %165 = vector.extract_strided_slice %145 {offsets = [0, 384], sizes = [8, 128], strides = [1, 1]} : vector<8x512xf32> to vector<8x128xf32>
    %166 = arith.negf %165 : vector<8x128xf32>
    %167 = math.exp %166 : vector<8x128xf32>
    %cst_56 = arith.constant 1.000000e+00 : f32
    %168 = vector.broadcast %cst_56 : f32 to vector<8x128xf32>
    %169 = arith.addf %168, %167 : vector<8x128xf32>
    %170 = arith.divf %168, %169 : vector<8x128xf32>
    %171 = vector.extract_strided_slice %150 {offsets = [0, 0], sizes = [8, 128], strides = [1, 1]} : vector<8x512xf32> to vector<8x128xf32>
    %172 = arith.negf %171 : vector<8x128xf32>
    %173 = math.exp %172 : vector<8x128xf32>
    %cst_57 = arith.constant 1.000000e+00 : f32
    %174 = vector.broadcast %cst_57 : f32 to vector<8x128xf32>
    %175 = arith.addf %174, %173 : vector<8x128xf32>
    %176 = arith.divf %174, %175 : vector<8x128xf32>
    %177 = vector.extract_strided_slice %150 {offsets = [0, 128], sizes = [8, 128], strides = [1, 1]} : vector<8x512xf32> to vector<8x128xf32>
    %178 = arith.negf %177 : vector<8x128xf32>
    %179 = math.exp %178 : vector<8x128xf32>
    %cst_58 = arith.constant 1.000000e+00 : f32
    %180 = vector.broadcast %cst_58 : f32 to vector<8x128xf32>
    %181 = arith.addf %180, %179 : vector<8x128xf32>
    %182 = arith.divf %180, %181 : vector<8x128xf32>
    %183 = vector.extract_strided_slice %150 {offsets = [0, 256], sizes = [8, 128], strides = [1, 1]} : vector<8x512xf32> to vector<8x128xf32>
    %184 = math.tanh %183 : vector<8x128xf32>
    %185 = vector.extract_strided_slice %150 {offsets = [0, 384], sizes = [8, 128], strides = [1, 1]} : vector<8x512xf32> to vector<8x128xf32>
    %186 = arith.negf %185 : vector<8x128xf32>
    %187 = math.exp %186 : vector<8x128xf32>
    %cst_59 = arith.constant 1.000000e+00 : f32
    %188 = vector.broadcast %cst_59 : f32 to vector<8x128xf32>
    %189 = arith.addf %188, %187 : vector<8x128xf32>
    %190 = arith.divf %188, %189 : vector<8x128xf32>
    %191 = arith.mulf %162, %127 : vector<8x128xf32>
    %192 = arith.mulf %156, %164 : vector<8x128xf32>
    %193 = arith.addf %191, %192 : vector<8x128xf32>
    %194 = math.tanh %193 : vector<8x128xf32>
    %195 = arith.mulf %170, %194 : vector<8x128xf32>
    %196 = arith.mulf %182, %132 : vector<8x128xf32>
    %197 = arith.mulf %176, %184 : vector<8x128xf32>
    %198 = arith.addf %196, %197 : vector<8x128xf32>
    %199 = math.tanh %198 : vector<8x128xf32>
    %200 = arith.mulf %190, %199 : vector<8x128xf32>
    %c2_60 = arith.constant 2 : index
    %c0_61 = arith.constant 0 : index
    %c0_62 = arith.constant 0 : index
    %201 = vector.load %arg5[%c2_60, %c0_61, %c0_62] : memref<8x8x128xf32, #tpu.memory_space<vmem>>, vector<1x8x128xf32>
    %202 = vector.shape_cast %201 : vector<1x8x128xf32> to vector<8x128xf32>
    %203 = vector.shape_cast %195 : vector<8x128xf32> to vector<1x8x128xf32>
    tpu.vector_store %arg5[%c2_60, %c0_61, %c0_62], %203 {strides = array<i32>} : memref<8x8x128xf32, #tpu.memory_space<vmem>>, vector<1x8x128xf32>,
    %c5_63 = arith.constant 5 : index
    %c0_64 = arith.constant 0 : index
    %c0_65 = arith.constant 0 : index
    %204 = vector.load %arg6[%c5_63, %c0_64, %c0_65] : memref<8x8x128xf32, #tpu.memory_space<vmem>>, vector<1x8x128xf32>
    %205 = vector.shape_cast %204 : vector<1x8x128xf32> to vector<8x128xf32>
    %206 = vector.shape_cast %200 : vector<8x128xf32> to vector<1x8x128xf32>
    tpu.vector_store %arg6[%c5_63, %c0_64, %c0_65], %206 {strides = array<i32>} : memref<8x8x128xf32, #tpu.memory_space<vmem>>, vector<1x8x128xf32>,
    %c3 = arith.constant 3 : index
    %c0_66 = arith.constant 0 : index
    %c0_67 = arith.constant 0 : index
    %207 = vector.load %arg1[%c3, %c0_66, %c0_67] : memref<8x8x512xf32, #tpu.memory_space<vmem>>, vector<1x8x512xf32>
    %208 = vector.shape_cast %207 : vector<1x8x512xf32> to vector<8x512xf32>
    %209 = arith.truncf %195 : vector<8x128xf32> to vector<8x128xbf16>
    %cst_68 = arith.constant dense<0.000000e+00> : vector<8x512xf32>
    %210 = tpu.matmul %209, %3, %cst_68 {dimension_numbers = #tpu.dot_dimension_numbers<[1], [0], [0], [1], [0, 0, 1, 1], [], []>} : vector<8x128xbf16>, vector<128x512xbf16>, vector<8x512xf32> -> vector<8x512xf32>
    %211 = arith.addf %208, %210 : vector<8x512xf32>
    %c4 = arith.constant 4 : index
    %c0_69 = arith.constant 0 : index
    %c0_70 = arith.constant 0 : index
    %212 = vector.load %arg2[%c4, %c0_69, %c0_70] : memref<8x8x512xf32, #tpu.memory_space<vmem>>, vector<1x8x512xf32>
    %213 = vector.shape_cast %212 : vector<1x8x512xf32> to vector<8x512xf32>
    %214 = arith.truncf %200 : vector<8x128xf32> to vector<8x128xbf16>
    %cst_71 = arith.constant dense<0.000000e+00> : vector<8x512xf32>
    %215 = tpu.matmul %214, %4, %cst_71 {dimension_numbers = #tpu.dot_dimension_numbers<[1], [0], [0], [1], [0, 0, 1, 1], [], []>} : vector<8x128xbf16>, vector<128x512xbf16>, vector<8x512xf32> -> vector<8x512xf32>
    %216 = arith.addf %213, %215 : vector<8x512xf32>
    %217 = vector.extract_strided_slice %211 {offsets = [0, 0], sizes = [8, 128], strides = [1, 1]} : vector<8x512xf32> to vector<8x128xf32>
    %218 = arith.negf %217 : vector<8x128xf32>
    %219 = math.exp %218 : vector<8x128xf32>
    %cst_72 = arith.constant 1.000000e+00 : f32
    %220 = vector.broadcast %cst_72 : f32 to vector<8x128xf32>
    %221 = arith.addf %220, %219 : vector<8x128xf32>
    %222 = arith.divf %220, %221 : vector<8x128xf32>
    %223 = vector.extract_strided_slice %211 {offsets = [0, 128], sizes = [8, 128], strides = [1, 1]} : vector<8x512xf32> to vector<8x128xf32>
    %224 = arith.negf %223 : vector<8x128xf32>
    %225 = math.exp %224 : vector<8x128xf32>
    %cst_73 = arith.constant 1.000000e+00 : f32
    %226 = vector.broadcast %cst_73 : f32 to vector<8x128xf32>
    %227 = arith.addf %226, %225 : vector<8x128xf32>
    %228 = arith.divf %226, %227 : vector<8x128xf32>
    %229 = vector.extract_strided_slice %211 {offsets = [0, 256], sizes = [8, 128], strides = [1, 1]} : vector<8x512xf32> to vector<8x128xf32>
    %230 = math.tanh %229 : vector<8x128xf32>
    %231 = vector.extract_strided_slice %211 {offsets = [0, 384], sizes = [8, 128], strides = [1, 1]} : vector<8x512xf32> to vector<8x128xf32>
    %232 = arith.negf %231 : vector<8x128xf32>
    %233 = math.exp %232 : vector<8x128xf32>
    %cst_74 = arith.constant 1.000000e+00 : f32
    %234 = vector.broadcast %cst_74 : f32 to vector<8x128xf32>
    %235 = arith.addf %234, %233 : vector<8x128xf32>
    %236 = arith.divf %234, %235 : vector<8x128xf32>
    %237 = vector.extract_strided_slice %216 {offsets = [0, 0], sizes = [8, 128], strides = [1, 1]} : vector<8x512xf32> to vector<8x128xf32>
    %238 = arith.negf %237 : vector<8x128xf32>
    %239 = math.exp %238 : vector<8x128xf32>
    %cst_75 = arith.constant 1.000000e+00 : f32
    %240 = vector.broadcast %cst_75 : f32 to vector<8x128xf32>
    %241 = arith.addf %240, %239 : vector<8x128xf32>
    %242 = arith.divf %240, %241 : vector<8x128xf32>
    %243 = vector.extract_strided_slice %216 {offsets = [0, 128], sizes = [8, 128], strides = [1, 1]} : vector<8x512xf32> to vector<8x128xf32>
    %244 = arith.negf %243 : vector<8x128xf32>
    %245 = math.exp %244 : vector<8x128xf32>
    %cst_76 = arith.constant 1.000000e+00 : f32
    %246 = vector.broadcast %cst_76 : f32 to vector<8x128xf32>
    %247 = arith.addf %246, %245 : vector<8x128xf32>
    %248 = arith.divf %246, %247 : vector<8x128xf32>
    %249 = vector.extract_strided_slice %216 {offsets = [0, 256], sizes = [8, 128], strides = [1, 1]} : vector<8x512xf32> to vector<8x128xf32>
    %250 = math.tanh %249 : vector<8x128xf32>
    %251 = vector.extract_strided_slice %216 {offsets = [0, 384], sizes = [8, 128], strides = [1, 1]} : vector<8x512xf32> to vector<8x128xf32>
    %252 = arith.negf %251 : vector<8x128xf32>
    %253 = math.exp %252 : vector<8x128xf32>
    %cst_77 = arith.constant 1.000000e+00 : f32
    %254 = vector.broadcast %cst_77 : f32 to vector<8x128xf32>
    %255 = arith.addf %254, %253 : vector<8x128xf32>
    %256 = arith.divf %254, %255 : vector<8x128xf32>
    %257 = arith.mulf %228, %193 : vector<8x128xf32>
    %258 = arith.mulf %222, %230 : vector<8x128xf32>
    %259 = arith.addf %257, %258 : vector<8x128xf32>
    %260 = math.tanh %259 : vector<8x128xf32>
    %261 = arith.mulf %236, %260 : vector<8x128xf32>
    %262 = arith.mulf %248, %198 : vector<8x128xf32>
    %263 = arith.mulf %242, %250 : vector<8x128xf32>
    %264 = arith.addf %262, %263 : vector<8x128xf32>
    %265 = math.tanh %264 : vector<8x128xf32>
    %266 = arith.mulf %256, %265 : vector<8x128xf32>
    %c3_78 = arith.constant 3 : index
    %c0_79 = arith.constant 0 : index
    %c0_80 = arith.constant 0 : index
    %267 = vector.load %arg5[%c3_78, %c0_79, %c0_80] : memref<8x8x128xf32, #tpu.memory_space<vmem>>, vector<1x8x128xf32>
    %268 = vector.shape_cast %267 : vector<1x8x128xf32> to vector<8x128xf32>
    %269 = vector.shape_cast %261 : vector<8x128xf32> to vector<1x8x128xf32>
    tpu.vector_store %arg5[%c3_78, %c0_79, %c0_80], %269 {strides = array<i32>} : memref<8x8x128xf32, #tpu.memory_space<vmem>>, vector<1x8x128xf32>,
    %c4_81 = arith.constant 4 : index
    %c0_82 = arith.constant 0 : index
    %c0_83 = arith.constant 0 : index
    %270 = vector.load %arg6[%c4_81, %c0_82, %c0_83] : memref<8x8x128xf32, #tpu.memory_space<vmem>>, vector<1x8x128xf32>
    %271 = vector.shape_cast %270 : vector<1x8x128xf32> to vector<8x128xf32>
    %272 = vector.shape_cast %266 : vector<8x128xf32> to vector<1x8x128xf32>
    tpu.vector_store %arg6[%c4_81, %c0_82, %c0_83], %272 {strides = array<i32>} : memref<8x8x128xf32, #tpu.memory_space<vmem>>, vector<1x8x128xf32>,
    %c4_84 = arith.constant 4 : index
    %c0_85 = arith.constant 0 : index
    %c0_86 = arith.constant 0 : index
    %273 = vector.load %arg1[%c4_84, %c0_85, %c0_86] : memref<8x8x512xf32, #tpu.memory_space<vmem>>, vector<1x8x512xf32>
    %274 = vector.shape_cast %273 : vector<1x8x512xf32> to vector<8x512xf32>
    %275 = arith.truncf %261 : vector<8x128xf32> to vector<8x128xbf16>
    %cst_87 = arith.constant dense<0.000000e+00> : vector<8x512xf32>
    %276 = tpu.matmul %275, %3, %cst_87 {dimension_numbers = #tpu.dot_dimension_numbers<[1], [0], [0], [1], [0, 0, 1, 1], [], []>} : vector<8x128xbf16>, vector<128x512xbf16>, vector<8x512xf32> -> vector<8x512xf32>
    %277 = arith.addf %274, %276 : vector<8x512xf32>
    %c3_88 = arith.constant 3 : index
    %c0_89 = arith.constant 0 : index
    %c0_90 = arith.constant 0 : index
    %278 = vector.load %arg2[%c3_88, %c0_89, %c0_90] : memref<8x8x512xf32, #tpu.memory_space<vmem>>, vector<1x8x512xf32>
    %279 = vector.shape_cast %278 : vector<1x8x512xf32> to vector<8x512xf32>
    %280 = arith.truncf %266 : vector<8x128xf32> to vector<8x128xbf16>
    %cst_91 = arith.constant dense<0.000000e+00> : vector<8x512xf32>
    %281 = tpu.matmul %280, %4, %cst_91 {dimension_numbers = #tpu.dot_dimension_numbers<[1], [0], [0], [1], [0, 0, 1, 1], [], []>} : vector<8x128xbf16>, vector<128x512xbf16>, vector<8x512xf32> -> vector<8x512xf32>
    %282 = arith.addf %279, %281 : vector<8x512xf32>
    %283 = vector.extract_strided_slice %277 {offsets = [0, 0], sizes = [8, 128], strides = [1, 1]} : vector<8x512xf32> to vector<8x128xf32>
    %284 = arith.negf %283 : vector<8x128xf32>
    %285 = math.exp %284 : vector<8x128xf32>
    %cst_92 = arith.constant 1.000000e+00 : f32
    %286 = vector.broadcast %cst_92 : f32 to vector<8x128xf32>
    %287 = arith.addf %286, %285 : vector<8x128xf32>
    %288 = arith.divf %286, %287 : vector<8x128xf32>
    %289 = vector.extract_strided_slice %277 {offsets = [0, 128], sizes = [8, 128], strides = [1, 1]} : vector<8x512xf32> to vector<8x128xf32>
    %290 = arith.negf %289 : vector<8x128xf32>
    %291 = math.exp %290 : vector<8x128xf32>
    %cst_93 = arith.constant 1.000000e+00 : f32
    %292 = vector.broadcast %cst_93 : f32 to vector<8x128xf32>
    %293 = arith.addf %292, %291 : vector<8x128xf32>
    %294 = arith.divf %292, %293 : vector<8x128xf32>
    %295 = vector.extract_strided_slice %277 {offsets = [0, 256], sizes = [8, 128], strides = [1, 1]} : vector<8x512xf32> to vector<8x128xf32>
    %296 = math.tanh %295 : vector<8x128xf32>
    %297 = vector.extract_strided_slice %277 {offsets = [0, 384], sizes = [8, 128], strides = [1, 1]} : vector<8x512xf32> to vector<8x128xf32>
    %298 = arith.negf %297 : vector<8x128xf32>
    %299 = math.exp %298 : vector<8x128xf32>
    %cst_94 = arith.constant 1.000000e+00 : f32
    %300 = vector.broadcast %cst_94 : f32 to vector<8x128xf32>
    %301 = arith.addf %300, %299 : vector<8x128xf32>
    %302 = arith.divf %300, %301 : vector<8x128xf32>
    %303 = vector.extract_strided_slice %282 {offsets = [0, 0], sizes = [8, 128], strides = [1, 1]} : vector<8x512xf32> to vector<8x128xf32>
    %304 = arith.negf %303 : vector<8x128xf32>
    %305 = math.exp %304 : vector<8x128xf32>
    %cst_95 = arith.constant 1.000000e+00 : f32
    %306 = vector.broadcast %cst_95 : f32 to vector<8x128xf32>
    %307 = arith.addf %306, %305 : vector<8x128xf32>
    %308 = arith.divf %306, %307 : vector<8x128xf32>
    %309 = vector.extract_strided_slice %282 {offsets = [0, 128], sizes = [8, 128], strides = [1, 1]} : vector<8x512xf32> to vector<8x128xf32>
    %310 = arith.negf %309 : vector<8x128xf32>
    %311 = math.exp %310 : vector<8x128xf32>
    %cst_96 = arith.constant 1.000000e+00 : f32
    %312 = vector.broadcast %cst_96 : f32 to vector<8x128xf32>
    %313 = arith.addf %312, %311 : vector<8x128xf32>
    %314 = arith.divf %312, %313 : vector<8x128xf32>
    %315 = vector.extract_strided_slice %282 {offsets = [0, 256], sizes = [8, 128], strides = [1, 1]} : vector<8x512xf32> to vector<8x128xf32>
    %316 = math.tanh %315 : vector<8x128xf32>
    %317 = vector.extract_strided_slice %282 {offsets = [0, 384], sizes = [8, 128], strides = [1, 1]} : vector<8x512xf32> to vector<8x128xf32>
    %318 = arith.negf %317 : vector<8x128xf32>
    %319 = math.exp %318 : vector<8x128xf32>
    %cst_97 = arith.constant 1.000000e+00 : f32
    %320 = vector.broadcast %cst_97 : f32 to vector<8x128xf32>
    %321 = arith.addf %320, %319 : vector<8x128xf32>
    %322 = arith.divf %320, %321 : vector<8x128xf32>
    %323 = arith.mulf %294, %259 : vector<8x128xf32>
    %324 = arith.mulf %288, %296 : vector<8x128xf32>
    %325 = arith.addf %323, %324 : vector<8x128xf32>
    %326 = math.tanh %325 : vector<8x128xf32>
    %327 = arith.mulf %302, %326 : vector<8x128xf32>
    %328 = arith.mulf %314, %264 : vector<8x128xf32>
    %329 = arith.mulf %308, %316 : vector<8x128xf32>
    %330 = arith.addf %328, %329 : vector<8x128xf32>
    %331 = math.tanh %330 : vector<8x128xf32>
    %332 = arith.mulf %322, %331 : vector<8x128xf32>
    %c4_98 = arith.constant 4 : index
    %c0_99 = arith.constant 0 : index
    %c0_100 = arith.constant 0 : index
    %333 = vector.load %arg5[%c4_98, %c0_99, %c0_100] : memref<8x8x128xf32, #tpu.memory_space<vmem>>, vector<1x8x128xf32>
    %334 = vector.shape_cast %333 : vector<1x8x128xf32> to vector<8x128xf32>
    %335 = vector.shape_cast %327 : vector<8x128xf32> to vector<1x8x128xf32>
    tpu.vector_store %arg5[%c4_98, %c0_99, %c0_100], %335 {strides = array<i32>} : memref<8x8x128xf32, #tpu.memory_space<vmem>>, vector<1x8x128xf32>,
    %c3_101 = arith.constant 3 : index
    %c0_102 = arith.constant 0 : index
    %c0_103 = arith.constant 0 : index
    %336 = vector.load %arg6[%c3_101, %c0_102, %c0_103] : memref<8x8x128xf32, #tpu.memory_space<vmem>>, vector<1x8x128xf32>
    %337 = vector.shape_cast %336 : vector<1x8x128xf32> to vector<8x128xf32>
    %338 = vector.shape_cast %332 : vector<8x128xf32> to vector<1x8x128xf32>
    tpu.vector_store %arg6[%c3_101, %c0_102, %c0_103], %338 {strides = array<i32>} : memref<8x8x128xf32, #tpu.memory_space<vmem>>, vector<1x8x128xf32>,
    %c5_104 = arith.constant 5 : index
    %c0_105 = arith.constant 0 : index
    %c0_106 = arith.constant 0 : index
    %339 = vector.load %arg1[%c5_104, %c0_105, %c0_106] : memref<8x8x512xf32, #tpu.memory_space<vmem>>, vector<1x8x512xf32>
    %340 = vector.shape_cast %339 : vector<1x8x512xf32> to vector<8x512xf32>
    %341 = arith.truncf %327 : vector<8x128xf32> to vector<8x128xbf16>
    %cst_107 = arith.constant dense<0.000000e+00> : vector<8x512xf32>
    %342 = tpu.matmul %341, %3, %cst_107 {dimension_numbers = #tpu.dot_dimension_numbers<[1], [0], [0], [1], [0, 0, 1, 1], [], []>} : vector<8x128xbf16>, vector<128x512xbf16>, vector<8x512xf32> -> vector<8x512xf32>
    %343 = arith.addf %340, %342 : vector<8x512xf32>
    %c2_108 = arith.constant 2 : index
    %c0_109 = arith.constant 0 : index
    %c0_110 = arith.constant 0 : index
    %344 = vector.load %arg2[%c2_108, %c0_109, %c0_110] : memref<8x8x512xf32, #tpu.memory_space<vmem>>, vector<1x8x512xf32>
    %345 = vector.shape_cast %344 : vector<1x8x512xf32> to vector<8x512xf32>
    %346 = arith.truncf %332 : vector<8x128xf32> to vector<8x128xbf16>
    %cst_111 = arith.constant dense<0.000000e+00> : vector<8x512xf32>
    %347 = tpu.matmul %346, %4, %cst_111 {dimension_numbers = #tpu.dot_dimension_numbers<[1], [0], [0], [1], [0, 0, 1, 1], [], []>} : vector<8x128xbf16>, vector<128x512xbf16>, vector<8x512xf32> -> vector<8x512xf32>
    %348 = arith.addf %345, %347 : vector<8x512xf32>
    %349 = vector.extract_strided_slice %343 {offsets = [0, 0], sizes = [8, 128], strides = [1, 1]} : vector<8x512xf32> to vector<8x128xf32>
    %350 = arith.negf %349 : vector<8x128xf32>
    %351 = math.exp %350 : vector<8x128xf32>
    %cst_112 = arith.constant 1.000000e+00 : f32
    %352 = vector.broadcast %cst_112 : f32 to vector<8x128xf32>
    %353 = arith.addf %352, %351 : vector<8x128xf32>
    %354 = arith.divf %352, %353 : vector<8x128xf32>
    %355 = vector.extract_strided_slice %343 {offsets = [0, 128], sizes = [8, 128], strides = [1, 1]} : vector<8x512xf32> to vector<8x128xf32>
    %356 = arith.negf %355 : vector<8x128xf32>
    %357 = math.exp %356 : vector<8x128xf32>
    %cst_113 = arith.constant 1.000000e+00 : f32
    %358 = vector.broadcast %cst_113 : f32 to vector<8x128xf32>
    %359 = arith.addf %358, %357 : vector<8x128xf32>
    %360 = arith.divf %358, %359 : vector<8x128xf32>
    %361 = vector.extract_strided_slice %343 {offsets = [0, 256], sizes = [8, 128], strides = [1, 1]} : vector<8x512xf32> to vector<8x128xf32>
    %362 = math.tanh %361 : vector<8x128xf32>
    %363 = vector.extract_strided_slice %343 {offsets = [0, 384], sizes = [8, 128], strides = [1, 1]} : vector<8x512xf32> to vector<8x128xf32>
    %364 = arith.negf %363 : vector<8x128xf32>
    %365 = math.exp %364 : vector<8x128xf32>
    %cst_114 = arith.constant 1.000000e+00 : f32
    %366 = vector.broadcast %cst_114 : f32 to vector<8x128xf32>
    %367 = arith.addf %366, %365 : vector<8x128xf32>
    %368 = arith.divf %366, %367 : vector<8x128xf32>
    %369 = vector.extract_strided_slice %348 {offsets = [0, 0], sizes = [8, 128], strides = [1, 1]} : vector<8x512xf32> to vector<8x128xf32>
    %370 = arith.negf %369 : vector<8x128xf32>
    %371 = math.exp %370 : vector<8x128xf32>
    %cst_115 = arith.constant 1.000000e+00 : f32
    %372 = vector.broadcast %cst_115 : f32 to vector<8x128xf32>
    %373 = arith.addf %372, %371 : vector<8x128xf32>
    %374 = arith.divf %372, %373 : vector<8x128xf32>
    %375 = vector.extract_strided_slice %348 {offsets = [0, 128], sizes = [8, 128], strides = [1, 1]} : vector<8x512xf32> to vector<8x128xf32>
    %376 = arith.negf %375 : vector<8x128xf32>
    %377 = math.exp %376 : vector<8x128xf32>
    %cst_116 = arith.constant 1.000000e+00 : f32
    %378 = vector.broadcast %cst_116 : f32 to vector<8x128xf32>
    %379 = arith.addf %378, %377 : vector<8x128xf32>
    %380 = arith.divf %378, %379 : vector<8x128xf32>
    %381 = vector.extract_strided_slice %348 {offsets = [0, 256], sizes = [8, 128], strides = [1, 1]} : vector<8x512xf32> to vector<8x128xf32>
    %382 = math.tanh %381 : vector<8x128xf32>
    %383 = vector.extract_strided_slice %348 {offsets = [0, 384], sizes = [8, 128], strides = [1, 1]} : vector<8x512xf32> to vector<8x128xf32>
    %384 = arith.negf %383 : vector<8x128xf32>
    %385 = math.exp %384 : vector<8x128xf32>
    %cst_117 = arith.constant 1.000000e+00 : f32
    %386 = vector.broadcast %cst_117 : f32 to vector<8x128xf32>
    %387 = arith.addf %386, %385 : vector<8x128xf32>
    %388 = arith.divf %386, %387 : vector<8x128xf32>
    %389 = arith.mulf %360, %325 : vector<8x128xf32>
    %390 = arith.mulf %354, %362 : vector<8x128xf32>
    %391 = arith.addf %389, %390 : vector<8x128xf32>
    %392 = math.tanh %391 : vector<8x128xf32>
    %393 = arith.mulf %368, %392 : vector<8x128xf32>
    %394 = arith.mulf %380, %330 : vector<8x128xf32>
    %395 = arith.mulf %374, %382 : vector<8x128xf32>
    %396 = arith.addf %394, %395 : vector<8x128xf32>
    %397 = math.tanh %396 : vector<8x128xf32>
    %398 = arith.mulf %388, %397 : vector<8x128xf32>
    %c5_118 = arith.constant 5 : index
    %c0_119 = arith.constant 0 : index
    %c0_120 = arith.constant 0 : index
    %399 = vector.load %arg5[%c5_118, %c0_119, %c0_120] : memref<8x8x128xf32, #tpu.memory_space<vmem>>, vector<1x8x128xf32>
    %400 = vector.shape_cast %399 : vector<1x8x128xf32> to vector<8x128xf32>
    %401 = vector.shape_cast %393 : vector<8x128xf32> to vector<1x8x128xf32>
    tpu.vector_store %arg5[%c5_118, %c0_119, %c0_120], %401 {strides = array<i32>} : memref<8x8x128xf32, #tpu.memory_space<vmem>>, vector<1x8x128xf32>,
    %c2_121 = arith.constant 2 : index
    %c0_122 = arith.constant 0 : index
    %c0_123 = arith.constant 0 : index
    %402 = vector.load %arg6[%c2_121, %c0_122, %c0_123] : memref<8x8x128xf32, #tpu.memory_space<vmem>>, vector<1x8x128xf32>
    %403 = vector.shape_cast %402 : vector<1x8x128xf32> to vector<8x128xf32>
    %404 = vector.shape_cast %398 : vector<8x128xf32> to vector<1x8x128xf32>
    tpu.vector_store %arg6[%c2_121, %c0_122, %c0_123], %404 {strides = array<i32>} : memref<8x8x128xf32, #tpu.memory_space<vmem>>, vector<1x8x128xf32>,
    %c6_124 = arith.constant 6 : index
    %c0_125 = arith.constant 0 : index
    %c0_126 = arith.constant 0 : index
    %405 = vector.load %arg1[%c6_124, %c0_125, %c0_126] : memref<8x8x512xf32, #tpu.memory_space<vmem>>, vector<1x8x512xf32>
    %406 = vector.shape_cast %405 : vector<1x8x512xf32> to vector<8x512xf32>
    %407 = arith.truncf %393 : vector<8x128xf32> to vector<8x128xbf16>
    %cst_127 = arith.constant dense<0.000000e+00> : vector<8x512xf32>
    %408 = tpu.matmul %407, %3, %cst_127 {dimension_numbers = #tpu.dot_dimension_numbers<[1], [0], [0], [1], [0, 0, 1, 1], [], []>} : vector<8x128xbf16>, vector<128x512xbf16>, vector<8x512xf32> -> vector<8x512xf32>
    %409 = arith.addf %406, %408 : vector<8x512xf32>
    %c1_128 = arith.constant 1 : index
    %c0_129 = arith.constant 0 : index
    %c0_130 = arith.constant 0 : index
    %410 = vector.load %arg2[%c1_128, %c0_129, %c0_130] : memref<8x8x512xf32, #tpu.memory_space<vmem>>, vector<1x8x512xf32>
    %411 = vector.shape_cast %410 : vector<1x8x512xf32> to vector<8x512xf32>
    %412 = arith.truncf %398 : vector<8x128xf32> to vector<8x128xbf16>
    %cst_131 = arith.constant dense<0.000000e+00> : vector<8x512xf32>
    %413 = tpu.matmul %412, %4, %cst_131 {dimension_numbers = #tpu.dot_dimension_numbers<[1], [0], [0], [1], [0, 0, 1, 1], [], []>} : vector<8x128xbf16>, vector<128x512xbf16>, vector<8x512xf32> -> vector<8x512xf32>
    %414 = arith.addf %411, %413 : vector<8x512xf32>
    %415 = vector.extract_strided_slice %409 {offsets = [0, 0], sizes = [8, 128], strides = [1, 1]} : vector<8x512xf32> to vector<8x128xf32>
    %416 = arith.negf %415 : vector<8x128xf32>
    %417 = math.exp %416 : vector<8x128xf32>
    %cst_132 = arith.constant 1.000000e+00 : f32
    %418 = vector.broadcast %cst_132 : f32 to vector<8x128xf32>
    %419 = arith.addf %418, %417 : vector<8x128xf32>
    %420 = arith.divf %418, %419 : vector<8x128xf32>
    %421 = vector.extract_strided_slice %409 {offsets = [0, 128], sizes = [8, 128], strides = [1, 1]} : vector<8x512xf32> to vector<8x128xf32>
    %422 = arith.negf %421 : vector<8x128xf32>
    %423 = math.exp %422 : vector<8x128xf32>
    %cst_133 = arith.constant 1.000000e+00 : f32
    %424 = vector.broadcast %cst_133 : f32 to vector<8x128xf32>
    %425 = arith.addf %424, %423 : vector<8x128xf32>
    %426 = arith.divf %424, %425 : vector<8x128xf32>
    %427 = vector.extract_strided_slice %409 {offsets = [0, 256], sizes = [8, 128], strides = [1, 1]} : vector<8x512xf32> to vector<8x128xf32>
    %428 = math.tanh %427 : vector<8x128xf32>
    %429 = vector.extract_strided_slice %409 {offsets = [0, 384], sizes = [8, 128], strides = [1, 1]} : vector<8x512xf32> to vector<8x128xf32>
    %430 = arith.negf %429 : vector<8x128xf32>
    %431 = math.exp %430 : vector<8x128xf32>
    %cst_134 = arith.constant 1.000000e+00 : f32
    %432 = vector.broadcast %cst_134 : f32 to vector<8x128xf32>
    %433 = arith.addf %432, %431 : vector<8x128xf32>
    %434 = arith.divf %432, %433 : vector<8x128xf32>
    %435 = vector.extract_strided_slice %414 {offsets = [0, 0], sizes = [8, 128], strides = [1, 1]} : vector<8x512xf32> to vector<8x128xf32>
    %436 = arith.negf %435 : vector<8x128xf32>
    %437 = math.exp %436 : vector<8x128xf32>
    %cst_135 = arith.constant 1.000000e+00 : f32
    %438 = vector.broadcast %cst_135 : f32 to vector<8x128xf32>
    %439 = arith.addf %438, %437 : vector<8x128xf32>
    %440 = arith.divf %438, %439 : vector<8x128xf32>
    %441 = vector.extract_strided_slice %414 {offsets = [0, 128], sizes = [8, 128], strides = [1, 1]} : vector<8x512xf32> to vector<8x128xf32>
    %442 = arith.negf %441 : vector<8x128xf32>
    %443 = math.exp %442 : vector<8x128xf32>
    %cst_136 = arith.constant 1.000000e+00 : f32
    %444 = vector.broadcast %cst_136 : f32 to vector<8x128xf32>
    %445 = arith.addf %444, %443 : vector<8x128xf32>
    %446 = arith.divf %444, %445 : vector<8x128xf32>
    %447 = vector.extract_strided_slice %414 {offsets = [0, 256], sizes = [8, 128], strides = [1, 1]} : vector<8x512xf32> to vector<8x128xf32>
    %448 = math.tanh %447 : vector<8x128xf32>
    %449 = vector.extract_strided_slice %414 {offsets = [0, 384], sizes = [8, 128], strides = [1, 1]} : vector<8x512xf32> to vector<8x128xf32>
    %450 = arith.negf %449 : vector<8x128xf32>
    %451 = math.exp %450 : vector<8x128xf32>
    %cst_137 = arith.constant 1.000000e+00 : f32
    %452 = vector.broadcast %cst_137 : f32 to vector<8x128xf32>
    %453 = arith.addf %452, %451 : vector<8x128xf32>
    %454 = arith.divf %452, %453 : vector<8x128xf32>
    %455 = arith.mulf %426, %391 : vector<8x128xf32>
    %456 = arith.mulf %420, %428 : vector<8x128xf32>
    %457 = arith.addf %455, %456 : vector<8x128xf32>
    %458 = math.tanh %457 : vector<8x128xf32>
    %459 = arith.mulf %434, %458 : vector<8x128xf32>
    %460 = arith.mulf %446, %396 : vector<8x128xf32>
    %461 = arith.mulf %440, %448 : vector<8x128xf32>
    %462 = arith.addf %460, %461 : vector<8x128xf32>
    %463 = math.tanh %462 : vector<8x128xf32>
    %464 = arith.mulf %454, %463 : vector<8x128xf32>
    %c6_138 = arith.constant 6 : index
    %c0_139 = arith.constant 0 : index
    %c0_140 = arith.constant 0 : index
    %465 = vector.load %arg5[%c6_138, %c0_139, %c0_140] : memref<8x8x128xf32, #tpu.memory_space<vmem>>, vector<1x8x128xf32>
    %466 = vector.shape_cast %465 : vector<1x8x128xf32> to vector<8x128xf32>
    %467 = vector.shape_cast %459 : vector<8x128xf32> to vector<1x8x128xf32>
    tpu.vector_store %arg5[%c6_138, %c0_139, %c0_140], %467 {strides = array<i32>} : memref<8x8x128xf32, #tpu.memory_space<vmem>>, vector<1x8x128xf32>,
    %c1_141 = arith.constant 1 : index
    %c0_142 = arith.constant 0 : index
    %c0_143 = arith.constant 0 : index
    %468 = vector.load %arg6[%c1_141, %c0_142, %c0_143] : memref<8x8x128xf32, #tpu.memory_space<vmem>>, vector<1x8x128xf32>
    %469 = vector.shape_cast %468 : vector<1x8x128xf32> to vector<8x128xf32>
    %470 = vector.shape_cast %464 : vector<8x128xf32> to vector<1x8x128xf32>
    tpu.vector_store %arg6[%c1_141, %c0_142, %c0_143], %470 {strides = array<i32>} : memref<8x8x128xf32, #tpu.memory_space<vmem>>, vector<1x8x128xf32>,
    %c7_144 = arith.constant 7 : index
    %c0_145 = arith.constant 0 : index
    %c0_146 = arith.constant 0 : index
    %471 = vector.load %arg1[%c7_144, %c0_145, %c0_146] : memref<8x8x512xf32, #tpu.memory_space<vmem>>, vector<1x8x512xf32>
    %472 = vector.shape_cast %471 : vector<1x8x512xf32> to vector<8x512xf32>
    %473 = arith.truncf %459 : vector<8x128xf32> to vector<8x128xbf16>
    %cst_147 = arith.constant dense<0.000000e+00> : vector<8x512xf32>
    %474 = tpu.matmul %473, %3, %cst_147 {dimension_numbers = #tpu.dot_dimension_numbers<[1], [0], [0], [1], [0, 0, 1, 1], [], []>} : vector<8x128xbf16>, vector<128x512xbf16>, vector<8x512xf32> -> vector<8x512xf32>
    %475 = arith.addf %472, %474 : vector<8x512xf32>
    %c0_148 = arith.constant 0 : index
    %c0_149 = arith.constant 0 : index
    %c0_150 = arith.constant 0 : index
    %476 = vector.load %arg2[%c0_148, %c0_149, %c0_150] : memref<8x8x512xf32, #tpu.memory_space<vmem>>, vector<1x8x512xf32>
    %477 = vector.shape_cast %476 : vector<1x8x512xf32> to vector<8x512xf32>
    %478 = arith.truncf %464 : vector<8x128xf32> to vector<8x128xbf16>
    %cst_151 = arith.constant dense<0.000000e+00> : vector<8x512xf32>
    %479 = tpu.matmul %478, %4, %cst_151 {dimension_numbers = #tpu.dot_dimension_numbers<[1], [0], [0], [1], [0, 0, 1, 1], [], []>} : vector<8x128xbf16>, vector<128x512xbf16>, vector<8x512xf32> -> vector<8x512xf32>
    %480 = arith.addf %477, %479 : vector<8x512xf32>
    %481 = vector.extract_strided_slice %475 {offsets = [0, 0], sizes = [8, 128], strides = [1, 1]} : vector<8x512xf32> to vector<8x128xf32>
    %482 = arith.negf %481 : vector<8x128xf32>
    %483 = math.exp %482 : vector<8x128xf32>
    %cst_152 = arith.constant 1.000000e+00 : f32
    %484 = vector.broadcast %cst_152 : f32 to vector<8x128xf32>
    %485 = arith.addf %484, %483 : vector<8x128xf32>
    %486 = arith.divf %484, %485 : vector<8x128xf32>
    %487 = vector.extract_strided_slice %475 {offsets = [0, 128], sizes = [8, 128], strides = [1, 1]} : vector<8x512xf32> to vector<8x128xf32>
    %488 = arith.negf %487 : vector<8x128xf32>
    %489 = math.exp %488 : vector<8x128xf32>
    %cst_153 = arith.constant 1.000000e+00 : f32
    %490 = vector.broadcast %cst_153 : f32 to vector<8x128xf32>
    %491 = arith.addf %490, %489 : vector<8x128xf32>
    %492 = arith.divf %490, %491 : vector<8x128xf32>
    %493 = vector.extract_strided_slice %475 {offsets = [0, 256], sizes = [8, 128], strides = [1, 1]} : vector<8x512xf32> to vector<8x128xf32>
    %494 = math.tanh %493 : vector<8x128xf32>
    %495 = vector.extract_strided_slice %475 {offsets = [0, 384], sizes = [8, 128], strides = [1, 1]} : vector<8x512xf32> to vector<8x128xf32>
    %496 = arith.negf %495 : vector<8x128xf32>
    %497 = math.exp %496 : vector<8x128xf32>
    %cst_154 = arith.constant 1.000000e+00 : f32
    %498 = vector.broadcast %cst_154 : f32 to vector<8x128xf32>
    %499 = arith.addf %498, %497 : vector<8x128xf32>
    %500 = arith.divf %498, %499 : vector<8x128xf32>
    %501 = vector.extract_strided_slice %480 {offsets = [0, 0], sizes = [8, 128], strides = [1, 1]} : vector<8x512xf32> to vector<8x128xf32>
    %502 = arith.negf %501 : vector<8x128xf32>
    %503 = math.exp %502 : vector<8x128xf32>
    %cst_155 = arith.constant 1.000000e+00 : f32
    %504 = vector.broadcast %cst_155 : f32 to vector<8x128xf32>
    %505 = arith.addf %504, %503 : vector<8x128xf32>
    %506 = arith.divf %504, %505 : vector<8x128xf32>
    %507 = vector.extract_strided_slice %480 {offsets = [0, 128], sizes = [8, 128], strides = [1, 1]} : vector<8x512xf32> to vector<8x128xf32>
    %508 = arith.negf %507 : vector<8x128xf32>
    %509 = math.exp %508 : vector<8x128xf32>
    %cst_156 = arith.constant 1.000000e+00 : f32
    %510 = vector.broadcast %cst_156 : f32 to vector<8x128xf32>
    %511 = arith.addf %510, %509 : vector<8x128xf32>
    %512 = arith.divf %510, %511 : vector<8x128xf32>
    %513 = vector.extract_strided_slice %480 {offsets = [0, 256], sizes = [8, 128], strides = [1, 1]} : vector<8x512xf32> to vector<8x128xf32>
    %514 = math.tanh %513 : vector<8x128xf32>
    %515 = vector.extract_strided_slice %480 {offsets = [0, 384], sizes = [8, 128], strides = [1, 1]} : vector<8x512xf32> to vector<8x128xf32>
    %516 = arith.negf %515 : vector<8x128xf32>
    %517 = math.exp %516 : vector<8x128xf32>
    %cst_157 = arith.constant 1.000000e+00 : f32
    %518 = vector.broadcast %cst_157 : f32 to vector<8x128xf32>
    %519 = arith.addf %518, %517 : vector<8x128xf32>
    %520 = arith.divf %518, %519 : vector<8x128xf32>
    %521 = arith.mulf %492, %457 : vector<8x128xf32>
    %522 = arith.mulf %486, %494 : vector<8x128xf32>
    %523 = arith.addf %521, %522 : vector<8x128xf32>
    %524 = math.tanh %523 : vector<8x128xf32>
    %525 = arith.mulf %500, %524 : vector<8x128xf32>
    %526 = arith.mulf %512, %462 : vector<8x128xf32>
    %527 = arith.mulf %506, %514 : vector<8x128xf32>
    %528 = arith.addf %526, %527 : vector<8x128xf32>
    %529 = math.tanh %528 : vector<8x128xf32>
    %530 = arith.mulf %520, %529 : vector<8x128xf32>
    %c7_158 = arith.constant 7 : index
    %c0_159 = arith.constant 0 : index
    %c0_160 = arith.constant 0 : index
    %531 = vector.load %arg5[%c7_158, %c0_159, %c0_160] : memref<8x8x128xf32, #tpu.memory_space<vmem>>, vector<1x8x128xf32>
    %532 = vector.shape_cast %531 : vector<1x8x128xf32> to vector<8x128xf32>
    %533 = vector.shape_cast %525 : vector<8x128xf32> to vector<1x8x128xf32>
    tpu.vector_store %arg5[%c7_158, %c0_159, %c0_160], %533 {strides = array<i32>} : memref<8x8x128xf32, #tpu.memory_space<vmem>>, vector<1x8x128xf32>,
    %c0_161 = arith.constant 0 : index
    %c0_162 = arith.constant 0 : index
    %c0_163 = arith.constant 0 : index
    %534 = vector.load %arg6[%c0_161, %c0_162, %c0_163] : memref<8x8x128xf32, #tpu.memory_space<vmem>>, vector<1x8x128xf32>
    %535 = vector.shape_cast %534 : vector<1x8x128xf32> to vector<8x128xf32>
    %536 = vector.shape_cast %530 : vector<8x128xf32> to vector<1x8x128xf32>
    tpu.vector_store %arg6[%c0_161, %c0_162, %c0_163], %536 {strides = array<i32>} : memref<8x8x128xf32, #tpu.memory_space<vmem>>, vector<1x8x128xf32>,
    %c0_164 = arith.constant 0 : index
    %c0_165 = arith.constant 0 : index
    %537 = vector.load %arg9[%c0_164, %c0_165] : memref<8x128xf32, #tpu.memory_space<vmem>>, vector<8x128xf32>
    tpu.vector_store %arg9[%c0_164, %c0_165], %525 {strides = array<i32>} : memref<8x128xf32, #tpu.memory_space<vmem>>, vector<8x128xf32>,
    %c0_166 = arith.constant 0 : index
    %c0_167 = arith.constant 0 : index
    %538 = vector.load %arg10[%c0_166, %c0_167] : memref<8x128xf32, #tpu.memory_space<vmem>>, vector<8x128xf32>
    tpu.vector_store %arg10[%c0_166, %c0_167], %523 {strides = array<i32>} : memref<8x128xf32, #tpu.memory_space<vmem>>, vector<8x128xf32>,
    %c0_168 = arith.constant 0 : index
    %c0_169 = arith.constant 0 : index
    %539 = vector.load %arg11[%c0_168, %c0_169] : memref<8x128xf32, #tpu.memory_space<vmem>>, vector<8x128xf32>
    tpu.vector_store %arg11[%c0_168, %c0_169], %530 {strides = array<i32>} : memref<8x128xf32, #tpu.memory_space<vmem>>, vector<8x128xf32>,
    %c0_170 = arith.constant 0 : index
    %c0_171 = arith.constant 0 : index
    %540 = vector.load %arg12[%c0_170, %c0_171] : memref<8x128xf32, #tpu.memory_space<vmem>>, vector<8x128xf32>
    tpu.vector_store %arg12[%c0_170, %c0_171], %528 {strides = array<i32>} : memref<8x128xf32, #tpu.memory_space<vmem>>, vector<8x128xf32>,
    %c0_i32_172 = arith.constant 0 : i32
    %541 = arith.cmpi eq, %arg0, %c0_i32_172 : i32
    %542 = arith.extui %541 : i1 to i32
    %c0_i32_173 = arith.constant 0 : i32
    %543 = arith.cmpi ne, %542, %c0_i32_173 : i32
    scf.if %543 {
      %c0_174 = arith.constant 0 : index
      %c0_175 = arith.constant 0 : index
      %544 = vector.load %arg7[%c0_174, %c0_175] : memref<8x128xf32, #tpu.memory_space<vmem>>, vector<8x128xf32>
      tpu.vector_store %arg7[%c0_174, %c0_175], %525 {strides = array<i32>} : memref<8x128xf32, #tpu.memory_space<vmem>>, vector<8x128xf32>,
      %c0_176 = arith.constant 0 : index
      %c0_177 = arith.constant 0 : index
      %545 = vector.load %arg8[%c0_176, %c0_177] : memref<8x128xf32, #tpu.memory_space<vmem>>, vector<8x128xf32>
      tpu.vector_store %arg8[%c0_176, %c0_177], %530 {strides = array<i32>} : memref<8x128xf32, #tpu.memory_space<vmem>>, vector<8x128xf32>,
    } else {
    }
    return
  }
  func.func @transform_0(%arg0: i32) -> (i32, i32, i32) {
    %c0_i32 = arith.constant 0 : i32
    %c0_i32_0 = arith.constant 0 : i32
    %c0_i32_1 = arith.constant 0 : i32
    return %arg0, %c0_i32, %c0_i32_0 : i32, i32, i32
  }
  func.func @transform_1(%arg0: i32) -> (i32, i32, i32) {
    %c0_i32 = arith.constant 0 : i32
    %0 = arith.subi %c0_i32, %arg0 : i32
    %c0_i32_0 = arith.constant 0 : i32
    %c0_i32_1 = arith.constant 0 : i32
    %c0_i32_2 = arith.constant 0 : i32
    return %0, %c0_i32_0, %c0_i32_1 : i32, i32, i32
  }
  func.func @transform_2(%arg0: i32) -> (i32, i32) {
    %c0_i32 = arith.constant 0 : i32
    %c0_i32_0 = arith.constant 0 : i32
    %c0_i32_1 = arith.constant 0 : i32
    return %c0_i32, %c0_i32_0 : i32, i32
  }
  func.func @transform_3(%arg0: i32) -> (i32, i32) {
    %c0_i32 = arith.constant 0 : i32
    %c0_i32_0 = arith.constant 0 : i32
    %c0_i32_1 = arith.constant 0 : i32
    return %c0_i32, %c0_i32_0 : i32, i32
  }
  func.func @transform_4(%arg0: i32) -> (i32, i32, i32) {
    %c0_i32 = arith.constant 0 : i32
    %c0_i32_0 = arith.constant 0 : i32
    %c0_i32_1 = arith.constant 0 : i32
    return %arg0, %c0_i32, %c0_i32_0 : i32, i32, i32
  }
  func.func @transform_5(%arg0: i32) -> (i32, i32, i32) {
    %c0_i32 = arith.constant 0 : i32
    %0 = arith.subi %c0_i32, %arg0 : i32
    %c0_i32_0 = arith.constant 0 : i32
    %c0_i32_1 = arith.constant 0 : i32
    %c0_i32_2 = arith.constant 0 : i32
    return %0, %c0_i32_0, %c0_i32_1 : i32, i32, i32
  }
  func.func @transform_6(%arg0: i32) -> (i32, i32) {
    %c0_i32 = arith.constant 0 : i32
    %c0_i32_0 = arith.constant 0 : i32
    %c0_i32_1 = arith.constant 0 : i32
    return %c0_i32, %c0_i32_0 : i32, i32
  }
  func.func @transform_7(%arg0: i32) -> (i32, i32) {
    %c0_i32 = arith.constant 0 : i32
    %c0_i32_0 = arith.constant 0 : i32
    %c0_i32_1 = arith.constant 0 : i32
    return %c0_i32, %c0_i32_0 : i32, i32
  }
}

module attributes {stable_mosaic.version = 11 : i64} {
  func.func @_dense_kernel(%arg0: i32, %arg1: memref<8x256xf32, #tpu.memory_space<vmem>>, %arg2: memref<256x128xf32, #tpu.memory_space<vmem>>, %arg3: memref<1x128xf32, #tpu.memory_space<vmem>>, %arg4: memref<8x128xf32, #tpu.memory_space<vmem>>) attributes {dimension_semantics = [#tpu.dimension_semantics<arbitrary>], iteration_bounds = array<i64: 1>, scalar_prefetch = 0 : i64, scratch_operands = 0 : i64, tpu.core_type = #tpu.core_type<tc>, window_params = [{pipeline_mode = #tpu.pipeline_mode<synchronous>, transform_indices = @transform_0, window_bounds = array<i64: 8, 256>}, {pipeline_mode = #tpu.pipeline_mode<synchronous>, transform_indices = @transform_1, window_bounds = array<i64: 256, 128>}, {pipeline_mode = #tpu.pipeline_mode<synchronous>, transform_indices = @transform_2, window_bounds = array<i64: 1, 128>}, {pipeline_mode = #tpu.pipeline_mode<synchronous>, transform_indices = @transform_3, window_bounds = array<i64: 8, 128>}]} {
    %c0 = arith.constant 0 : index
    %c0_0 = arith.constant 0 : index
    %0 = vector.load %arg1[%c0, %c0_0] : memref<8x256xf32, #tpu.memory_space<vmem>>, vector<8x256xf32>
    %c0_1 = arith.constant 0 : index
    %c0_2 = arith.constant 0 : index
    %1 = vector.load %arg2[%c0_1, %c0_2] : memref<256x128xf32, #tpu.memory_space<vmem>>, vector<256x128xf32>
    %cst = arith.constant dense<0.000000e+00> : vector<8x128xf32>
    %2 = tpu.matmul %0, %1, %cst {dimension_numbers = #tpu.dot_dimension_numbers<[1], [0], [0], [1], [0, 0, 1, 1], [], []>} : vector<8x256xf32>, vector<256x128xf32>, vector<8x128xf32> -> vector<8x128xf32>
    %c0_3 = arith.constant 0 : index
    %c0_4 = arith.constant 0 : index
    %3 = vector.load %arg3[%c0_3, %c0_4] : memref<1x128xf32, #tpu.memory_space<vmem>>, vector<1x128xf32>
    %4 = vector.broadcast %3 : vector<1x128xf32> to vector<8x128xf32>
    %5 = arith.addf %2, %4 : vector<8x128xf32>
    %c0_5 = arith.constant 0 : index
    %c0_6 = arith.constant 0 : index
    %6 = vector.load %arg4[%c0_5, %c0_6] : memref<8x128xf32, #tpu.memory_space<vmem>>, vector<8x128xf32>
    tpu.vector_store %arg4[%c0_5, %c0_6], %5 {strides = array<i32>} : memref<8x128xf32, #tpu.memory_space<vmem>>, vector<8x128xf32>,
    return
  }
  func.func @transform_0(%arg0: i32) -> (i32, i32) {
    %c0_i32 = arith.constant 0 : i32
    %c0_i32_0 = arith.constant 0 : i32
    %c0_i32_1 = arith.constant 0 : i32
    return %c0_i32, %c0_i32_0 : i32, i32
  }
  func.func @transform_1(%arg0: i32) -> (i32, i32) {
    %c0_i32 = arith.constant 0 : i32
    %c0_i32_0 = arith.constant 0 : i32
    %c0_i32_1 = arith.constant 0 : i32
    return %c0_i32, %c0_i32_0 : i32, i32
  }
  func.func @transform_2(%arg0: i32) -> (i32, i32) {
    %c0_i32 = arith.constant 0 : i32
    %c0_i32_0 = arith.constant 0 : i32
    %c0_i32_1 = arith.constant 0 : i32
    return %c0_i32, %c0_i32_0 : i32, i32
  }
  func.func @transform_3(%arg0: i32) -> (i32, i32) {
    %c0_i32 = arith.constant 0 : i32
    %c0_i32_0 = arith.constant 0 : i32
    %c0_i32_1 = arith.constant 0 : i32
    return %c0_i32, %c0_i32_0 : i32, i32
  }
}

</mosaic_0001>

<llo_original>
// kernel: rnn_model_forward.9
$region0: #{rnn_model_forward.9}
  #allocation0 [shape = 'u32[]', space=smem, size = 0x4, offset = 0x4, fixed_abs, tag = 'smem constant byte address 0x4 - core index']
  #allocation1 [shape = 'u32[144,128]{1,0:T(1,128)}', space=vmem, size = 0x12000, scoped, tag = 'internal scratch']
  %s0 = inlined_call_operand.vmem [shape: f32[8,256], index: 0, kind: input, shape index: {}]
  %s1 = inlined_call_operand.vmem [shape: f32[256,128], index: 1, kind: input, shape index: {}]
  %s2 = inlined_call_operand.vmem [shape: f32[1,128], index: 2, kind: input, shape index: {}]
  %s3 = inlined_call_operand.vmem [shape: f32[8,128], index: 3, kind: output, shape index: {}]
  %s4 = sld [smem:[#allocation0]]
  $region22: #{rnn_model_forward.9} parent=0
    _
  %s6 = ssub.s32 1, %s4
  %s7 = scalar_select 0, %s6, %s4
  // Predicated region
  $region2: #{rnn_model_forward.9} parent=0 // pred_check
    _
  $region3: #{rnn_model_forward.9} parent=0 // pred_check_branch
    %9 = sbr.rel (0) target = $region5
  $region4: #{rnn_model_forward.9} parent=0 // pred_region
    _
  $region5: #{rnn_model_forward.9} parent=0 // pred_fallthru
    _
  // Predicated region
  $region6: #{rnn_model_forward.9} parent=0 // pred_check
    _
  $region7: #{rnn_model_forward.9} parent=0 // pred_check_branch
    %11 = sbr.rel (0) target = $region9
  $region8: #{rnn_model_forward.9} parent=0 // pred_region
    _
  $region9: #{rnn_model_forward.9} parent=0 // pred_fallthru
    _
  // Predicated region
  $region10: #{rnn_model_forward.9} parent=0 // pred_check
    _
  $region11: #{rnn_model_forward.9} parent=0 // pred_check_branch
    %13 = sbr.rel (0) target = $region13
  $region12: #{rnn_model_forward.9} parent=0 // pred_region
    _
  $region13: #{rnn_model_forward.9} parent=0 // pred_fallthru
    _
  %v14 = vld [vmem:[%s0] sm:$0xff]
  %v15 = vld [vmem:[%s0 + $0x8] sm:$0xff]
  %v16 = vld [vmem:[%s1] sm:$0xff]
  %v17 = vld [vmem:[%s1 + $0x8] sm:$0xff]
  %v18 = vld [vmem:[%s1 + $0x10] sm:$0xff]
  %v19 = vld [vmem:[%s1 + $0x18] sm:$0xff]
  %v20 = vld [vmem:[%s1 + $0x20] sm:$0xff]
  %v21 = vld [vmem:[%s1 + $0x28] sm:$0xff]
  %v22 = vld [vmem:[%s1 + $0x30] sm:$0xff]
  %v23 = vld [vmem:[%s1 + $0x38] sm:$0xff]
  %v24 = vld [vmem:[%s1 + $0x40] sm:$0xff]
  %v25 = vld [vmem:[%s1 + $0x48] sm:$0xff]
  %v26 = vld [vmem:[%s1 + $0x50] sm:$0xff]
  %v27 = vld [vmem:[%s1 + $0x58] sm:$0xff]
  %v28 = vld [vmem:[%s1 + $0x60] sm:$0xff]
  %v29 = vld [vmem:[%s1 + $0x68] sm:$0xff]
  %v30 = vld [vmem:[%s1 + $0x70] sm:$0xff]
  %v31 = vld [vmem:[%s1 + $0x78] sm:$0xff]
  %v32 = vld [vmem:[%s1 + $0x80] sm:$0xff]
  %v33 = vld [vmem:[%s1 + $0x88] sm:$0xff]
  %v34 = vld [vmem:[%s1 + $0x90] sm:$0xff]
  %v35 = vld [vmem:[%s1 + $0x98] sm:$0xff]
  %v36 = vld [vmem:[%s1 + $0xa0] sm:$0xff]
  %v37 = vld [vmem:[%s1 + $0xa8] sm:$0xff]
  %v38 = vld [vmem:[%s1 + $0xb0] sm:$0xff]
  %v39 = vld [vmem:[%s1 + $0xb8] sm:$0xff]
  %v40 = vld [vmem:[%s1 + $0xc0] sm:$0xff]
  %v41 = vld [vmem:[%s1 + $0xc8] sm:$0xff]
  %v42 = vld [vmem:[%s1 + $0xd0] sm:$0xff]
  %v43 = vld [vmem:[%s1 + $0xd8] sm:$0xff]
  %v44 = vld [vmem:[%s1 + $0xe0] sm:$0xff]
  %v45 = vld [vmem:[%s1 + $0xe8] sm:$0xff]
  %v46 = vld [vmem:[%s1 + $0xf0] sm:$0xff]
  %v47 = vld [vmem:[%s1 + $0xf8] sm:$0xff]
  %v48 = vld [vmem:[%s2] sm:$0x1]
  %v50 = vlaneseq
  %v51 = vshrl.u32 %v50, 7
  %v52 = vsub.s32 0, %v51
  %v53 = vrot.slane %v48, %v52
  %55 = vmatprep.subr.mxu0 0.0
  %56 = vmatpush1.msra.mxu0 %v16
  %57 = vmatprep.subr.mxu0 0.0
  %58 = vmatpush1.msra.mxu0 %v17
  %59 = vmatprep.subr.mxu0 0.0
  %60 = vmatpush1.msra.mxu0 %v18
  %61 = vmatprep.subr.mxu0 0.0
  %62 = vmatpush1.msra.mxu0 %v19
  %63 = vmatprep.subr.mxu0 0.0
  %64 = vmatpush1.msra.mxu0 %v20
  %65 = vmatprep.subr.mxu0 0.0
  %66 = vmatpush1.msra.mxu0 %v21
  %67 = vmatprep.subr.mxu0 0.0
  %68 = vmatpush1.msra.mxu0 %v22
  %69 = vmatprep.subr.mxu0 0.0
  %70 = vmatpush1.msra.mxu0 %v23
  %71 = vmatprep.subr.mxu0 0.0
  %72 = vmatpush1.msra.mxu0 %v24
  %73 = vmatprep.subr.mxu0 0.0
  %74 = vmatpush1.msra.mxu0 %v25
  %75 = vmatprep.subr.mxu0 0.0
  %76 = vmatpush1.msra.mxu0 %v26
  %77 = vmatprep.subr.mxu0 0.0
  %78 = vmatpush1.msra.mxu0 %v27
  %79 = vmatprep.subr.mxu0 0.0
  %80 = vmatpush1.msra.mxu0 %v28
  %81 = vmatprep.subr.mxu0 0.0
  %82 = vmatpush1.msra.mxu0 %v29
  %83 = vmatprep.subr.mxu0 0.0
  %84 = vmatpush1.msra.mxu0 %v30
  %85 = vmatprep.subr.mxu0 0.0
  %86 = vmatpush1.msra.mxu0 %v31
  %87 = vmatprep.subr.mxu0 0.0
  %88 = vmatpush1.msra.mxu0 %v32
  %89 = vmatprep.subr.mxu0 0.0
  %90 = vmatpush1.msra.mxu0 %v33
  %91 = vmatprep.subr.mxu0 0.0
  %92 = vmatpush1.msra.mxu0 %v34
  %93 = vmatprep.subr.mxu0 0.0
  %94 = vmatpush1.msra.mxu0 %v35
  %95 = vmatprep.subr.mxu0 0.0
  %96 = vmatpush1.msra.mxu0 %v36
  %97 = vmatprep.subr.mxu0 0.0
  %98 = vmatpush1.msra.mxu0 %v37
  %99 = vmatprep.subr.mxu0 0.0
  %100 = vmatpush1.msra.mxu0 %v38
  %101 = vmatprep.subr.mxu0 0.0
  %102 = vmatpush1.msra.mxu0 %v39
  %103 = vmatprep.subr.mxu0 0.0
  %104 = vmatpush1.msra.mxu0 %v40
  %105 = vmatprep.subr.mxu0 0.0
  %106 = vmatpush1.msra.mxu0 %v41
  %107 = vmatprep.subr.mxu0 0.0
  %108 = vmatpush1.msra.mxu0 %v42
  %109 = vmatprep.subr.mxu0 0.0
  %110 = vmatpush1.msra.mxu0 %v43
  %111 = vmatprep.subr.mxu0 0.0
  %112 = vmatpush1.msra.mxu0 %v44
  %113 = vmatprep.subr.mxu0 0.0
  %114 = vmatpush1.msra.mxu0 %v45
  %115 = vmatprep.subr.mxu0 0.0
  %116 = vmatpush1.msra.mxu0 %v46
  %117 = vmatprep.subr.mxu0 0.0
  %118 = vmatpush1.msra.mxu0 %v47
  %119 = vmatprep.mubr.f32.mxu0 %v15
  %120 = vmatmul.mubr.f32.gmra.mrb[0].mxu0 %v14
  %v121 = vpop.f32.mrb[0].mxu0
  %v122 = vadd.f32 %v53, %v121
  %v123 = vpop.f32.mrb[0].mxu0
  %124 = vdwg.mxu0
  %125 = vst [vmem:[%s3] sm:$0xff] %v122
  // Predicated region
  $region14: #{rnn_model_forward.9} parent=0 // pred_check
    _
  $region15: #{rnn_model_forward.9} parent=0 // pred_check_branch
    %127 = sbr.rel (0) target = $region17
  $region16: #{rnn_model_forward.9} parent=0 // pred_region
    _
  $region17: #{rnn_model_forward.9} parent=0 // pred_fallthru
    _
  // Predicated region
  $region18: #{rnn_model_forward.9} parent=0 // pred_check
    _
  $region19: #{rnn_model_forward.9} parent=0 // pred_check_branch
    %129 = sbr.rel (0) target = $region21
  $region20: #{rnn_model_forward.9} parent=0 // pred_region
    _
  $region21: #{rnn_model_forward.9} parent=0 // pred_fallthru
    _

// kernel: rnn_model_forward.5
$region0: #{rnn_model_forward.5}
  #allocation0 [shape = 'u32[]', space=smem, size = 0x4, offset = 0x4, fixed_abs, tag = 'smem constant byte address 0x4 - core index']
  #allocation1 [shape = 'u32[144,128]{1,0:T(1,128)}', space=vmem, size = 0x12000, scoped, tag = 'internal scratch']
  %s0 = inlined_call_operand.hbm [shape: f32[64,64], index: 0, kind: input, shape index: {}]
  %s1 = inlined_call_operand.hbm [shape: bf16[64,1024], index: 1, kind: input, shape index: {}]
  %s2 = inlined_call_operand.hbm [shape: f32[1,1024], index: 2, kind: input, shape index: {}]
  %s3 = inlined_call_operand.hbm [shape: f32[64,1024], index: 3, kind: output, shape index: {}]
  %s4 = sld [smem:[#allocation0]]
  $region34: #{rnn_model_forward.5} parent=0
    _
  %s6 = ssub.s32 1, %s4
  %s7 = scalar_select 0, %s6, %s4
  $region1: #{rnn_model_forward.5} parent=0
    #allocation2 [shape = 'u8[32768]{0}', space=vmem, size = 0x8000, scoped, tag = 'input window, operand 0, single buffered']
    #allocation3 [shape = 's32[1]{0}', space=sflag, size = 0x4, scoped, tag = 'scoped memory for rnn_model_forward.5']
    #allocation4 [shape = 's32[1]{0}', space=sflag, size = 0x4, scoped, tag = 'scoped memory for rnn_model_forward.5']
    #allocation5 [shape = 'u8[131072]{0}', space=vmem, size = 0x20000, scoped, tag = 'input window, operand 1, single buffered']
    #allocation6 [shape = 's32[1]{0}', space=sflag, size = 0x4, scoped, tag = 'scoped memory for rnn_model_forward.5']
    #allocation7 [shape = 'u8[4096]{0}', space=vmem, size = 0x1000, scoped, tag = 'input window, operand 2, single buffered']
    #allocation8 [shape = 'u8[262144]{0}', space=vmem, size = 0x40000, scoped, tag = 'output window, operand 0, single buffered']
    %8 = vsyncpa [#allocation3], 0
    %9 = vsyncpa [#allocation6], 0
    %10 = vsyncpa [#allocation4], 0
    // Predicated region
    $region2: #{rnn_model_forward.5} parent=1 // pred_check
      _
    $region3: #{rnn_model_forward.5} parent=1 // pred_check_branch
      %12 = sbr.rel (0) target = $region5
    $region4: #{rnn_model_forward.5} parent=1 // pred_region
      %s14 = ssub.s32 1024, 1024
      %15 = vsyncadd [#allocation3], %s14
      %s16 = sshll.u32 [#allocation2], 4
      %s17 = int_to_ptr.vmem [resolvable:$true] %s16
      %22 = dma.hbm_to_vmem [thread:$0]  %s0, 1024, %s17, [#allocation3], 128, 128, 8
    $region5: #{rnn_model_forward.5} parent=1 // pred_fallthru
      _
    // Predicated region
    $region6: #{rnn_model_forward.5} parent=1 // pred_check
      _
    $region7: #{rnn_model_forward.5} parent=1 // pred_check_branch
      %24 = sbr.rel (0) target = $region9
    $region8: #{rnn_model_forward.5} parent=1 // pred_region
      %s26 = ssub.s32 4096, 4096
      %27 = vsyncadd [#allocation6], %s26
      %s28 = sshll.u32 [#allocation5], 4
      %s29 = int_to_ptr.vmem [resolvable:$true] %s28
      %34 = dma.hbm_to_vmem [thread:$0]  %s1, 4096, %s29, [#allocation6], 512, 512, 32
    $region9: #{rnn_model_forward.5} parent=1 // pred_fallthru
      _
    // Predicated region
    $region10: #{rnn_model_forward.5} parent=1 // pred_check
      _
    $region11: #{rnn_model_forward.5} parent=1 // pred_check_branch
      %36 = sbr.rel (0) target = $region13
    $region12: #{rnn_model_forward.5} parent=1 // pred_region
      %s38 = ssub.s32 128, 128
      %39 = vsyncadd [#allocation6], %s38
      %s41 = sshll.u32 [#allocation7], 4
      %s42 = int_to_ptr.vmem [resolvable:$true] %s41
      %44 = dma.hbm_to_vmem [thread:$0]  %s2, 128, %s42, [#allocation6]
    $region13: #{rnn_model_forward.5} parent=1 // pred_fallthru
      _
    // Predicated region
    $region14: #{rnn_model_forward.5} parent=1 // pred_check
      _
    $region15: #{rnn_model_forward.5} parent=1 // pred_check_branch
      %46 = sbr.rel (0) target = $region17
    $region16: #{rnn_model_forward.5} parent=1 // pred_region
      %47 = dma.done [#allocation3], 1024
    $region17: #{rnn_model_forward.5} parent=1 // pred_fallthru
      _
    // Predicated region
    $region18: #{rnn_model_forward.5} parent=1 // pred_check
      _
    $region19: #{rnn_model_forward.5} parent=1 // pred_check_branch
      %49 = sbr.rel (0) target = $region21
    $region20: #{rnn_model_forward.5} parent=1 // pred_region
      %50 = dma.done [#allocation6], 4096
    $region21: #{rnn_model_forward.5} parent=1 // pred_fallthru
      _
    // Predicated region
    $region22: #{rnn_model_forward.5} parent=1 // pred_check
      _
    $region23: #{rnn_model_forward.5} parent=1 // pred_check_branch
      %52 = sbr.rel (0) target = $region25
    $region24: #{rnn_model_forward.5} parent=1 // pred_region
      %53 = dma.done [#allocation6], 128
    $region25: #{rnn_model_forward.5} parent=1 // pred_fallthru
      _
    %v55 = vld [vmem:[#allocation2] sm:$0xff]
    %v56 = vld [vmem:[#allocation2 + $0x8] sm:$0xff]
    %v57 = vld [vmem:[#allocation2 + $0x10] sm:$0xff]
    %v58 = vld [vmem:[#allocation2 + $0x18] sm:$0xff]
    %v59 = vld [vmem:[#allocation2 + $0x20] sm:$0xff]
    %v60 = vld [vmem:[#allocation2 + $0x28] sm:$0xff]
    %v61 = vld [vmem:[#allocation2 + $0x30] sm:$0xff]
    %v62 = vld [vmem:[#allocation2 + $0x38] sm:$0xff]
    %v63 = vpack.c.bf16 %v56, %v55
    %v64 = vpack.c.bf16 %v58, %v57
    %v65 = vpack.c.bf16 %v60, %v59
    %v66 = vpack.c.bf16 %v62, %v61
    %v67 = vld [vmem:[#allocation5] sm:$0xff]
    %v68 = vld [vmem:[#allocation5 + $0x8] sm:$0xff]
    %v69 = vld [vmem:[#allocation5 + $0x10] sm:$0xff]
    %v70 = vld [vmem:[#allocation5 + $0x18] sm:$0xff]
    %v71 = vld [vmem:[#allocation5 + $0x20] sm:$0xff]
    %v72 = vld [vmem:[#allocation5 + $0x28] sm:$0xff]
    %v73 = vld [vmem:[#allocation5 + $0x30] sm:$0xff]
    %v74 = vld [vmem:[#allocation5 + $0x38] sm:$0xff]
    %v75 = vld [vmem:[#allocation5 + $0x40] sm:$0xff]
    %v76 = vld [vmem:[#allocation5 + $0x48] sm:$0xff]
    %v77 = vld [vmem:[#allocation5 + $0x50] sm:$0xff]
    %v78 = vld [vmem:[#allocation5 + $0x58] sm:$0xff]
    %v79 = vld [vmem:[#allocation5 + $0x60] sm:$0xff]
    %v80 = vld [vmem:[#allocation5 + $0x68] sm:$0xff]
    %v81 = vld [vmem:[#allocation5 + $0x70] sm:$0xff]
    %v82 = vld [vmem:[#allocation5 + $0x78] sm:$0xff]
    %v83 = vld [vmem:[#allocation5 + $0x80] sm:$0xff]
    %v84 = vld [vmem:[#allocation5 + $0x88] sm:$0xff]
    %v85 = vld [vmem:[#allocation5 + $0x90] sm:$0xff]
    %v86 = vld [vmem:[#allocation5 + $0x98] sm:$0xff]
    %v87 = vld [vmem:[#allocation5 + $0xa0] sm:$0xff]
    %v88 = vld [vmem:[#allocation5 + $0xa8] sm:$0xff]
    %v89 = vld [vmem:[#allocation5 + $0xb0] sm:$0xff]
    %v90 = vld [vmem:[#allocation5 + $0xb8] sm:$0xff]
    %v91 = vld [vmem:[#allocation5 + $0xc0] sm:$0xff]
    %v92 = vld [vmem:[#allocation5 + $0xc8] sm:$0xff]
    %v93 = vld [vmem:[#allocation5 + $0xd0] sm:$0xff]
    %v94 = vld [vmem:[#allocation5 + $0xd8] sm:$0xff]
    %v95 = vld [vmem:[#allocation5 + $0xe0] sm:$0xff]
    %v96 = vld [vmem:[#allocation5 + $0xe8] sm:$0xff]
    %v97 = vld [vmem:[#allocation5 + $0xf0] sm:$0xff]
    %v98 = vld [vmem:[#allocation5 + $0xf8] sm:$0xff]
    %v99 = vld [vmem:[#allocation7] sm:$0xff]
    %v101 = vlaneseq
    %v102 = vshrl.u32 %v101, 7
    %v103 = vsub.s32 0, %v102
    %v104 = vrot.slane %v99, %v103
    %v105 = vlaneseq
    %v106 = vshrl.u32 %v105, 7
    %v107 = vsub.s32 1, %v106
    %v108 = vrot.slane %v99, %v107
    %v109 = vlaneseq
    %v110 = vshrl.u32 %v109, 7
    %v111 = vsub.s32 2, %v110
    %v112 = vrot.slane %v99, %v111
    %v113 = vlaneseq
    %v114 = vshrl.u32 %v113, 7
    %v115 = vsub.s32 3, %v114
    %v116 = vrot.slane %v99, %v115
    %v117 = vlaneseq
    %v118 = vshrl.u32 %v117, 7
    %v119 = vsub.s32 4, %v118
    %v120 = vrot.slane %v99, %v119
    %v121 = vlaneseq
    %v122 = vshrl.u32 %v121, 7
    %v123 = vsub.s32 5, %v122
    %v124 = vrot.slane %v99, %v123
    %v125 = vlaneseq
    %v126 = vshrl.u32 %v125, 7
    %v127 = vsub.s32 6, %v126
    %v128 = vrot.slane %v99, %v127
    %v129 = vlaneseq
    %v130 = vshrl.u32 %v129, 7
    %v131 = vsub.s32 7, %v130
    %v132 = vrot.slane %v99, %v131
    %v173 = vunpack.c.l.b16 %v67
    %v174 = vunpack.c.h.b16 %v67
    %v175 = vunpack.c.l.b16 %v68
    %v176 = vunpack.c.h.b16 %v68
    %v177 = vunpack.c.l.b16 %v69
    %v178 = vunpack.c.h.b16 %v69
    %v179 = vunpack.c.l.b16 %v70
    %v180 = vunpack.c.h.b16 %v70
    %v181 = vunpack.c.l.b16 %v71
    %v182 = vunpack.c.h.b16 %v71
    %v183 = vunpack.c.l.b16 %v72
    %v184 = vunpack.c.h.b16 %v72
    %v185 = vunpack.c.l.b16 %v73
    %v186 = vunpack.c.h.b16 %v73
    %v187 = vunpack.c.l.b16 %v74
    %v188 = vunpack.c.h.b16 %v74
    %v189 = vunpack.c.l.b16 %v75
    %v190 = vunpack.c.h.b16 %v75
    %v191 = vunpack.c.l.b16 %v76
    %v192 = vunpack.c.h.b16 %v76
    %v193 = vunpack.c.l.b16 %v77
    %v194 = vunpack.c.h.b16 %v77
    %v195 = vunpack.c.l.b16 %v78
    %v196 = vunpack.c.h.b16 %v78
    %v197 = vunpack.c.l.b16 %v79
    %v198 = vunpack.c.h.b16 %v79
    %v199 = vunpack.c.l.b16 %v80
    %v200 = vunpack.c.h.b16 %v80
    %v201 = vunpack.c.l.b16 %v81
    %v202 = vunpack.c.h.b16 %v81
    %v203 = vunpack.c.l.b16 %v82
    %v204 = vunpack.c.h.b16 %v82
    %v205 = vunpack.c.l.b16 %v83
    %v206 = vunpack.c.h.b16 %v83
    %v207 = vunpack.c.l.b16 %v84
    %v208 = vunpack.c.h.b16 %v84
    %v209 = vunpack.c.l.b16 %v85
    %v210 = vunpack.c.h.b16 %v85
    %v211 = vunpack.c.l.b16 %v86
    %v212 = vunpack.c.h.b16 %v86
    %v213 = vunpack.c.l.b16 %v87
    %v214 = vunpack.c.h.b16 %v87
    %v215 = vunpack.c.l.b16 %v88
    %v216 = vunpack.c.h.b16 %v88
    %v217 = vunpack.c.l.b16 %v89
    %v218 = vunpack.c.h.b16 %v89
    %v219 = vunpack.c.l.b16 %v90
    %v220 = vunpack.c.h.b16 %v90
    %v221 = vunpack.c.l.b16 %v91
    %v222 = vunpack.c.h.b16 %v91
    %v223 = vunpack.c.l.b16 %v92
    %v224 = vunpack.c.h.b16 %v92
    %v225 = vunpack.c.l.b16 %v93
    %v226 = vunpack.c.h.b16 %v93
    %v227 = vunpack.c.l.b16 %v94
    %v228 = vunpack.c.h.b16 %v94
    %v229 = vunpack.c.l.b16 %v95
    %v230 = vunpack.c.h.b16 %v95
    %v231 = vunpack.c.l.b16 %v96
    %v232 = vunpack.c.h.b16 %v96
    %v233 = vunpack.c.l.b16 %v97
    %v234 = vunpack.c.h.b16 %v97
    %v235 = vunpack.c.l.b16 %v98
    %v236 = vunpack.c.h.b16 %v98
    %v237 = vpack.c.b16 %v181, %v173
    %v238 = vpack.c.b16 %v182, %v174
    %v239 = vpack.c.b16 %v183, %v175
    %v240 = vpack.c.b16 %v184, %v176
    %v241 = vpack.c.b16 %v185, %v177
    %v242 = vpack.c.b16 %v186, %v178
    %v243 = vpack.c.b16 %v187, %v179
    %v244 = vpack.c.b16 %v188, %v180
    %v245 = vpack.c.b16 %v197, %v189
    %v246 = vpack.c.b16 %v198, %v190
    %v247 = vpack.c.b16 %v199, %v191
    %v248 = vpack.c.b16 %v200, %v192
    %v249 = vpack.c.b16 %v201, %v193
    %v250 = vpack.c.b16 %v202, %v194
    %v251 = vpack.c.b16 %v203, %v195
    %v252 = vpack.c.b16 %v204, %v196
    %v253 = vpack.c.b16 %v213, %v205
    %v254 = vpack.c.b16 %v214, %v206
    %v255 = vpack.c.b16 %v215, %v207
    %v256 = vpack.c.b16 %v216, %v208
    %v257 = vpack.c.b16 %v217, %v209
    %v258 = vpack.c.b16 %v218, %v210
    %v259 = vpack.c.b16 %v219, %v211
    %v260 = vpack.c.b16 %v220, %v212
    %v261 = vpack.c.b16 %v229, %v221
    %v262 = vpack.c.b16 %v230, %v222
    %v263 = vpack.c.b16 %v231, %v223
    %v264 = vpack.c.b16 %v232, %v224
    %v265 = vpack.c.b16 %v233, %v225
    %v266 = vpack.c.b16 %v234, %v226
    %v267 = vpack.c.b16 %v235, %v227
    %v268 = vpack.c.b16 %v236, %v228
    %vm301 = vcmask 523264
    %v303 = vsel %vm301, %v63, 0
    %v306 = vsel %vm301, %v64, 0
    %v309 = vsel %vm301, %v65, 0
    %v312 = vsel %vm301, %v66, 0
    %314 = vmatprep.subr.bf16.mxu0 %v238
    %315 = vmatpush1.bf16.msra.mxu0 %v237
    %316 = vmatprep.subr.bf16.mxu0 %v246
    %317 = vmatpush1.bf16.msra.mxu0 %v245
    %318 = vmatprep.subr.bf16.mxu0 %v254
    %319 = vmatpush1.bf16.msra.mxu0 %v253
    %320 = vmatprep.subr.bf16.mxu0 %v262
    %321 = vmatpush1.bf16.msra.mxu0 %v261
    %322 = vmatprep.subr.bf16.mxu0 0
    %323 = vmatpush1.bf16.msra.mxu0 0
    %324 = vmatprep.subr.bf16.mxu0 0
    %325 = vmatpush1.bf16.msra.mxu0 0
    %326 = vmatprep.subr.bf16.mxu0 0
    %327 = vmatpush1.bf16.msra.mxu0 0
    %328 = vmatprep.subr.bf16.mxu0 0
    %329 = vmatpush1.bf16.msra.mxu0 0
    %330 = vmatprep.subr.bf16.mxu0 0
    %331 = vmatpush1.bf16.msra.mxu0 0
    %332 = vmatprep.subr.bf16.mxu0 0
    %333 = vmatpush1.bf16.msra.mxu0 0
    %334 = vmatprep.subr.bf16.mxu0 0
    %335 = vmatpush1.bf16.msra.mxu0 0
    %336 = vmatprep.subr.bf16.mxu0 0
    %337 = vmatpush1.bf16.msra.mxu0 0
    %338 = vmatprep.subr.bf16.mxu0 0
    %339 = vmatpush1.bf16.msra.mxu0 0
    %340 = vmatprep.subr.bf16.mxu0 0
    %341 = vmatpush1.bf16.msra.mxu0 0
    %342 = vmatprep.subr.bf16.mxu0 0
    %343 = vmatpush1.bf16.msra.mxu0 0
    %344 = vmatprep.subr.bf16.mxu0 0
    %345 = vmatpush1.bf16.msra.mxu0 0
    %346 = vmatprep.mubr.bf16.mxu0 0
    %347 = vmatmul.mubr.bf16.gmra.mrb[0].mxu0 %v303
    %v348 = vpop.f32.mrb[0].mxu0
    %v349 = vadd.f32 %v104, %v348
    %v350 = vpop.f32.mrb[0].mxu0
    %v351 = vadd.f32 %v108, %v350
    %v352 = vpop.f32.mrb[0].mxu0
    %v353 = vadd.f32 %v104, %v352
    %v354 = vpop.f32.mrb[0].mxu0
    %v355 = vadd.f32 %v108, %v354
    %356 = vmatprep.mubr.bf16.mxu0 0
    %357 = vmatmul.mubr.bf16.gmra.mrb[0].mxu0 %v306
    %v358 = vpop.f32.mrb[0].mxu0
    %v359 = vadd.f32 %v104, %v358
    %v360 = vpop.f32.mrb[0].mxu0
    %v361 = vadd.f32 %v108, %v360
    %v362 = vpop.f32.mrb[0].mxu0
    %v363 = vadd.f32 %v104, %v362
    %v364 = vpop.f32.mrb[0].mxu0
    %v365 = vadd.f32 %v108, %v364
    %366 = vmatprep.mubr.bf16.mxu0 0
    %367 = vmatmul.mubr.bf16.gmra.mrb[0].mxu0 %v309
    %v368 = vpop.f32.mrb[0].mxu0
    %v369 = vadd.f32 %v104, %v368
    %v370 = vpop.f32.mrb[0].mxu0
    %v371 = vadd.f32 %v108, %v370
    %v372 = vpop.f32.mrb[0].mxu0
    %v373 = vadd.f32 %v104, %v372
    %v374 = vpop.f32.mrb[0].mxu0
    %v375 = vadd.f32 %v108, %v374
    %376 = vmatprep.mubr.bf16.mxu0 0
    %377 = vmatmul.mubr.bf16.gmra.mrb[0].mxu0 %v312
    %v378 = vpop.f32.mrb[0].mxu0
    %v379 = vadd.f32 %v104, %v378
    %v380 = vpop.f32.mrb[0].mxu0
    %v381 = vadd.f32 %v108, %v380
    %v382 = vpop.f32.mrb[0].mxu0
    %v383 = vadd.f32 %v104, %v382
    %v384 = vpop.f32.mrb[0].mxu0
    %v385 = vadd.f32 %v108, %v384
    %386 = vdwg.mxu0
    %387 = vmatprep.subr.bf16.mxu0 %v240
    %388 = vmatpush1.bf16.msra.mxu0 %v239
    %389 = vmatprep.subr.bf16.mxu0 %v248
    %390 = vmatpush1.bf16.msra.mxu0 %v247
    %391 = vmatprep.subr.bf16.mxu0 %v256
    %392 = vmatpush1.bf16.msra.mxu0 %v255
    %393 = vmatprep.subr.bf16.mxu0 %v264
    %394 = vmatpush1.bf16.msra.mxu0 %v263
    %395 = vmatprep.subr.bf16.mxu0 0
    %396 = vmatpush1.bf16.msra.mxu0 0
    %397 = vmatprep.subr.bf16.mxu0 0
    %398 = vmatpush1.bf16.msra.mxu0 0
    %399 = vmatprep.subr.bf16.mxu0 0
    %400 = vmatpush1.bf16.msra.mxu0 0
    %401 = vmatprep.subr.bf16.mxu0 0
    %402 = vmatpush1.bf16.msra.mxu0 0
    %403 = vmatprep.subr.bf16.mxu0 0
    %404 = vmatpush1.bf16.msra.mxu0 0
    %405 = vmatprep.subr.bf16.mxu0 0
    %406 = vmatpush1.bf16.msra.mxu0 0
    %407 = vmatprep.subr.bf16.mxu0 0
    %408 = vmatpush1.bf16.msra.mxu0 0
    %409 = vmatprep.subr.bf16.mxu0 0
    %410 = vmatpush1.bf16.msra.mxu0 0
    %411 = vmatprep.subr.bf16.mxu0 0
    %412 = vmatpush1.bf16.msra.mxu0 0
    %413 = vmatprep.subr.bf16.mxu0 0
    %414 = vmatpush1.bf16.msra.mxu0 0
    %415 = vmatprep.subr.bf16.mxu0 0
    %416 = vmatpush1.bf16.msra.mxu0 0
    %417 = vmatprep.subr.bf16.mxu0 0
    %418 = vmatpush1.bf16.msra.mxu0 0
    %419 = vmatprep.mubr.bf16.mxu0 0
    %420 = vmatmul.mubr.bf16.gmra.mrb[0].mxu0 %v303
    %v421 = vpop.f32.mrb[0].mxu0
    %v422 = vadd.f32 %v112, %v421
    %v423 = vpop.f32.mrb[0].mxu0
    %v424 = vadd.f32 %v116, %v423
    %v425 = vpop.f32.mrb[0].mxu0
    %v426 = vadd.f32 %v112, %v425
    %v427 = vpop.f32.mrb[0].mxu0
    %v428 = vadd.f32 %v116, %v427
    %429 = vmatprep.mubr.bf16.mxu0 0
    %430 = vmatmul.mubr.bf16.gmra.mrb[0].mxu0 %v306
    %v431 = vpop.f32.mrb[0].mxu0
    %v432 = vadd.f32 %v112, %v431
    %v433 = vpop.f32.mrb[0].mxu0
    %v434 = vadd.f32 %v116, %v433
    %v435 = vpop.f32.mrb[0].mxu0
    %v436 = vadd.f32 %v112, %v435
    %v437 = vpop.f32.mrb[0].mxu0
    %v438 = vadd.f32 %v116, %v437
    %439 = vmatprep.mubr.bf16.mxu0 0
    %440 = vmatmul.mubr.bf16.gmra.mrb[0].mxu0 %v309
    %v441 = vpop.f32.mrb[0].mxu0
    %v442 = vadd.f32 %v112, %v441
    %v443 = vpop.f32.mrb[0].mxu0
    %v444 = vadd.f32 %v116, %v443
    %v445 = vpop.f32.mrb[0].mxu0
    %v446 = vadd.f32 %v112, %v445
    %v447 = vpop.f32.mrb[0].mxu0
    %v448 = vadd.f32 %v116, %v447
    %449 = vmatprep.mubr.bf16.mxu0 0
    %450 = vmatmul.mubr.bf16.gmra.mrb[0].mxu0 %v312
    %v451 = vpop.f32.mrb[0].mxu0
    %v452 = vadd.f32 %v112, %v451
    %v453 = vpop.f32.mrb[0].mxu0
    %v454 = vadd.f32 %v116, %v453
    %v455 = vpop.f32.mrb[0].mxu0
    %v456 = vadd.f32 %v112, %v455
    %v457 = vpop.f32.mrb[0].mxu0
    %v458 = vadd.f32 %v116, %v457
    %459 = vdwg.mxu0
    %460 = vmatprep.subr.bf16.mxu0 %v242
    %461 = vmatpush1.bf16.msra.mxu0 %v241
    %462 = vmatprep.subr.bf16.mxu0 %v250
    %463 = vmatpush1.bf16.msra.mxu0 %v249
    %464 = vmatprep.subr.bf16.mxu0 %v258
    %465 = vmatpush1.bf16.msra.mxu0 %v257
    %466 = vmatprep.subr.bf16.mxu0 %v266
    %467 = vmatpush1.bf16.msra.mxu0 %v265
    %468 = vmatprep.subr.bf16.mxu0 0
    %469 = vmatpush1.bf16.msra.mxu0 0
    %470 = vmatprep.subr.bf16.mxu0 0
    %471 = vmatpush1.bf16.msra.mxu0 0
    %472 = vmatprep.subr.bf16.mxu0 0
    %473 = vmatpush1.bf16.msra.mxu0 0
    %474 = vmatprep.subr.bf16.mxu0 0
    %475 = vmatpush1.bf16.msra.mxu0 0
    %476 = vmatprep.subr.bf16.mxu0 0
    %477 = vmatpush1.bf16.msra.mxu0 0
    %478 = vmatprep.subr.bf16.mxu0 0
    %479 = vmatpush1.bf16.msra.mxu0 0
    %480 = vmatprep.subr.bf16.mxu0 0
    %481 = vmatpush1.bf16.msra.mxu0 0
    %482 = vmatprep.subr.bf16.mxu0 0
    %483 = vmatpush1.bf16.msra.mxu0 0
    %484 = vmatprep.subr.bf16.mxu0 0
    %485 = vmatpush1.bf16.msra.mxu0 0
    %486 = vmatprep.subr.bf16.mxu0 0
    %487 = vmatpush1.bf16.msra.mxu0 0
    %488 = vmatprep.subr.bf16.mxu0 0
    %489 = vmatpush1.bf16.msra.mxu0 0
    %490 = vmatprep.subr.bf16.mxu0 0
    %491 = vmatpush1.bf16.msra.mxu0 0
    %492 = vmatprep.mubr.bf16.mxu0 0
    %493 = vmatmul.mubr.bf16.gmra.mrb[0].mxu0 %v303
    %v494 = vpop.f32.mrb[0].mxu0
    %v495 = vadd.f32 %v120, %v494
    %v496 = vpop.f32.mrb[0].mxu0
    %v497 = vadd.f32 %v124, %v496
    %v498 = vpop.f32.mrb[0].mxu0
    %v499 = vadd.f32 %v120, %v498
    %v500 = vpop.f32.mrb[0].mxu0
    %v501 = vadd.f32 %v124, %v500
    %502 = vmatprep.mubr.bf16.mxu0 0
    %503 = vmatmul.mubr.bf16.gmra.mrb[0].mxu0 %v306
    %v504 = vpop.f32.mrb[0].mxu0
    %v505 = vadd.f32 %v120, %v504
    %v506 = vpop.f32.mrb[0].mxu0
    %v507 = vadd.f32 %v124, %v506
    %v508 = vpop.f32.mrb[0].mxu0
    %v509 = vadd.f32 %v120, %v508
    %v510 = vpop.f32.mrb[0].mxu0
    %v511 = vadd.f32 %v124, %v510
    %512 = vmatprep.mubr.bf16.mxu0 0
    %513 = vmatmul.mubr.bf16.gmra.mrb[0].mxu0 %v309
    %v514 = vpop.f32.mrb[0].mxu0
    %v515 = vadd.f32 %v120, %v514
    %v516 = vpop.f32.mrb[0].mxu0
    %v517 = vadd.f32 %v124, %v516
    %v518 = vpop.f32.mrb[0].mxu0
    %v519 = vadd.f32 %v120, %v518
    %v520 = vpop.f32.mrb[0].mxu0
    %v521 = vadd.f32 %v124, %v520
    %522 = vmatprep.mubr.bf16.mxu0 0
    %523 = vmatmul.mubr.bf16.gmra.mrb[0].mxu0 %v312
    %v524 = vpop.f32.mrb[0].mxu0
    %v525 = vadd.f32 %v120, %v524
    %v526 = vpop.f32.mrb[0].mxu0
    %v527 = vadd.f32 %v124, %v526
    %v528 = vpop.f32.mrb[0].mxu0
    %v529 = vadd.f32 %v120, %v528
    %v530 = vpop.f32.mrb[0].mxu0
    %v531 = vadd.f32 %v124, %v530
    %532 = vdwg.mxu0
    %533 = vmatprep.subr.bf16.mxu0 %v244
    %534 = vmatpush1.bf16.msra.mxu0 %v243
    %535 = vmatprep.subr.bf16.mxu0 %v252
    %536 = vmatpush1.bf16.msra.mxu0 %v251
    %537 = vmatprep.subr.bf16.mxu0 %v260
    %538 = vmatpush1.bf16.msra.mxu0 %v259
    %539 = vmatprep.subr.bf16.mxu0 %v268
    %540 = vmatpush1.bf16.msra.mxu0 %v267
    %541 = vmatprep.subr.bf16.mxu0 0
    %542 = vmatpush1.bf16.msra.mxu0 0
    %543 = vmatprep.subr.bf16.mxu0 0
    %544 = vmatpush1.bf16.msra.mxu0 0
    %545 = vmatprep.subr.bf16.mxu0 0
    %546 = vmatpush1.bf16.msra.mxu0 0
    %547 = vmatprep.subr.bf16.mxu0 0
    %548 = vmatpush1.bf16.msra.mxu0 0
    %549 = vmatprep.subr.bf16.mxu0 0
    %550 = vmatpush1.bf16.msra.mxu0 0
    %551 = vmatprep.subr.bf16.mxu0 0
    %552 = vmatpush1.bf16.msra.mxu0 0
    %553 = vmatprep.subr.bf16.mxu0 0
    %554 = vmatpush1.bf16.msra.mxu0 0
    %555 = vmatprep.subr.bf16.mxu0 0
    %556 = vmatpush1.bf16.msra.mxu0 0
    %557 = vmatprep.subr.bf16.mxu0 0
    %558 = vmatpush1.bf16.msra.mxu0 0
    %559 = vmatprep.subr.bf16.mxu0 0
    %560 = vmatpush1.bf16.msra.mxu0 0
    %561 = vmatprep.subr.bf16.mxu0 0
    %562 = vmatpush1.bf16.msra.mxu0 0
    %563 = vmatprep.subr.bf16.mxu0 0
    %564 = vmatpush1.bf16.msra.mxu0 0
    %565 = vmatprep.mubr.bf16.mxu0 0
    %566 = vmatmul.mubr.bf16.gmra.mrb[0].mxu0 %v303
    %v567 = vpop.f32.mrb[0].mxu0
    %v568 = vadd.f32 %v128, %v567
    %v569 = vpop.f32.mrb[0].mxu0
    %v570 = vadd.f32 %v132, %v569
    %v571 = vpop.f32.mrb[0].mxu0
    %v572 = vadd.f32 %v128, %v571
    %v573 = vpop.f32.mrb[0].mxu0
    %v574 = vadd.f32 %v132, %v573
    %575 = vmatprep.mubr.bf16.mxu0 0
    %576 = vmatmul.mubr.bf16.gmra.mrb[0].mxu0 %v306
    %v577 = vpop.f32.mrb[0].mxu0
    %v578 = vadd.f32 %v128, %v577
    %v579 = vpop.f32.mrb[0].mxu0
    %v580 = vadd.f32 %v132, %v579
    %v581 = vpop.f32.mrb[0].mxu0
    %v582 = vadd.f32 %v128, %v581
    %v583 = vpop.f32.mrb[0].mxu0
    %v584 = vadd.f32 %v132, %v583
    %585 = vmatprep.mubr.bf16.mxu0 0
    %586 = vmatmul.mubr.bf16.gmra.mrb[0].mxu0 %v309
    %v587 = vpop.f32.mrb[0].mxu0
    %v588 = vadd.f32 %v128, %v587
    %v589 = vpop.f32.mrb[0].mxu0
    %v590 = vadd.f32 %v132, %v589
    %v591 = vpop.f32.mrb[0].mxu0
    %v592 = vadd.f32 %v128, %v591
    %v593 = vpop.f32.mrb[0].mxu0
    %v594 = vadd.f32 %v132, %v593
    %595 = vmatprep.mubr.bf16.mxu0 0
    %596 = vmatmul.mubr.bf16.gmra.mrb[0].mxu0 %v312
    %v597 = vpop.f32.mrb[0].mxu0
    %v598 = vadd.f32 %v128, %v597
    %v599 = vpop.f32.mrb[0].mxu0
    %v600 = vadd.f32 %v132, %v599
    %v601 = vpop.f32.mrb[0].mxu0
    %v602 = vadd.f32 %v128, %v601
    %v603 = vpop.f32.mrb[0].mxu0
    %v604 = vadd.f32 %v132, %v603
    %605 = vdwg.mxu0
    %606 = vst [vmem:[#allocation8] sm:$0xff] %v349
    %607 = vst [vmem:[#allocation8 + $0x8] sm:$0xff] %v351
    %608 = vst [vmem:[#allocation8 + $0x10] sm:$0xff] %v422
    %609 = vst [vmem:[#allocation8 + $0x18] sm:$0xff] %v424
    %610 = vst [vmem:[#allocation8 + $0x20] sm:$0xff] %v495
    %611 = vst [vmem:[#allocation8 + $0x28] sm:$0xff] %v497
    %612 = vst [vmem:[#allocation8 + $0x30] sm:$0xff] %v568
    %613 = vst [vmem:[#allocation8 + $0x38] sm:$0xff] %v570
    %614 = vst [vmem:[#allocation8 + $0x40] sm:$0xff] %v353
    %615 = vst [vmem:[#allocation8 + $0x48] sm:$0xff] %v355
    %616 = vst [vmem:[#allocation8 + $0x50] sm:$0xff] %v426
    %617 = vst [vmem:[#allocation8 + $0x58] sm:$0xff] %v428
    %618 = vst [vmem:[#allocation8 + $0x60] sm:$0xff] %v499
    %619 = vst [vmem:[#allocation8 + $0x68] sm:$0xff] %v501
    %620 = vst [vmem:[#allocation8 + $0x70] sm:$0xff] %v572
    %621 = vst [vmem:[#allocation8 + $0x78] sm:$0xff] %v574
    %622 = vst [vmem:[#allocation8 + $0x80] sm:$0xff] %v359
    %623 = vst [vmem:[#allocation8 + $0x88] sm:$0xff] %v361
    %624 = vst [vmem:[#allocation8 + $0x90] sm:$0xff] %v432
    %625 = vst [vmem:[#allocation8 + $0x98] sm:$0xff] %v434
    %626 = vst [vmem:[#allocation8 + $0xa0] sm:$0xff] %v505
    %627 = vst [vmem:[#allocation8 + $0xa8] sm:$0xff] %v507
    %628 = vst [vmem:[#allocation8 + $0xb0] sm:$0xff] %v578
    %629 = vst [vmem:[#allocation8 + $0xb8] sm:$0xff] %v580
    %630 = vst [vmem:[#allocation8 + $0xc0] sm:$0xff] %v363
    %631 = vst [vmem:[#allocation8 + $0xc8] sm:$0xff] %v365
    %632 = vst [vmem:[#allocation8 + $0xd0] sm:$0xff] %v436
    %633 = vst [vmem:[#allocation8 + $0xd8] sm:$0xff] %v438
    %634 = vst [vmem:[#allocation8 + $0xe0] sm:$0xff] %v509
    %635 = vst [vmem:[#allocation8 + $0xe8] sm:$0xff] %v511
    %636 = vst [vmem:[#allocation8 + $0xf0] sm:$0xff] %v582
    %637 = vst [vmem:[#allocation8 + $0xf8] sm:$0xff] %v584
    %638 = vst [vmem:[#allocation8 + $0x100] sm:$0xff] %v369
    %639 = vst [vmem:[#allocation8 + $0x108] sm:$0xff] %v371
    %640 = vst [vmem:[#allocation8 + $0x110] sm:$0xff] %v442
    %641 = vst [vmem:[#allocation8 + $0x118] sm:$0xff] %v444
    %642 = vst [vmem:[#allocation8 + $0x120] sm:$0xff] %v515
    %643 = vst [vmem:[#allocation8 + $0x128] sm:$0xff] %v517
    %644 = vst [vmem:[#allocation8 + $0x130] sm:$0xff] %v588
    %645 = vst [vmem:[#allocation8 + $0x138] sm:$0xff] %v590
    %646 = vst [vmem:[#allocation8 + $0x140] sm:$0xff] %v373
    %647 = vst [vmem:[#allocation8 + $0x148] sm:$0xff] %v375
    %648 = vst [vmem:[#allocation8 + $0x150] sm:$0xff] %v446
    %649 = vst [vmem:[#allocation8 + $0x158] sm:$0xff] %v448
    %650 = vst [vmem:[#allocation8 + $0x160] sm:$0xff] %v519
    %651 = vst [vmem:[#allocation8 + $0x168] sm:$0xff] %v521
    %652 = vst [vmem:[#allocation8 + $0x170] sm:$0xff] %v592
    %653 = vst [vmem:[#allocation8 + $0x178] sm:$0xff] %v594
    %654 = vst [vmem:[#allocation8 + $0x180] sm:$0xff] %v379
    %655 = vst [vmem:[#allocation8 + $0x188] sm:$0xff] %v381
    %656 = vst [vmem:[#allocation8 + $0x190] sm:$0xff] %v452
    %657 = vst [vmem:[#allocation8 + $0x198] sm:$0xff] %v454
    %658 = vst [vmem:[#allocation8 + $0x1a0] sm:$0xff] %v525
    %659 = vst [vmem:[#allocation8 + $0x1a8] sm:$0xff] %v527
    %660 = vst [vmem:[#allocation8 + $0x1b0] sm:$0xff] %v598
    %661 = vst [vmem:[#allocation8 + $0x1b8] sm:$0xff] %v600
    %662 = vst [vmem:[#allocation8 + $0x1c0] sm:$0xff] %v383
    %663 = vst [vmem:[#allocation8 + $0x1c8] sm:$0xff] %v385
    %664 = vst [vmem:[#allocation8 + $0x1d0] sm:$0xff] %v456
    %665 = vst [vmem:[#allocation8 + $0x1d8] sm:$0xff] %v458
    %666 = vst [vmem:[#allocation8 + $0x1e0] sm:$0xff] %v529
    %667 = vst [vmem:[#allocation8 + $0x1e8] sm:$0xff] %v531
    %668 = vst [vmem:[#allocation8 + $0x1f0] sm:$0xff] %v602
    %669 = vst [vmem:[#allocation8 + $0x1f8] sm:$0xff] %v604
    // Predicated region
    $region26: #{rnn_model_forward.5} parent=1 // pred_check
      _
    $region27: #{rnn_model_forward.5} parent=1 // pred_check_branch
      %671 = sbr.rel (0) target = $region29
    $region28: #{rnn_model_forward.5} parent=1 // pred_region
      %s673 = ssub.s32 8192, 8192
      %674 = vsyncadd [#allocation4], %s673
      %s675 = sshll.u32 [#allocation8], 4
      %s676 = int_to_ptr.vmem [resolvable:$true] %s675
      %681 = dma.vmem_to_hbm [thread:$0]  %s676, 8192, %s3, [#allocation4], 1024, 1024, 64
    $region29: #{rnn_model_forward.5} parent=1 // pred_fallthru
      _
    // Predicated region
    $region30: #{rnn_model_forward.5} parent=1 // pred_check
      _
    $region31: #{rnn_model_forward.5} parent=1 // pred_check_branch
      %683 = sbr.rel (0) target = $region33
    $region32: #{rnn_model_forward.5} parent=1 // pred_region
      %684 = dma.done [#allocation4], 8192
    $region33: #{rnn_model_forward.5} parent=1 // pred_fallthru
      _
    %685 = vsyncpa [#allocation3], 1
    %686 = vsyncpa [#allocation6], 1
    %687 = vsyncpa [#allocation4], 1

// kernel: rnn_model_forward.7
$region0: #{rnn_model_forward.7}
  #allocation0 [shape = 'u32[]', space=smem, size = 0x4, offset = 0x4, fixed_abs, tag = 'smem constant byte address 0x4 - core index']
  #allocation1 [shape = 'u32[144,128]{1,0:T(1,128)}', space=vmem, size = 0x12000, scoped, tag = 'internal scratch']
  %s0 = inlined_call_operand.hbm [shape: f32[64,256], index: 0, kind: input, shape index: {}]
  %s1 = inlined_call_operand.hbm [shape: bf16[256,1024], index: 1, kind: input, shape index: {}]
  %s2 = inlined_call_operand.hbm [shape: f32[1,1024], index: 2, kind: input, shape index: {}]
  %s3 = inlined_call_operand.hbm [shape: f32[64,1024], index: 3, kind: output, shape index: {}]
  %s4 = sld [smem:[#allocation0]]
  $region34: #{rnn_model_forward.7} parent=0
    _
  %s6 = ssub.s32 1, %s4
  %s7 = scalar_select 0, %s6, %s4
  $region1: #{rnn_model_forward.7} parent=0
    #allocation2 [shape = 'u8[65536]{0}', space=vmem, size = 0x10000, scoped, tag = 'input window, operand 0, single buffered']
    #allocation3 [shape = 's32[1]{0}', space=sflag, size = 0x4, scoped, tag = 'scoped memory for rnn_model_forward.7']
    #allocation4 [shape = 's32[1]{0}', space=sflag, size = 0x4, scoped, tag = 'scoped memory for rnn_model_forward.7']
    #allocation5 [shape = 'u8[524288]{0}', space=vmem, size = 0x80000, scoped, tag = 'input window, operand 1, single buffered']
    #allocation6 [shape = 's32[1]{0}', space=sflag, size = 0x4, scoped, tag = 'scoped memory for rnn_model_forward.7']
    #allocation7 [shape = 'u8[4096]{0}', space=vmem, size = 0x1000, scoped, tag = 'input window, operand 2, single buffered']
    #allocation8 [shape = 'u8[262144]{0}', space=vmem, size = 0x40000, scoped, tag = 'output window, operand 0, single buffered']
    %8 = vsyncpa [#allocation3], 0
    %9 = vsyncpa [#allocation6], 0
    %10 = vsyncpa [#allocation4], 0
    // Predicated region
    $region2: #{rnn_model_forward.7} parent=1 // pred_check
      _
    $region3: #{rnn_model_forward.7} parent=1 // pred_check_branch
      %12 = sbr.rel (0) target = $region5
    $region4: #{rnn_model_forward.7} parent=1 // pred_region
      %s14 = ssub.s32 2048, 2048
      %15 = vsyncadd [#allocation3], %s14
      %s16 = sshll.u32 [#allocation2], 4
      %s17 = int_to_ptr.vmem [resolvable:$true] %s16
      %22 = dma.hbm_to_vmem [thread:$0]  %s0, 2048, %s17, [#allocation3], 256, 256, 16
    $region5: #{rnn_model_forward.7} parent=1 // pred_fallthru
      _
    // Predicated region
    $region6: #{rnn_model_forward.7} parent=1 // pred_check
      _
    $region7: #{rnn_model_forward.7} parent=1 // pred_check_branch
      %24 = sbr.rel (0) target = $region9
    $region8: #{rnn_model_forward.7} parent=1 // pred_region
      %s26 = ssub.s32 16384, 16384
      %27 = vsyncadd [#allocation6], %s26
      %s28 = sshll.u32 [#allocation5], 4
      %s29 = int_to_ptr.vmem [resolvable:$true] %s28
      %34 = dma.hbm_to_vmem [thread:$0]  %s1, 16384, %s29, [#allocation6], 512, 512, 32
    $region9: #{rnn_model_forward.7} parent=1 // pred_fallthru
      _
    // Predicated region
    $region10: #{rnn_model_forward.7} parent=1 // pred_check
      _
    $region11: #{rnn_model_forward.7} parent=1 // pred_check_branch
      %36 = sbr.rel (0) target = $region13
    $region12: #{rnn_model_forward.7} parent=1 // pred_region
      %s38 = ssub.s32 128, 128
      %39 = vsyncadd [#allocation6], %s38
      %s41 = sshll.u32 [#allocation7], 4
      %s42 = int_to_ptr.vmem [resolvable:$true] %s41
      %44 = dma.hbm_to_vmem [thread:$0]  %s2, 128, %s42, [#allocation6]
    $region13: #{rnn_model_forward.7} parent=1 // pred_fallthru
      _
    // Predicated region
    $region14: #{rnn_model_forward.7} parent=1 // pred_check
      _
    $region15: #{rnn_model_forward.7} parent=1 // pred_check_branch
      %46 = sbr.rel (0) target = $region17
    $region16: #{rnn_model_forward.7} parent=1 // pred_region
      %47 = dma.done [#allocation3], 2048
    $region17: #{rnn_model_forward.7} parent=1 // pred_fallthru
      _
    // Predicated region
    $region18: #{rnn_model_forward.7} parent=1 // pred_check
      _
    $region19: #{rnn_model_forward.7} parent=1 // pred_check_branch
      %49 = sbr.rel (0) target = $region21
    $region20: #{rnn_model_forward.7} parent=1 // pred_region
      %50 = dma.done [#allocation6], 16384
    $region21: #{rnn_model_forward.7} parent=1 // pred_fallthru
      _
    // Predicated region
    $region22: #{rnn_model_forward.7} parent=1 // pred_check
      _
    $region23: #{rnn_model_forward.7} parent=1 // pred_check_branch
      %52 = sbr.rel (0) target = $region25
    $region24: #{rnn_model_forward.7} parent=1 // pred_region
      %53 = dma.done [#allocation6], 128
    $region25: #{rnn_model_forward.7} parent=1 // pred_fallthru
      _
    %v54 = vld [vmem:[#allocation2] sm:$0xff]
    %v55 = vld [vmem:[#allocation2 + $0x8] sm:$0xff]
    %v56 = vld [vmem:[#allocation2 + $0x10] sm:$0xff]
    %v57 = vld [vmem:[#allocation2 + $0x18] sm:$0xff]
    %v58 = vld [vmem:[#allocation2 + $0x20] sm:$0xff]
    %v59 = vld [vmem:[#allocation2 + $0x28] sm:$0xff]
    %v60 = vld [vmem:[#allocation2 + $0x30] sm:$0xff]
    %v61 = vld [vmem:[#allocation2 + $0x38] sm:$0xff]
    %v62 = vld [vmem:[#allocation2 + $0x40] sm:$0xff]
    %v63 = vld [vmem:[#allocation2 + $0x48] sm:$0xff]
    %v64 = vld [vmem:[#allocation2 + $0x50] sm:$0xff]
    %v65 = vld [vmem:[#allocation2 + $0x58] sm:$0xff]
    %v66 = vld [vmem:[#allocation2 + $0x60] sm:$0xff]
    %v67 = vld [vmem:[#allocation2 + $0x68] sm:$0xff]
    %v68 = vld [vmem:[#allocation2 + $0x70] sm:$0xff]
    %v69 = vld [vmem:[#allocation2 + $0x78] sm:$0xff]
    %v70 = vpack.c.bf16 %v56, %v54
    %v71 = vpack.c.bf16 %v57, %v55
    %v72 = vpack.c.bf16 %v60, %v58
    %v73 = vpack.c.bf16 %v61, %v59
    %v74 = vpack.c.bf16 %v64, %v62
    %v75 = vpack.c.bf16 %v65, %v63
    %v76 = vpack.c.bf16 %v68, %v66
    %v77 = vpack.c.bf16 %v69, %v67
    %v78 = vld [vmem:[#allocation5] sm:$0xff]
    %v79 = vld [vmem:[#allocation5 + $0x8] sm:$0xff]
    %v80 = vld [vmem:[#allocation5 + $0x10] sm:$0xff]
    %v81 = vld [vmem:[#allocation5 + $0x18] sm:$0xff]
    %v82 = vld [vmem:[#allocation5 + $0x20] sm:$0xff]
    %v83 = vld [vmem:[#allocation5 + $0x28] sm:$0xff]
    %v84 = vld [vmem:[#allocation5 + $0x30] sm:$0xff]
    %v85 = vld [vmem:[#allocation5 + $0x38] sm:$0xff]
    %v86 = vld [vmem:[#allocation5 + $0x40] sm:$0xff]
    %v87 = vld [vmem:[#allocation5 + $0x48] sm:$0xff]
    %v88 = vld [vmem:[#allocation5 + $0x50] sm:$0xff]
    %v89 = vld [vmem:[#allocation5 + $0x58] sm:$0xff]
    %v90 = vld [vmem:[#allocation5 + $0x60] sm:$0xff]
    %v91 = vld [vmem:[#allocation5 + $0x68] sm:$0xff]
    %v92 = vld [vmem:[#allocation5 + $0x70] sm:$0xff]
    %v93 = vld [vmem:[#allocation5 + $0x78] sm:$0xff]
    %v94 = vld [vmem:[#allocation5 + $0x80] sm:$0xff]
    %v95 = vld [vmem:[#allocation5 + $0x88] sm:$0xff]
    %v96 = vld [vmem:[#allocation5 + $0x90] sm:$0xff]
    %v97 = vld [vmem:[#allocation5 + $0x98] sm:$0xff]
    %v98 = vld [vmem:[#allocation5 + $0xa0] sm:$0xff]
    %v99 = vld [vmem:[#allocation5 + $0xa8] sm:$0xff]
    %v100 = vld [vmem:[#allocation5 + $0xb0] sm:$0xff]
    %v101 = vld [vmem:[#allocation5 + $0xb8] sm:$0xff]
    %v102 = vld [vmem:[#allocation5 + $0xc0] sm:$0xff]
    %v103 = vld [vmem:[#allocation5 + $0xc8] sm:$0xff]
    %v104 = vld [vmem:[#allocation5 + $0xd0] sm:$0xff]
    %v105 = vld [vmem:[#allocation5 + $0xd8] sm:$0xff]
    %v106 = vld [vmem:[#allocation5 + $0xe0] sm:$0xff]
    %v107 = vld [vmem:[#allocation5 + $0xe8] sm:$0xff]
    %v108 = vld [vmem:[#allocation5 + $0xf0] sm:$0xff]
    %v109 = vld [vmem:[#allocation5 + $0xf8] sm:$0xff]
    %v110 = vld [vmem:[#allocation5 + $0x100] sm:$0xff]
    %v111 = vld [vmem:[#allocation5 + $0x108] sm:$0xff]
    %v112 = vld [vmem:[#allocation5 + $0x110] sm:$0xff]
    %v113 = vld [vmem:[#allocation5 + $0x118] sm:$0xff]
    %v114 = vld [vmem:[#allocation5 + $0x120] sm:$0xff]
    %v115 = vld [vmem:[#allocation5 + $0x128] sm:$0xff]
    %v116 = vld [vmem:[#allocation5 + $0x130] sm:$0xff]
    %v117 = vld [vmem:[#allocation5 + $0x138] sm:$0xff]
    %v118 = vld [vmem:[#allocation5 + $0x140] sm:$0xff]
    %v119 = vld [vmem:[#allocation5 + $0x148] sm:$0xff]
    %v120 = vld [vmem:[#allocation5 + $0x150] sm:$0xff]
    %v121 = vld [vmem:[#allocation5 + $0x158] sm:$0xff]
    %v122 = vld [vmem:[#allocation5 + $0x160] sm:$0xff]
    %v123 = vld [vmem:[#allocation5 + $0x168] sm:$0xff]
    %v124 = vld [vmem:[#allocation5 + $0x170] sm:$0xff]
    %v125 = vld [vmem:[#allocation5 + $0x178] sm:$0xff]
    %v126 = vld [vmem:[#allocation5 + $0x180] sm:$0xff]
    %v127 = vld [vmem:[#allocation5 + $0x188] sm:$0xff]
    %v128 = vld [vmem:[#allocation5 + $0x190] sm:$0xff]
    %v129 = vld [vmem:[#allocation5 + $0x198] sm:$0xff]
    %v130 = vld [vmem:[#allocation5 + $0x1a0] sm:$0xff]
    %v131 = vld [vmem:[#allocation5 + $0x1a8] sm:$0xff]
    %v132 = vld [vmem:[#allocation5 + $0x1b0] sm:$0xff]
    %v133 = vld [vmem:[#allocation5 + $0x1b8] sm:$0xff]
    %v134 = vld [vmem:[#allocation5 + $0x1c0] sm:$0xff]
    %v135 = vld [vmem:[#allocation5 + $0x1c8] sm:$0xff]
    %v136 = vld [vmem:[#allocation5 + $0x1d0] sm:$0xff]
    %v137 = vld [vmem:[#allocation5 + $0x1d8] sm:$0xff]
    %v138 = vld [vmem:[#allocation5 + $0x1e0] sm:$0xff]
    %v139 = vld [vmem:[#allocation5 + $0x1e8] sm:$0xff]
    %v140 = vld [vmem:[#allocation5 + $0x1f0] sm:$0xff]
    %v141 = vld [vmem:[#allocation5 + $0x1f8] sm:$0xff]
    %v142 = vld [vmem:[#allocation5 + $0x200] sm:$0xff]
    %v143 = vld [vmem:[#allocation5 + $0x208] sm:$0xff]
    %v144 = vld [vmem:[#allocation5 + $0x210] sm:$0xff]
    %v145 = vld [vmem:[#allocation5 + $0x218] sm:$0xff]
    %v146 = vld [vmem:[#allocation5 + $0x220] sm:$0xff]
    %v147 = vld [vmem:[#allocation5 + $0x228] sm:$0xff]
    %v148 = vld [vmem:[#allocation5 + $0x230] sm:$0xff]
    %v149 = vld [vmem:[#allocation5 + $0x238] sm:$0xff]
    %v150 = vld [vmem:[#allocation5 + $0x240] sm:$0xff]
    %v151 = vld [vmem:[#allocation5 + $0x248] sm:$0xff]
    %v152 = vld [vmem:[#allocation5 + $0x250] sm:$0xff]
    %v153 = vld [vmem:[#allocation5 + $0x258] sm:$0xff]
    %v154 = vld [vmem:[#allocation5 + $0x260] sm:$0xff]
    %v155 = vld [vmem:[#allocation5 + $0x268] sm:$0xff]
    %v156 = vld [vmem:[#allocation5 + $0x270] sm:$0xff]
    %v157 = vld [vmem:[#allocation5 + $0x278] sm:$0xff]
    %v158 = vld [vmem:[#allocation5 + $0x280] sm:$0xff]
    %v159 = vld [vmem:[#allocation5 + $0x288] sm:$0xff]
    %v160 = vld [vmem:[#allocation5 + $0x290] sm:$0xff]
    %v161 = vld [vmem:[#allocation5 + $0x298] sm:$0xff]
    %v162 = vld [vmem:[#allocation5 + $0x2a0] sm:$0xff]
    %v163 = vld [vmem:[#allocation5 + $0x2a8] sm:$0xff]
    %v164 = vld [vmem:[#allocation5 + $0x2b0] sm:$0xff]
    %v165 = vld [vmem:[#allocation5 + $0x2b8] sm:$0xff]
    %v166 = vld [vmem:[#allocation5 + $0x2c0] sm:$0xff]
    %v167 = vld [vmem:[#allocation5 + $0x2c8] sm:$0xff]
    %v168 = vld [vmem:[#allocation5 + $0x2d0] sm:$0xff]
    %v169 = vld [vmem:[#allocation5 + $0x2d8] sm:$0xff]
    %v170 = vld [vmem:[#allocation5 + $0x2e0] sm:$0xff]
    %v171 = vld [vmem:[#allocation5 + $0x2e8] sm:$0xff]
    %v172 = vld [vmem:[#allocation5 + $0x2f0] sm:$0xff]
    %v173 = vld [vmem:[#allocation5 + $0x2f8] sm:$0xff]
    %v174 = vld [vmem:[#allocation5 + $0x300] sm:$0xff]
    %v175 = vld [vmem:[#allocation5 + $0x308] sm:$0xff]
    %v176 = vld [vmem:[#allocation5 + $0x310] sm:$0xff]
    %v177 = vld [vmem:[#allocation5 + $0x318] sm:$0xff]
    %v178 = vld [vmem:[#allocation5 + $0x320] sm:$0xff]
    %v179 = vld [vmem:[#allocation5 + $0x328] sm:$0xff]
    %v180 = vld [vmem:[#allocation5 + $0x330] sm:$0xff]
    %v181 = vld [vmem:[#allocation5 + $0x338] sm:$0xff]
    %v182 = vld [vmem:[#allocation5 + $0x340] sm:$0xff]
    %v183 = vld [vmem:[#allocation5 + $0x348] sm:$0xff]
    %v184 = vld [vmem:[#allocation5 + $0x350] sm:$0xff]
    %v185 = vld [vmem:[#allocation5 + $0x358] sm:$0xff]
    %v186 = vld [vmem:[#allocation5 + $0x360] sm:$0xff]
    %v187 = vld [vmem:[#allocation5 + $0x368] sm:$0xff]
    %v188 = vld [vmem:[#allocation5 + $0x370] sm:$0xff]
    %v189 = vld [vmem:[#allocation5 + $0x378] sm:$0xff]
    %v190 = vld [vmem:[#allocation5 + $0x380] sm:$0xff]
    %v191 = vld [vmem:[#allocation5 + $0x388] sm:$0xff]
    %v192 = vld [vmem:[#allocation5 + $0x390] sm:$0xff]
    %v193 = vld [vmem:[#allocation5 + $0x398] sm:$0xff]
    %v194 = vld [vmem:[#allocation5 + $0x3a0] sm:$0xff]
    %v195 = vld [vmem:[#allocation5 + $0x3a8] sm:$0xff]
    %v196 = vld [vmem:[#allocation5 + $0x3b0] sm:$0xff]
    %v197 = vld [vmem:[#allocation5 + $0x3b8] sm:$0xff]
    %v198 = vld [vmem:[#allocation5 + $0x3c0] sm:$0xff]
    %v199 = vld [vmem:[#allocation5 + $0x3c8] sm:$0xff]
    %v200 = vld [vmem:[#allocation5 + $0x3d0] sm:$0xff]
    %v201 = vld [vmem:[#allocation5 + $0x3d8] sm:$0xff]
    %v202 = vld [vmem:[#allocation5 + $0x3e0] sm:$0xff]
    %v203 = vld [vmem:[#allocation5 + $0x3e8] sm:$0xff]
    %v204 = vld [vmem:[#allocation5 + $0x3f0] sm:$0xff]
    %v205 = vld [vmem:[#allocation5 + $0x3f8] sm:$0xff]
    %v206 = vld [vmem:[#allocation7] sm:$0xff]
    %v208 = vlaneseq
    %v209 = vshrl.u32 %v208, 7
    %v210 = vsub.s32 0, %v209
    %v211 = vrot.slane %v206, %v210
    %v212 = vlaneseq
    %v213 = vshrl.u32 %v212, 7
    %v214 = vsub.s32 1, %v213
    %v215 = vrot.slane %v206, %v214
    %v216 = vlaneseq
    %v217 = vshrl.u32 %v216, 7
    %v218 = vsub.s32 2, %v217
    %v219 = vrot.slane %v206, %v218
    %v220 = vlaneseq
    %v221 = vshrl.u32 %v220, 7
    %v222 = vsub.s32 3, %v221
    %v223 = vrot.slane %v206, %v222
    %v224 = vlaneseq
    %v225 = vshrl.u32 %v224, 7
    %v226 = vsub.s32 4, %v225
    %v227 = vrot.slane %v206, %v226
    %v228 = vlaneseq
    %v229 = vshrl.u32 %v228, 7
    %v230 = vsub.s32 5, %v229
    %v231 = vrot.slane %v206, %v230
    %v232 = vlaneseq
    %v233 = vshrl.u32 %v232, 7
    %v234 = vsub.s32 6, %v233
    %v235 = vrot.slane %v206, %v234
    %v236 = vlaneseq
    %v237 = vshrl.u32 %v236, 7
    %v238 = vsub.s32 7, %v237
    %v239 = vrot.slane %v206, %v238
    %v376 = vunpack.c.l.b16 %v78
    %v377 = vunpack.c.h.b16 %v78
    %v378 = vunpack.c.l.b16 %v79
    %v379 = vunpack.c.h.b16 %v79
    %v380 = vunpack.c.l.b16 %v80
    %v381 = vunpack.c.h.b16 %v80
    %v382 = vunpack.c.l.b16 %v81
    %v383 = vunpack.c.h.b16 %v81
    %v384 = vunpack.c.l.b16 %v82
    %v385 = vunpack.c.h.b16 %v82
    %v386 = vunpack.c.l.b16 %v83
    %v387 = vunpack.c.h.b16 %v83
    %v388 = vunpack.c.l.b16 %v84
    %v389 = vunpack.c.h.b16 %v84
    %v390 = vunpack.c.l.b16 %v85
    %v391 = vunpack.c.h.b16 %v85
    %v392 = vunpack.c.l.b16 %v86
    %v393 = vunpack.c.h.b16 %v86
    %v394 = vunpack.c.l.b16 %v87
    %v395 = vunpack.c.h.b16 %v87
    %v396 = vunpack.c.l.b16 %v88
    %v397 = vunpack.c.h.b16 %v88
    %v398 = vunpack.c.l.b16 %v89
    %v399 = vunpack.c.h.b16 %v89
    %v400 = vunpack.c.l.b16 %v90
    %v401 = vunpack.c.h.b16 %v90
    %v402 = vunpack.c.l.b16 %v91
    %v403 = vunpack.c.h.b16 %v91
    %v404 = vunpack.c.l.b16 %v92
    %v405 = vunpack.c.h.b16 %v92
    %v406 = vunpack.c.l.b16 %v93
    %v407 = vunpack.c.h.b16 %v93
    %v408 = vunpack.c.l.b16 %v94
    %v409 = vunpack.c.h.b16 %v94
    %v410 = vunpack.c.l.b16 %v95
    %v411 = vunpack.c.h.b16 %v95
    %v412 = vunpack.c.l.b16 %v96
    %v413 = vunpack.c.h.b16 %v96
    %v414 = vunpack.c.l.b16 %v97
    %v415 = vunpack.c.h.b16 %v97
    %v416 = vunpack.c.l.b16 %v98
    %v417 = vunpack.c.h.b16 %v98
    %v418 = vunpack.c.l.b16 %v99
    %v419 = vunpack.c.h.b16 %v99
    %v420 = vunpack.c.l.b16 %v100
    %v421 = vunpack.c.h.b16 %v100
    %v422 = vunpack.c.l.b16 %v101
    %v423 = vunpack.c.h.b16 %v101
    %v424 = vunpack.c.l.b16 %v102
    %v425 = vunpack.c.h.b16 %v102
    %v426 = vunpack.c.l.b16 %v103
    %v427 = vunpack.c.h.b16 %v103
    %v428 = vunpack.c.l.b16 %v104
    %v429 = vunpack.c.h.b16 %v104
    %v430 = vunpack.c.l.b16 %v105
    %v431 = vunpack.c.h.b16 %v105
    %v432 = vunpack.c.l.b16 %v106
    %v433 = vunpack.c.h.b16 %v106
    %v434 = vunpack.c.l.b16 %v107
    %v435 = vunpack.c.h.b16 %v107
    %v436 = vunpack.c.l.b16 %v108
    %v437 = vunpack.c.h.b16 %v108
    %v438 = vunpack.c.l.b16 %v109
    %v439 = vunpack.c.h.b16 %v109
    %v440 = vunpack.c.l.b16 %v110
    %v441 = vunpack.c.h.b16 %v110
    %v442 = vunpack.c.l.b16 %v111
    %v443 = vunpack.c.h.b16 %v111
    %v444 = vunpack.c.l.b16 %v112
    %v445 = vunpack.c.h.b16 %v112
    %v446 = vunpack.c.l.b16 %v113
    %v447 = vunpack.c.h.b16 %v113
    %v448 = vunpack.c.l.b16 %v114
    %v449 = vunpack.c.h.b16 %v114
    %v450 = vunpack.c.l.b16 %v115
    %v451 = vunpack.c.h.b16 %v115
    %v452 = vunpack.c.l.b16 %v116
    %v453 = vunpack.c.h.b16 %v116
    %v454 = vunpack.c.l.b16 %v117
    %v455 = vunpack.c.h.b16 %v117
    %v456 = vunpack.c.l.b16 %v118
    %v457 = vunpack.c.h.b16 %v118
    %v458 = vunpack.c.l.b16 %v119
    %v459 = vunpack.c.h.b16 %v119
    %v460 = vunpack.c.l.b16 %v120
    %v461 = vunpack.c.h.b16 %v120
    %v462 = vunpack.c.l.b16 %v121
    %v463 = vunpack.c.h.b16 %v121
    %v464 = vunpack.c.l.b16 %v122
    %v465 = vunpack.c.h.b16 %v122
    %v466 = vunpack.c.l.b16 %v123
    %v467 = vunpack.c.h.b16 %v123
    %v468 = vunpack.c.l.b16 %v124
    %v469 = vunpack.c.h.b16 %v124
    %v470 = vunpack.c.l.b16 %v125
    %v471 = vunpack.c.h.b16 %v125
    %v472 = vunpack.c.l.b16 %v126
    %v473 = vunpack.c.h.b16 %v126
    %v474 = vunpack.c.l.b16 %v127
    %v475 = vunpack.c.h.b16 %v127
    %v476 = vunpack.c.l.b16 %v128
    %v477 = vunpack.c.h.b16 %v128
    %v478 = vunpack.c.l.b16 %v129
    %v479 = vunpack.c.h.b16 %v129
    %v480 = vunpack.c.l.b16 %v130
    %v481 = vunpack.c.h.b16 %v130
    %v482 = vunpack.c.l.b16 %v131
    %v483 = vunpack.c.h.b16 %v131
    %v484 = vunpack.c.l.b16 %v132
    %v485 = vunpack.c.h.b16 %v132
    %v486 = vunpack.c.l.b16 %v133
    %v487 = vunpack.c.h.b16 %v133
    %v488 = vunpack.c.l.b16 %v134
    %v489 = vunpack.c.h.b16 %v134
    %v490 = vunpack.c.l.b16 %v135
    %v491 = vunpack.c.h.b16 %v135
    %v492 = vunpack.c.l.b16 %v136
    %v493 = vunpack.c.h.b16 %v136
    %v494 = vunpack.c.l.b16 %v137
    %v495 = vunpack.c.h.b16 %v137
    %v496 = vunpack.c.l.b16 %v138
    %v497 = vunpack.c.h.b16 %v138
    %v498 = vunpack.c.l.b16 %v139
    %v499 = vunpack.c.h.b16 %v139
    %v500 = vunpack.c.l.b16 %v140
    %v501 = vunpack.c.h.b16 %v140
    %v502 = vunpack.c.l.b16 %v141
    %v503 = vunpack.c.h.b16 %v141
    %v504 = vunpack.c.l.b16 %v142
    %v505 = vunpack.c.h.b16 %v142
    %v506 = vunpack.c.l.b16 %v143
    %v507 = vunpack.c.h.b16 %v143
    %v508 = vunpack.c.l.b16 %v144
    %v509 = vunpack.c.h.b16 %v144
    %v510 = vunpack.c.l.b16 %v145
    %v511 = vunpack.c.h.b16 %v145
    %v512 = vunpack.c.l.b16 %v146
    %v513 = vunpack.c.h.b16 %v146
    %v514 = vunpack.c.l.b16 %v147
    %v515 = vunpack.c.h.b16 %v147
    %v516 = vunpack.c.l.b16 %v148
    %v517 = vunpack.c.h.b16 %v148
    %v518 = vunpack.c.l.b16 %v149
    %v519 = vunpack.c.h.b16 %v149
    %v520 = vunpack.c.l.b16 %v150
    %v521 = vunpack.c.h.b16 %v150
    %v522 = vunpack.c.l.b16 %v151
    %v523 = vunpack.c.h.b16 %v151
    %v524 = vunpack.c.l.b16 %v152
    %v525 = vunpack.c.h.b16 %v152
    %v526 = vunpack.c.l.b16 %v153
    %v527 = vunpack.c.h.b16 %v153
    %v528 = vunpack.c.l.b16 %v154
    %v529 = vunpack.c.h.b16 %v154
    %v530 = vunpack.c.l.b16 %v155
    %v531 = vunpack.c.h.b16 %v155
    %v532 = vunpack.c.l.b16 %v156
    %v533 = vunpack.c.h.b16 %v156
    %v534 = vunpack.c.l.b16 %v157
    %v535 = vunpack.c.h.b16 %v157
    %v536 = vunpack.c.l.b16 %v158
    %v537 = vunpack.c.h.b16 %v158
    %v538 = vunpack.c.l.b16 %v159
    %v539 = vunpack.c.h.b16 %v159
    %v540 = vunpack.c.l.b16 %v160
    %v541 = vunpack.c.h.b16 %v160
    %v542 = vunpack.c.l.b16 %v161
    %v543 = vunpack.c.h.b16 %v161
    %v544 = vunpack.c.l.b16 %v162
    %v545 = vunpack.c.h.b16 %v162
    %v546 = vunpack.c.l.b16 %v163
    %v547 = vunpack.c.h.b16 %v163
    %v548 = vunpack.c.l.b16 %v164
    %v549 = vunpack.c.h.b16 %v164
    %v550 = vunpack.c.l.b16 %v165
    %v551 = vunpack.c.h.b16 %v165
    %v552 = vunpack.c.l.b16 %v166
    %v553 = vunpack.c.h.b16 %v166
    %v554 = vunpack.c.l.b16 %v167
    %v555 = vunpack.c.h.b16 %v167
    %v556 = vunpack.c.l.b16 %v168
    %v557 = vunpack.c.h.b16 %v168
    %v558 = vunpack.c.l.b16 %v169
    %v559 = vunpack.c.h.b16 %v169
    %v560 = vunpack.c.l.b16 %v170
    %v561 = vunpack.c.h.b16 %v170
    %v562 = vunpack.c.l.b16 %v171
    %v563 = vunpack.c.h.b16 %v171
    %v564 = vunpack.c.l.b16 %v172
    %v565 = vunpack.c.h.b16 %v172
    %v566 = vunpack.c.l.b16 %v173
    %v567 = vunpack.c.h.b16 %v173
    %v568 = vunpack.c.l.b16 %v174
    %v569 = vunpack.c.h.b16 %v174
    %v570 = vunpack.c.l.b16 %v175
    %v571 = vunpack.c.h.b16 %v175
    %v572 = vunpack.c.l.b16 %v176
    %v573 = vunpack.c.h.b16 %v176
    %v574 = vunpack.c.l.b16 %v177
    %v575 = vunpack.c.h.b16 %v177
    %v576 = vunpack.c.l.b16 %v178
    %v577 = vunpack.c.h.b16 %v178
    %v578 = vunpack.c.l.b16 %v179
    %v579 = vunpack.c.h.b16 %v179
    %v580 = vunpack.c.l.b16 %v180
    %v581 = vunpack.c.h.b16 %v180
    %v582 = vunpack.c.l.b16 %v181
    %v583 = vunpack.c.h.b16 %v181
    %v584 = vunpack.c.l.b16 %v182
    %v585 = vunpack.c.h.b16 %v182
    %v586 = vunpack.c.l.b16 %v183
    %v587 = vunpack.c.h.b16 %v183
    %v588 = vunpack.c.l.b16 %v184
    %v589 = vunpack.c.h.b16 %v184
    %v590 = vunpack.c.l.b16 %v185
    %v591 = vunpack.c.h.b16 %v185
    %v592 = vunpack.c.l.b16 %v186
    %v593 = vunpack.c.h.b16 %v186
    %v594 = vunpack.c.l.b16 %v187
    %v595 = vunpack.c.h.b16 %v187
    %v596 = vunpack.c.l.b16 %v188
    %v597 = vunpack.c.h.b16 %v188
    %v598 = vunpack.c.l.b16 %v189
    %v599 = vunpack.c.h.b16 %v189
    %v600 = vunpack.c.l.b16 %v190
    %v601 = vunpack.c.h.b16 %v190
    %v602 = vunpack.c.l.b16 %v191
    %v603 = vunpack.c.h.b16 %v191
    %v604 = vunpack.c.l.b16 %v192
    %v605 = vunpack.c.h.b16 %v192
    %v606 = vunpack.c.l.b16 %v193
    %v607 = vunpack.c.h.b16 %v193
    %v608 = vunpack.c.l.b16 %v194
    %v609 = vunpack.c.h.b16 %v194
    %v610 = vunpack.c.l.b16 %v195
    %v611 = vunpack.c.h.b16 %v195
    %v612 = vunpack.c.l.b16 %v196
    %v613 = vunpack.c.h.b16 %v196
    %v614 = vunpack.c.l.b16 %v197
    %v615 = vunpack.c.h.b16 %v197
    %v616 = vunpack.c.l.b16 %v198
    %v617 = vunpack.c.h.b16 %v198
    %v618 = vunpack.c.l.b16 %v199
    %v619 = vunpack.c.h.b16 %v199
    %v620 = vunpack.c.l.b16 %v200
    %v621 = vunpack.c.h.b16 %v200
    %v622 = vunpack.c.l.b16 %v201
    %v623 = vunpack.c.h.b16 %v201
    %v624 = vunpack.c.l.b16 %v202
    %v625 = vunpack.c.h.b16 %v202
    %v626 = vunpack.c.l.b16 %v203
    %v627 = vunpack.c.h.b16 %v203
    %v628 = vunpack.c.l.b16 %v204
    %v629 = vunpack.c.h.b16 %v204
    %v630 = vunpack.c.l.b16 %v205
    %v631 = vunpack.c.h.b16 %v205
    %v632 = vpack.c.b16 %v384, %v376
    %v633 = vpack.c.b16 %v385, %v377
    %v634 = vpack.c.b16 %v386, %v378
    %v635 = vpack.c.b16 %v387, %v379
    %v636 = vpack.c.b16 %v388, %v380
    %v637 = vpack.c.b16 %v389, %v381
    %v638 = vpack.c.b16 %v390, %v382
    %v639 = vpack.c.b16 %v391, %v383
    %v640 = vpack.c.b16 %v400, %v392
    %v641 = vpack.c.b16 %v401, %v393
    %v642 = vpack.c.b16 %v402, %v394
    %v643 = vpack.c.b16 %v403, %v395
    %v644 = vpack.c.b16 %v404, %v396
    %v645 = vpack.c.b16 %v405, %v397
    %v646 = vpack.c.b16 %v406, %v398
    %v647 = vpack.c.b16 %v407, %v399
    %v648 = vpack.c.b16 %v416, %v408
    %v649 = vpack.c.b16 %v417, %v409
    %v650 = vpack.c.b16 %v418, %v410
    %v651 = vpack.c.b16 %v419, %v411
    %v652 = vpack.c.b16 %v420, %v412
    %v653 = vpack.c.b16 %v421, %v413
    %v654 = vpack.c.b16 %v422, %v414
    %v655 = vpack.c.b16 %v423, %v415
    %v656 = vpack.c.b16 %v432, %v424
    %v657 = vpack.c.b16 %v433, %v425
    %v658 = vpack.c.b16 %v434, %v426
    %v659 = vpack.c.b16 %v435, %v427
    %v660 = vpack.c.b16 %v436, %v428
    %v661 = vpack.c.b16 %v437, %v429
    %v662 = vpack.c.b16 %v438, %v430
    %v663 = vpack.c.b16 %v439, %v431
    %v664 = vpack.c.b16 %v448, %v440
    %v665 = vpack.c.b16 %v449, %v441
    %v666 = vpack.c.b16 %v450, %v442
    %v667 = vpack.c.b16 %v451, %v443
    %v668 = vpack.c.b16 %v452, %v444
    %v669 = vpack.c.b16 %v453, %v445
    %v670 = vpack.c.b16 %v454, %v446
    %v671 = vpack.c.b16 %v455, %v447
    %v672 = vpack.c.b16 %v464, %v456
    %v673 = vpack.c.b16 %v465, %v457
    %v674 = vpack.c.b16 %v466, %v458
    %v675 = vpack.c.b16 %v467, %v459
    %v676 = vpack.c.b16 %v468, %v460
    %v677 = vpack.c.b16 %v469, %v461
    %v678 = vpack.c.b16 %v470, %v462
    %v679 = vpack.c.b16 %v471, %v463
    %v680 = vpack.c.b16 %v480, %v472
    %v681 = vpack.c.b16 %v481, %v473
    %v682 = vpack.c.b16 %v482, %v474
    %v683 = vpack.c.b16 %v483, %v475
    %v684 = vpack.c.b16 %v484, %v476
    %v685 = vpack.c.b16 %v485, %v477
    %v686 = vpack.c.b16 %v486, %v478
    %v687 = vpack.c.b16 %v487, %v479
    %v688 = vpack.c.b16 %v496, %v488
    %v689 = vpack.c.b16 %v497, %v489
    %v690 = vpack.c.b16 %v498, %v490
    %v691 = vpack.c.b16 %v499, %v491
    %v692 = vpack.c.b16 %v500, %v492
    %v693 = vpack.c.b16 %v501, %v493
    %v694 = vpack.c.b16 %v502, %v494
    %v695 = vpack.c.b16 %v503, %v495
    %v696 = vpack.c.b16 %v512, %v504
    %v697 = vpack.c.b16 %v513, %v505
    %v698 = vpack.c.b16 %v514, %v506
    %v699 = vpack.c.b16 %v515, %v507
    %v700 = vpack.c.b16 %v516, %v508
    %v701 = vpack.c.b16 %v517, %v509
    %v702 = vpack.c.b16 %v518, %v510
    %v703 = vpack.c.b16 %v519, %v511
    %v704 = vpack.c.b16 %v528, %v520
    %v705 = vpack.c.b16 %v529, %v521
    %v706 = vpack.c.b16 %v530, %v522
    %v707 = vpack.c.b16 %v531, %v523
    %v708 = vpack.c.b16 %v532, %v524
    %v709 = vpack.c.b16 %v533, %v525
    %v710 = vpack.c.b16 %v534, %v526
    %v711 = vpack.c.b16 %v535, %v527
    %v712 = vpack.c.b16 %v544, %v536
    %v713 = vpack.c.b16 %v545, %v537
    %v714 = vpack.c.b16 %v546, %v538
    %v715 = vpack.c.b16 %v547, %v539
    %v716 = vpack.c.b16 %v548, %v540
    %v717 = vpack.c.b16 %v549, %v541
    %v718 = vpack.c.b16 %v550, %v542
    %v719 = vpack.c.b16 %v551, %v543
    %v720 = vpack.c.b16 %v560, %v552
    %v721 = vpack.c.b16 %v561, %v553
    %v722 = vpack.c.b16 %v562, %v554
    %v723 = vpack.c.b16 %v563, %v555
    %v724 = vpack.c.b16 %v564, %v556
    %v725 = vpack.c.b16 %v565, %v557
    %v726 = vpack.c.b16 %v566, %v558
    %v727 = vpack.c.b16 %v567, %v559
    %v728 = vpack.c.b16 %v576, %v568
    %v729 = vpack.c.b16 %v577, %v569
    %v730 = vpack.c.b16 %v578, %v570
    %v731 = vpack.c.b16 %v579, %v571
    %v732 = vpack.c.b16 %v580, %v572
    %v733 = vpack.c.b16 %v581, %v573
    %v734 = vpack.c.b16 %v582, %v574
    %v735 = vpack.c.b16 %v583, %v575
    %v736 = vpack.c.b16 %v592, %v584
    %v737 = vpack.c.b16 %v593, %v585
    %v738 = vpack.c.b16 %v594, %v586
    %v739 = vpack.c.b16 %v595, %v587
    %v740 = vpack.c.b16 %v596, %v588
    %v741 = vpack.c.b16 %v597, %v589
    %v742 = vpack.c.b16 %v598, %v590
    %v743 = vpack.c.b16 %v599, %v591
    %v744 = vpack.c.b16 %v608, %v600
    %v745 = vpack.c.b16 %v609, %v601
    %v746 = vpack.c.b16 %v610, %v602
    %v747 = vpack.c.b16 %v611, %v603
    %v748 = vpack.c.b16 %v612, %v604
    %v749 = vpack.c.b16 %v613, %v605
    %v750 = vpack.c.b16 %v614, %v606
    %v751 = vpack.c.b16 %v615, %v607
    %v752 = vpack.c.b16 %v624, %v616
    %v753 = vpack.c.b16 %v625, %v617
    %v754 = vpack.c.b16 %v626, %v618
    %v755 = vpack.c.b16 %v627, %v619
    %v756 = vpack.c.b16 %v628, %v620
    %v757 = vpack.c.b16 %v629, %v621
    %v758 = vpack.c.b16 %v630, %v622
    %v759 = vpack.c.b16 %v631, %v623
    %888 = vmatprep.subr.bf16.mxu0 %v633
    %889 = vmatpush1.bf16.msra.mxu0 %v632
    %890 = vmatprep.subr.bf16.mxu0 %v641
    %891 = vmatpush1.bf16.msra.mxu0 %v640
    %892 = vmatprep.subr.bf16.mxu0 %v649
    %893 = vmatpush1.bf16.msra.mxu0 %v648
    %894 = vmatprep.subr.bf16.mxu0 %v657
    %895 = vmatpush1.bf16.msra.mxu0 %v656
    %896 = vmatprep.subr.bf16.mxu0 %v665
    %897 = vmatpush1.bf16.msra.mxu0 %v664
    %898 = vmatprep.subr.bf16.mxu0 %v673
    %899 = vmatpush1.bf16.msra.mxu0 %v672
    %900 = vmatprep.subr.bf16.mxu0 %v681
    %901 = vmatpush1.bf16.msra.mxu0 %v680
    %902 = vmatprep.subr.bf16.mxu0 %v689
    %903 = vmatpush1.bf16.msra.mxu0 %v688
    %904 = vmatprep.subr.bf16.mxu0 %v697
    %905 = vmatpush1.bf16.msra.mxu0 %v696
    %906 = vmatprep.subr.bf16.mxu0 %v705
    %907 = vmatpush1.bf16.msra.mxu0 %v704
    %908 = vmatprep.subr.bf16.mxu0 %v713
    %909 = vmatpush1.bf16.msra.mxu0 %v712
    %910 = vmatprep.subr.bf16.mxu0 %v721
    %911 = vmatpush1.bf16.msra.mxu0 %v720
    %912 = vmatprep.subr.bf16.mxu0 %v729
    %913 = vmatpush1.bf16.msra.mxu0 %v728
    %914 = vmatprep.subr.bf16.mxu0 %v737
    %915 = vmatpush1.bf16.msra.mxu0 %v736
    %916 = vmatprep.subr.bf16.mxu0 %v745
    %917 = vmatpush1.bf16.msra.mxu0 %v744
    %918 = vmatprep.subr.bf16.mxu0 %v753
    %919 = vmatpush1.bf16.msra.mxu0 %v752
    %920 = vmatprep.mubr.bf16.mxu0 %v71
    %921 = vmatmul.mubr.bf16.gmra.mrb[0].mxu0 %v70
    %v922 = vpop.f32.mrb[0].mxu0
    %v923 = vadd.f32 %v211, %v922
    %v924 = vpop.f32.mrb[0].mxu0
    %v925 = vadd.f32 %v215, %v924
    %v926 = vpop.f32.mrb[0].mxu0
    %v927 = vadd.f32 %v211, %v926
    %v928 = vpop.f32.mrb[0].mxu0
    %v929 = vadd.f32 %v215, %v928
    %930 = vmatprep.mubr.bf16.mxu0 %v73
    %931 = vmatmul.mubr.bf16.gmra.mrb[0].mxu0 %v72
    %v932 = vpop.f32.mrb[0].mxu0
    %v933 = vadd.f32 %v211, %v932
    %v934 = vpop.f32.mrb[0].mxu0
    %v935 = vadd.f32 %v215, %v934
    %v936 = vpop.f32.mrb[0].mxu0
    %v937 = vadd.f32 %v211, %v936
    %v938 = vpop.f32.mrb[0].mxu0
    %v939 = vadd.f32 %v215, %v938
    %940 = vmatprep.mubr.bf16.mxu0 %v75
    %941 = vmatmul.mubr.bf16.gmra.mrb[0].mxu0 %v74
    %v942 = vpop.f32.mrb[0].mxu0
    %v943 = vadd.f32 %v211, %v942
    %v944 = vpop.f32.mrb[0].mxu0
    %v945 = vadd.f32 %v215, %v944
    %v946 = vpop.f32.mrb[0].mxu0
    %v947 = vadd.f32 %v211, %v946
    %v948 = vpop.f32.mrb[0].mxu0
    %v949 = vadd.f32 %v215, %v948
    %950 = vmatprep.mubr.bf16.mxu0 %v77
    %951 = vmatmul.mubr.bf16.gmra.mrb[0].mxu0 %v76
    %v952 = vpop.f32.mrb[0].mxu0
    %v953 = vadd.f32 %v211, %v952
    %v954 = vpop.f32.mrb[0].mxu0
    %v955 = vadd.f32 %v215, %v954
    %v956 = vpop.f32.mrb[0].mxu0
    %v957 = vadd.f32 %v211, %v956
    %v958 = vpop.f32.mrb[0].mxu0
    %v959 = vadd.f32 %v215, %v958
    %960 = vdwg.mxu0
    %961 = vmatprep.subr.bf16.mxu0 %v635
    %962 = vmatpush1.bf16.msra.mxu0 %v634
    %963 = vmatprep.subr.bf16.mxu0 %v643
    %964 = vmatpush1.bf16.msra.mxu0 %v642
    %965 = vmatprep.subr.bf16.mxu0 %v651
    %966 = vmatpush1.bf16.msra.mxu0 %v650
    %967 = vmatprep.subr.bf16.mxu0 %v659
    %968 = vmatpush1.bf16.msra.mxu0 %v658
    %969 = vmatprep.subr.bf16.mxu0 %v667
    %970 = vmatpush1.bf16.msra.mxu0 %v666
    %971 = vmatprep.subr.bf16.mxu0 %v675
    %972 = vmatpush1.bf16.msra.mxu0 %v674
    %973 = vmatprep.subr.bf16.mxu0 %v683
    %974 = vmatpush1.bf16.msra.mxu0 %v682
    %975 = vmatprep.subr.bf16.mxu0 %v691
    %976 = vmatpush1.bf16.msra.mxu0 %v690
    %977 = vmatprep.subr.bf16.mxu0 %v699
    %978 = vmatpush1.bf16.msra.mxu0 %v698
    %979 = vmatprep.subr.bf16.mxu0 %v707
    %980 = vmatpush1.bf16.msra.mxu0 %v706
    %981 = vmatprep.subr.bf16.mxu0 %v715
    %982 = vmatpush1.bf16.msra.mxu0 %v714
    %983 = vmatprep.subr.bf16.mxu0 %v723
    %984 = vmatpush1.bf16.msra.mxu0 %v722
    %985 = vmatprep.subr.bf16.mxu0 %v731
    %986 = vmatpush1.bf16.msra.mxu0 %v730
    %987 = vmatprep.subr.bf16.mxu0 %v739
    %988 = vmatpush1.bf16.msra.mxu0 %v738
    %989 = vmatprep.subr.bf16.mxu0 %v747
    %990 = vmatpush1.bf16.msra.mxu0 %v746
    %991 = vmatprep.subr.bf16.mxu0 %v755
    %992 = vmatpush1.bf16.msra.mxu0 %v754
    %993 = vmatprep.mubr.bf16.mxu0 %v71
    %994 = vmatmul.mubr.bf16.gmra.mrb[0].mxu0 %v70
    %v995 = vpop.f32.mrb[0].mxu0
    %v996 = vadd.f32 %v219, %v995
    %v997 = vpop.f32.mrb[0].mxu0
    %v998 = vadd.f32 %v223, %v997
    %v999 = vpop.f32.mrb[0].mxu0
    %v1000 = vadd.f32 %v219, %v999
    %v1001 = vpop.f32.mrb[0].mxu0
    %v1002 = vadd.f32 %v223, %v1001
    %1003 = vmatprep.mubr.bf16.mxu0 %v73
    %1004 = vmatmul.mubr.bf16.gmra.mrb[0].mxu0 %v72
    %v1005 = vpop.f32.mrb[0].mxu0
    %v1006 = vadd.f32 %v219, %v1005
    %v1007 = vpop.f32.mrb[0].mxu0
    %v1008 = vadd.f32 %v223, %v1007
    %v1009 = vpop.f32.mrb[0].mxu0
    %v1010 = vadd.f32 %v219, %v1009
    %v1011 = vpop.f32.mrb[0].mxu0
    %v1012 = vadd.f32 %v223, %v1011
    %1013 = vmatprep.mubr.bf16.mxu0 %v75
    %1014 = vmatmul.mubr.bf16.gmra.mrb[0].mxu0 %v74
    %v1015 = vpop.f32.mrb[0].mxu0
    %v1016 = vadd.f32 %v219, %v1015
    %v1017 = vpop.f32.mrb[0].mxu0
    %v1018 = vadd.f32 %v223, %v1017
    %v1019 = vpop.f32.mrb[0].mxu0
    %v1020 = vadd.f32 %v219, %v1019
    %v1021 = vpop.f32.mrb[0].mxu0
    %v1022 = vadd.f32 %v223, %v1021
    %1023 = vmatprep.mubr.bf16.mxu0 %v77
    %1024 = vmatmul.mubr.bf16.gmra.mrb[0].mxu0 %v76
    %v1025 = vpop.f32.mrb[0].mxu0
    %v1026 = vadd.f32 %v219, %v1025
    %v1027 = vpop.f32.mrb[0].mxu0
    %v1028 = vadd.f32 %v223, %v1027
    %v1029 = vpop.f32.mrb[0].mxu0
    %v1030 = vadd.f32 %v219, %v1029
    %v1031 = vpop.f32.mrb[0].mxu0
    %v1032 = vadd.f32 %v223, %v1031
    %1033 = vdwg.mxu0
    %1034 = vmatprep.subr.bf16.mxu0 %v637
    %1035 = vmatpush1.bf16.msra.mxu0 %v636
    %1036 = vmatprep.subr.bf16.mxu0 %v645
    %1037 = vmatpush1.bf16.msra.mxu0 %v644
    %1038 = vmatprep.subr.bf16.mxu0 %v653
    %1039 = vmatpush1.bf16.msra.mxu0 %v652
    %1040 = vmatprep.subr.bf16.mxu0 %v661
    %1041 = vmatpush1.bf16.msra.mxu0 %v660
    %1042 = vmatprep.subr.bf16.mxu0 %v669
    %1043 = vmatpush1.bf16.msra.mxu0 %v668
    %1044 = vmatprep.subr.bf16.mxu0 %v677
    %1045 = vmatpush1.bf16.msra.mxu0 %v676
    %1046 = vmatprep.subr.bf16.mxu0 %v685
    %1047 = vmatpush1.bf16.msra.mxu0 %v684
    %1048 = vmatprep.subr.bf16.mxu0 %v693
    %1049 = vmatpush1.bf16.msra.mxu0 %v692
    %1050 = vmatprep.subr.bf16.mxu0 %v701
    %1051 = vmatpush1.bf16.msra.mxu0 %v700
    %1052 = vmatprep.subr.bf16.mxu0 %v709
    %1053 = vmatpush1.bf16.msra.mxu0 %v708
    %1054 = vmatprep.subr.bf16.mxu0 %v717
    %1055 = vmatpush1.bf16.msra.mxu0 %v716
    %1056 = vmatprep.subr.bf16.mxu0 %v725
    %1057 = vmatpush1.bf16.msra.mxu0 %v724
    %1058 = vmatprep.subr.bf16.mxu0 %v733
    %1059 = vmatpush1.bf16.msra.mxu0 %v732
    %1060 = vmatprep.subr.bf16.mxu0 %v741
    %1061 = vmatpush1.bf16.msra.mxu0 %v740
    %1062 = vmatprep.subr.bf16.mxu0 %v749
    %1063 = vmatpush1.bf16.msra.mxu0 %v748
    %1064 = vmatprep.subr.bf16.mxu0 %v757
    %1065 = vmatpush1.bf16.msra.mxu0 %v756
    %1066 = vmatprep.mubr.bf16.mxu0 %v71
    %1067 = vmatmul.mubr.bf16.gmra.mrb[0].mxu0 %v70
    %v1068 = vpop.f32.mrb[0].mxu0
    %v1069 = vadd.f32 %v227, %v1068
    %v1070 = vpop.f32.mrb[0].mxu0
    %v1071 = vadd.f32 %v231, %v1070
    %v1072 = vpop.f32.mrb[0].mxu0
    %v1073 = vadd.f32 %v227, %v1072
    %v1074 = vpop.f32.mrb[0].mxu0
    %v1075 = vadd.f32 %v231, %v1074
    %1076 = vmatprep.mubr.bf16.mxu0 %v73
    %1077 = vmatmul.mubr.bf16.gmra.mrb[0].mxu0 %v72
    %v1078 = vpop.f32.mrb[0].mxu0
    %v1079 = vadd.f32 %v227, %v1078
    %v1080 = vpop.f32.mrb[0].mxu0
    %v1081 = vadd.f32 %v231, %v1080
    %v1082 = vpop.f32.mrb[0].mxu0
    %v1083 = vadd.f32 %v227, %v1082
    %v1084 = vpop.f32.mrb[0].mxu0
    %v1085 = vadd.f32 %v231, %v1084
    %1086 = vmatprep.mubr.bf16.mxu0 %v75
    %1087 = vmatmul.mubr.bf16.gmra.mrb[0].mxu0 %v74
    %v1088 = vpop.f32.mrb[0].mxu0
    %v1089 = vadd.f32 %v227, %v1088
    %v1090 = vpop.f32.mrb[0].mxu0
    %v1091 = vadd.f32 %v231, %v1090
    %v1092 = vpop.f32.mrb[0].mxu0
    %v1093 = vadd.f32 %v227, %v1092
    %v1094 = vpop.f32.mrb[0].mxu0
    %v1095 = vadd.f32 %v231, %v1094
    %1096 = vmatprep.mubr.bf16.mxu0 %v77
    %1097 = vmatmul.mubr.bf16.gmra.mrb[0].mxu0 %v76
    %v1098 = vpop.f32.mrb[0].mxu0
    %v1099 = vadd.f32 %v227, %v1098
    %v1100 = vpop.f32.mrb[0].mxu0
    %v1101 = vadd.f32 %v231, %v1100
    %v1102 = vpop.f32.mrb[0].mxu0
    %v1103 = vadd.f32 %v227, %v1102
    %v1104 = vpop.f32.mrb[0].mxu0
    %v1105 = vadd.f32 %v231, %v1104
    %1106 = vdwg.mxu0
    %1107 = vmatprep.subr.bf16.mxu0 %v639
    %1108 = vmatpush1.bf16.msra.mxu0 %v638
    %1109 = vmatprep.subr.bf16.mxu0 %v647
    %1110 = vmatpush1.bf16.msra.mxu0 %v646
    %1111 = vmatprep.subr.bf16.mxu0 %v655
    %1112 = vmatpush1.bf16.msra.mxu0 %v654
    %1113 = vmatprep.subr.bf16.mxu0 %v663
    %1114 = vmatpush1.bf16.msra.mxu0 %v662
    %1115 = vmatprep.subr.bf16.mxu0 %v671
    %1116 = vmatpush1.bf16.msra.mxu0 %v670
    %1117 = vmatprep.subr.bf16.mxu0 %v679
    %1118 = vmatpush1.bf16.msra.mxu0 %v678
    %1119 = vmatprep.subr.bf16.mxu0 %v687
    %1120 = vmatpush1.bf16.msra.mxu0 %v686
    %1121 = vmatprep.subr.bf16.mxu0 %v695
    %1122 = vmatpush1.bf16.msra.mxu0 %v694
    %1123 = vmatprep.subr.bf16.mxu0 %v703
    %1124 = vmatpush1.bf16.msra.mxu0 %v702
    %1125 = vmatprep.subr.bf16.mxu0 %v711
    %1126 = vmatpush1.bf16.msra.mxu0 %v710
    %1127 = vmatprep.subr.bf16.mxu0 %v719
    %1128 = vmatpush1.bf16.msra.mxu0 %v718
    %1129 = vmatprep.subr.bf16.mxu0 %v727
    %1130 = vmatpush1.bf16.msra.mxu0 %v726
    %1131 = vmatprep.subr.bf16.mxu0 %v735
    %1132 = vmatpush1.bf16.msra.mxu0 %v734
    %1133 = vmatprep.subr.bf16.mxu0 %v743
    %1134 = vmatpush1.bf16.msra.mxu0 %v742
    %1135 = vmatprep.subr.bf16.mxu0 %v751
    %1136 = vmatpush1.bf16.msra.mxu0 %v750
    %1137 = vmatprep.subr.bf16.mxu0 %v759
    %1138 = vmatpush1.bf16.msra.mxu0 %v758
    %1139 = vmatprep.mubr.bf16.mxu0 %v71
    %1140 = vmatmul.mubr.bf16.gmra.mrb[0].mxu0 %v70
    %v1141 = vpop.f32.mrb[0].mxu0
    %v1142 = vadd.f32 %v235, %v1141
    %v1143 = vpop.f32.mrb[0].mxu0
    %v1144 = vadd.f32 %v239, %v1143
    %v1145 = vpop.f32.mrb[0].mxu0
    %v1146 = vadd.f32 %v235, %v1145
    %v1147 = vpop.f32.mrb[0].mxu0
    %v1148 = vadd.f32 %v239, %v1147
    %1149 = vmatprep.mubr.bf16.mxu0 %v73
    %1150 = vmatmul.mubr.bf16.gmra.mrb[0].mxu0 %v72
    %v1151 = vpop.f32.mrb[0].mxu0
    %v1152 = vadd.f32 %v235, %v1151
    %v1153 = vpop.f32.mrb[0].mxu0
    %v1154 = vadd.f32 %v239, %v1153
    %v1155 = vpop.f32.mrb[0].mxu0
    %v1156 = vadd.f32 %v235, %v1155
    %v1157 = vpop.f32.mrb[0].mxu0
    %v1158 = vadd.f32 %v239, %v1157
    %1159 = vmatprep.mubr.bf16.mxu0 %v75
    %1160 = vmatmul.mubr.bf16.gmra.mrb[0].mxu0 %v74
    %v1161 = vpop.f32.mrb[0].mxu0
    %v1162 = vadd.f32 %v235, %v1161
    %v1163 = vpop.f32.mrb[0].mxu0
    %v1164 = vadd.f32 %v239, %v1163
    %v1165 = vpop.f32.mrb[0].mxu0
    %v1166 = vadd.f32 %v235, %v1165
    %v1167 = vpop.f32.mrb[0].mxu0
    %v1168 = vadd.f32 %v239, %v1167
    %1169 = vmatprep.mubr.bf16.mxu0 %v77
    %1170 = vmatmul.mubr.bf16.gmra.mrb[0].mxu0 %v76
    %v1171 = vpop.f32.mrb[0].mxu0
    %v1172 = vadd.f32 %v235, %v1171
    %v1173 = vpop.f32.mrb[0].mxu0
    %v1174 = vadd.f32 %v239, %v1173
    %v1175 = vpop.f32.mrb[0].mxu0
    %v1176 = vadd.f32 %v235, %v1175
    %v1177 = vpop.f32.mrb[0].mxu0
    %v1178 = vadd.f32 %v239, %v1177
    %1179 = vdwg.mxu0
    %1180 = vst [vmem:[#allocation8] sm:$0xff] %v923
    %1181 = vst [vmem:[#allocation8 + $0x8] sm:$0xff] %v925
    %1182 = vst [vmem:[#allocation8 + $0x10] sm:$0xff] %v996
    %1183 = vst [vmem:[#allocation8 + $0x18] sm:$0xff] %v998
    %1184 = vst [vmem:[#allocation8 + $0x20] sm:$0xff] %v1069
    %1185 = vst [vmem:[#allocation8 + $0x28] sm:$0xff] %v1071
    %1186 = vst [vmem:[#allocation8 + $0x30] sm:$0xff] %v1142
    %1187 = vst [vmem:[#allocation8 + $0x38] sm:$0xff] %v1144
    %1188 = vst [vmem:[#allocation8 + $0x40] sm:$0xff] %v927
    %1189 = vst [vmem:[#allocation8 + $0x48] sm:$0xff] %v929
    %1190 = vst [vmem:[#allocation8 + $0x50] sm:$0xff] %v1000
    %1191 = vst [vmem:[#allocation8 + $0x58] sm:$0xff] %v1002
    %1192 = vst [vmem:[#allocation8 + $0x60] sm:$0xff] %v1073
    %1193 = vst [vmem:[#allocation8 + $0x68] sm:$0xff] %v1075
    %1194 = vst [vmem:[#allocation8 + $0x70] sm:$0xff] %v1146
    %1195 = vst [vmem:[#allocation8 + $0x78] sm:$0xff] %v1148
    %1196 = vst [vmem:[#allocation8 + $0x80] sm:$0xff] %v933
    %1197 = vst [vmem:[#allocation8 + $0x88] sm:$0xff] %v935
    %1198 = vst [vmem:[#allocation8 + $0x90] sm:$0xff] %v1006
    %1199 = vst [vmem:[#allocation8 + $0x98] sm:$0xff] %v1008
    %1200 = vst [vmem:[#allocation8 + $0xa0] sm:$0xff] %v1079
    %1201 = vst [vmem:[#allocation8 + $0xa8] sm:$0xff] %v1081
    %1202 = vst [vmem:[#allocation8 + $0xb0] sm:$0xff] %v1152
    %1203 = vst [vmem:[#allocation8 + $0xb8] sm:$0xff] %v1154
    %1204 = vst [vmem:[#allocation8 + $0xc0] sm:$0xff] %v937
    %1205 = vst [vmem:[#allocation8 + $0xc8] sm:$0xff] %v939
    %1206 = vst [vmem:[#allocation8 + $0xd0] sm:$0xff] %v1010
    %1207 = vst [vmem:[#allocation8 + $0xd8] sm:$0xff] %v1012
    %1208 = vst [vmem:[#allocation8 + $0xe0] sm:$0xff] %v1083
    %1209 = vst [vmem:[#allocation8 + $0xe8] sm:$0xff] %v1085
    %1210 = vst [vmem:[#allocation8 + $0xf0] sm:$0xff] %v1156
    %1211 = vst [vmem:[#allocation8 + $0xf8] sm:$0xff] %v1158
    %1212 = vst [vmem:[#allocation8 + $0x100] sm:$0xff] %v943
    %1213 = vst [vmem:[#allocation8 + $0x108] sm:$0xff] %v945
    %1214 = vst [vmem:[#allocation8 + $0x110] sm:$0xff] %v1016
    %1215 = vst [vmem:[#allocation8 + $0x118] sm:$0xff] %v1018
    %1216 = vst [vmem:[#allocation8 + $0x120] sm:$0xff] %v1089
    %1217 = vst [vmem:[#allocation8 + $0x128] sm:$0xff] %v1091
    %1218 = vst [vmem:[#allocation8 + $0x130] sm:$0xff] %v1162
    %1219 = vst [vmem:[#allocation8 + $0x138] sm:$0xff] %v1164
    %1220 = vst [vmem:[#allocation8 + $0x140] sm:$0xff] %v947
    %1221 = vst [vmem:[#allocation8 + $0x148] sm:$0xff] %v949
    %1222 = vst [vmem:[#allocation8 + $0x150] sm:$0xff] %v1020
    %1223 = vst [vmem:[#allocation8 + $0x158] sm:$0xff] %v1022
    %1224 = vst [vmem:[#allocation8 + $0x160] sm:$0xff] %v1093
    %1225 = vst [vmem:[#allocation8 + $0x168] sm:$0xff] %v1095
    %1226 = vst [vmem:[#allocation8 + $0x170] sm:$0xff] %v1166
    %1227 = vst [vmem:[#allocation8 + $0x178] sm:$0xff] %v1168
    %1228 = vst [vmem:[#allocation8 + $0x180] sm:$0xff] %v953
    %1229 = vst [vmem:[#allocation8 + $0x188] sm:$0xff] %v955
    %1230 = vst [vmem:[#allocation8 + $0x190] sm:$0xff] %v1026
    %1231 = vst [vmem:[#allocation8 + $0x198] sm:$0xff] %v1028
    %1232 = vst [vmem:[#allocation8 + $0x1a0] sm:$0xff] %v1099
    %1233 = vst [vmem:[#allocation8 + $0x1a8] sm:$0xff] %v1101
    %1234 = vst [vmem:[#allocation8 + $0x1b0] sm:$0xff] %v1172
    %1235 = vst [vmem:[#allocation8 + $0x1b8] sm:$0xff] %v1174
    %1236 = vst [vmem:[#allocation8 + $0x1c0] sm:$0xff] %v957
    %1237 = vst [vmem:[#allocation8 + $0x1c8] sm:$0xff] %v959
    %1238 = vst [vmem:[#allocation8 + $0x1d0] sm:$0xff] %v1030
    %1239 = vst [vmem:[#allocation8 + $0x1d8] sm:$0xff] %v1032
    %1240 = vst [vmem:[#allocation8 + $0x1e0] sm:$0xff] %v1103
    %1241 = vst [vmem:[#allocation8 + $0x1e8] sm:$0xff] %v1105
    %1242 = vst [vmem:[#allocation8 + $0x1f0] sm:$0xff] %v1176
    %1243 = vst [vmem:[#allocation8 + $0x1f8] sm:$0xff] %v1178
    // Predicated region
    $region26: #{rnn_model_forward.7} parent=1 // pred_check
      _
    $region27: #{rnn_model_forward.7} parent=1 // pred_check_branch
      %1245 = sbr.rel (0) target = $region29
    $region28: #{rnn_model_forward.7} parent=1 // pred_region
      %s1247 = ssub.s32 8192, 8192
      %1248 = vsyncadd [#allocation4], %s1247
      %s1249 = sshll.u32 [#allocation8], 4
      %s1250 = int_to_ptr.vmem [resolvable:$true] %s1249
      %1255 = dma.vmem_to_hbm [thread:$0]  %s1250, 8192, %s3, [#allocation4], 1024, 1024, 64
    $region29: #{rnn_model_forward.7} parent=1 // pred_fallthru
      _
    // Predicated region
    $region30: #{rnn_model_forward.7} parent=1 // pred_check
      _
    $region31: #{rnn_model_forward.7} parent=1 // pred_check_branch
      %1257 = sbr.rel (0) target = $region33
    $region32: #{rnn_model_forward.7} parent=1 // pred_region
      %1258 = dma.done [#allocation4], 8192
    $region33: #{rnn_model_forward.7} parent=1 // pred_fallthru
      _
    %1259 = vsyncpa [#allocation3], 1
    %1260 = vsyncpa [#allocation6], 1
    %1261 = vsyncpa [#allocation4], 1

// kernel: rnn_model_forward.6
$region0: #{rnn_model_forward.6}
  #allocation0 [shape = 'u32[]', space=smem, size = 0x4, offset = 0x4, fixed_abs, tag = 'smem constant byte address 0x4 - core index']
  #allocation1 [shape = 'u32[144,128]{1,0:T(1,128)}', space=vmem, size = 0x12000, scoped, tag = 'internal scratch']
  #allocation2 [shape = 'f32[8,128]{1,0:T(8,128)}', space=vmem, size = 0x1000, scoped, tag = 'scratch operand']
  #allocation3 [shape = 'f32[8,128]{1,0:T(8,128)}', space=vmem, size = 0x1000, scoped, tag = 'scratch operand']
  #allocation4 [shape = 'f32[8,128]{1,0:T(8,128)}', space=vmem, size = 0x1000, scoped, tag = 'scratch operand']
  #allocation5 [shape = 'f32[8,128]{1,0:T(8,128)}', space=vmem, size = 0x1000, scoped, tag = 'scratch operand']
  %s0 = inlined_call_operand.hbm [shape: f32[8,8,512], index: 0, kind: input, shape index: {}]
  %s1 = inlined_call_operand.hbm [shape: f32[8,8,512], index: 1, kind: input, shape index: {}]
  %s2 = inlined_call_operand.hbm [shape: bf16[128,512], index: 2, kind: input, shape index: {}]
  %s3 = inlined_call_operand.hbm [shape: bf16[128,512], index: 3, kind: input, shape index: {}]
  %s4 = inlined_call_operand.hbm [shape: f32[8,8,128], index: 4, kind: output, shape index: {0}]
  %s5 = inlined_call_operand.hbm [shape: f32[8,8,128], index: 5, kind: output, shape index: {1}]
  %s6 = inlined_call_operand.hbm [shape: f32[8,128], index: 6, kind: output, shape index: {2}]
  %s7 = inlined_call_operand.hbm [shape: f32[8,128], index: 7, kind: output, shape index: {3}]
  %8 = xla_tuple %s4, %s5, %s6, %s7
  %s9 = sld [smem:[#allocation0]]
  $region74: #{rnn_model_forward.6} parent=0
    _
  %s11 = ssub.s32 1, %s9
  %s12 = scalar_select 0, %s11, %s9
  $region1: #{rnn_model_forward.6} parent=0
    #allocation6 [shape = 'u8[131072]{0}', space=vmem, size = 0x20000, scoped, tag = 'input window, operand 0, single buffered']
    #allocation7 [shape = 's32[1]{0}', space=sflag, size = 0x4, scoped, tag = 'scoped memory for rnn_model_forward.6']
    #allocation8 [shape = 's32[1]{0}', space=sflag, size = 0x4, scoped, tag = 'scoped memory for rnn_model_forward.6']
    #allocation9 [shape = 'u8[131072]{0}', space=vmem, size = 0x20000, scoped, tag = 'input window, operand 1, single buffered']
    #allocation10 [shape = 's32[1]{0}', space=sflag, size = 0x4, scoped, tag = 'scoped memory for rnn_model_forward.6']
    #allocation11 [shape = 'u8[131072]{0}', space=vmem, size = 0x20000, scoped, tag = 'input window, operand 2, single buffered']
    #allocation12 [shape = 'u8[131072]{0}', space=vmem, size = 0x20000, scoped, tag = 'input window, operand 3, single buffered']
    #allocation13 [shape = 's32[1]{0}', space=sflag, size = 0x4, scoped, tag = 'scoped memory for rnn_model_forward.6']
    #allocation14 [shape = 'u8[32768]{0}', space=vmem, size = 0x8000, scoped, tag = 'output window, operand 0, single buffered']
    #allocation15 [shape = 'u8[32768]{0}', space=vmem, size = 0x8000, scoped, tag = 'output window, operand 1, single buffered']
    #allocation16 [shape = 's32[1]{0}', space=sflag, size = 0x4, scoped, tag = 'scoped memory for rnn_model_forward.6']
    #allocation17 [shape = 'u8[4096]{0}', space=vmem, size = 0x1000, scoped, tag = 'output window, operand 2, single buffered']
    #allocation18 [shape = 'u8[4096]{0}', space=vmem, size = 0x1000, scoped, tag = 'output window, operand 3, single buffered']
    #allocation19 [shape = 's32[1]{0}', space=sflag, size = 0x4, scoped, tag = 'scoped memory for rnn_model_forward.6']
    %13 = vsyncpa [#allocation7], 0
    %14 = vsyncpa [#allocation10], 0
    %15 = vsyncpa [#allocation13], 0
    %16 = vsyncpa [#allocation8], 0
    %17 = vsyncpa [#allocation16], 0
    %18 = vsyncpa [#allocation19], 0
    // Predicated region
    $region2: #{rnn_model_forward.6} parent=1 // pred_check
      _
    $region3: #{rnn_model_forward.6} parent=1 // pred_check_branch
      %20 = sbr.rel (0) target = $region5
    $region4: #{rnn_model_forward.6} parent=1 // pred_region
      %s22 = ssub.s32 4096, 4096
      %23 = vsyncadd [#allocation7], %s22
      %s24 = sshll.u32 [#allocation6], 4
      %s25 = int_to_ptr.vmem [resolvable:$true] %s24
      %30 = dma.hbm_to_vmem [thread:$0]  %s0, 4096, %s25, [#allocation7], 512, 512, 32
    $region5: #{rnn_model_forward.6} parent=1 // pred_fallthru
      _
    // Predicated region
    $region6: #{rnn_model_forward.6} parent=1 // pred_check
      _
    $region7: #{rnn_model_forward.6} parent=1 // pred_check_branch
      %32 = sbr.rel (0) target = $region9
    $region8: #{rnn_model_forward.6} parent=1 // pred_region
      %s33 = ssub.s32 0, 0
      %s34 = smul.u32 8, %s33
      %s36 = ssub.s32 4096, 4096
      %37 = vsyncadd [#allocation10], %s36
      %s38 = smul.addr %s34, 4
      %s39 = smul.addr %s38, 128
      %s40 = scalar_lea.hbm %s1, %s39
      %s41 = sshll.u32 [#allocation9], 4
      %s42 = int_to_ptr.vmem [resolvable:$true] %s41
      %47 = dma.hbm_to_vmem [thread:$0]  %s40, 4096, %s42, [#allocation10], 512, 512, 32
    $region9: #{rnn_model_forward.6} parent=1 // pred_fallthru
      _
    // Predicated region
    $region10: #{rnn_model_forward.6} parent=1 // pred_check
      _
    $region11: #{rnn_model_forward.6} parent=1 // pred_check_branch
      %49 = sbr.rel (0) target = $region13
    $region12: #{rnn_model_forward.6} parent=1 // pred_region
      %s51 = ssub.s32 4096, 4096
      %52 = vsyncadd [#allocation10], %s51
      %s53 = sshll.u32 [#allocation11], 4
      %s54 = int_to_ptr.vmem [resolvable:$true] %s53
      %59 = dma.hbm_to_vmem [thread:$0]  %s2, 4096, %s54, [#allocation10], 256, 256, 16
    $region13: #{rnn_model_forward.6} parent=1 // pred_fallthru
      _
    // Predicated region
    $region14: #{rnn_model_forward.6} parent=1 // pred_check
      _
    $region15: #{rnn_model_forward.6} parent=1 // pred_check_branch
      %61 = sbr.rel (0) target = $region17
    $region16: #{rnn_model_forward.6} parent=1 // pred_region
      %s63 = ssub.s32 4096, 4096
      %64 = vsyncadd [#allocation13], %s63
      %s65 = sshll.u32 [#allocation12], 4
      %s66 = int_to_ptr.vmem [resolvable:$true] %s65
      %71 = dma.hbm_to_vmem [thread:$0]  %s3, 4096, %s66, [#allocation13], 256, 256, 16
    $region17: #{rnn_model_forward.6} parent=1 // pred_fallthru
      _
    // Predicated region
    $region18: #{rnn_model_forward.6} parent=1 // pred_check
      _
    $region19: #{rnn_model_forward.6} parent=1 // pred_check_branch
      %73 = sbr.rel (0) target = $region21
    $region20: #{rnn_model_forward.6} parent=1 // pred_region
      %74 = dma.done [#allocation7], 4096
    $region21: #{rnn_model_forward.6} parent=1 // pred_fallthru
      _
    // Predicated region
    $region22: #{rnn_model_forward.6} parent=1 // pred_check
      _
    $region23: #{rnn_model_forward.6} parent=1 // pred_check_branch
      %76 = sbr.rel (0) target = $region25
    $region24: #{rnn_model_forward.6} parent=1 // pred_region
      %77 = dma.done [#allocation10], 4096
    $region25: #{rnn_model_forward.6} parent=1 // pred_fallthru
      _
    // Predicated region
    $region26: #{rnn_model_forward.6} parent=1 // pred_check
      _
    $region27: #{rnn_model_forward.6} parent=1 // pred_check_branch
      %79 = sbr.rel (0) target = $region29
    $region28: #{rnn_model_forward.6} parent=1 // pred_region
      %80 = dma.done [#allocation10], 4096
    $region29: #{rnn_model_forward.6} parent=1 // pred_fallthru
      _
    // Predicated region
    $region30: #{rnn_model_forward.6} parent=1 // pred_check
      _
    $region31: #{rnn_model_forward.6} parent=1 // pred_check_branch
      %82 = sbr.rel (0) target = $region33
    $region32: #{rnn_model_forward.6} parent=1 // pred_region
      %83 = dma.done [#allocation13], 4096
    $region33: #{rnn_model_forward.6} parent=1 // pred_fallthru
      _
    %s84 = ssub.s32 0, 0
    %s85 = smul.u32 8, %s84
    %s86 = ssub.s32 0, 0
    %s87 = smul.u32 8, %s86
    %p89 = scmp.eq.s32.totalorder 0, 0
    // Predicated region
    $region34: #{rnn_model_forward.6} parent=1 // pred_check
      %p90 = pneg %p89
    $region35: #{rnn_model_forward.6} parent=1 // pred_check_branch
      %92 = sbr.rel (%p90) target = $region37
    $region36: #{rnn_model_forward.6} parent=1 // pred_region
      %93 = vst [vmem:[#allocation2] sm:$0xff] 0.0
      %94 = vst [vmem:[#allocation3] sm:$0xff] 0.0
      %95 = vst [vmem:[#allocation4] sm:$0xff] 0.0
      %96 = vst [vmem:[#allocation5] sm:$0xff] 0.0
    $region37: #{rnn_model_forward.6} parent=1 // pred_fallthru
      _
    %v97 = vld [vmem:[#allocation11] sm:$0xff]
    %v98 = vld [vmem:[#allocation11 + $0x8] sm:$0xff]
    %v99 = vld [vmem:[#allocation11 + $0x10] sm:$0xff]
    %v100 = vld [vmem:[#allocation11 + $0x18] sm:$0xff]
    %v101 = vld [vmem:[#allocation11 + $0x20] sm:$0xff]
    %v102 = vld [vmem:[#allocation11 + $0x28] sm:$0xff]
    %v103 = vld [vmem:[#allocation11 + $0x30] sm:$0xff]
    %v104 = vld [vmem:[#allocation11 + $0x38] sm:$0xff]
    %v105 = vld [vmem:[#allocation11 + $0x40] sm:$0xff]
    %v106 = vld [vmem:[#allocation11 + $0x48] sm:$0xff]
    %v107 = vld [vmem:[#allocation11 + $0x50] sm:$0xff]
    %v108 = vld [vmem:[#allocation11 + $0x58] sm:$0xff]
    %v109 = vld [vmem:[#allocation11 + $0x60] sm:$0xff]
    %v110 = vld [vmem:[#allocation11 + $0x68] sm:$0xff]
    %v111 = vld [vmem:[#allocation11 + $0x70] sm:$0xff]
    %v112 = vld [vmem:[#allocation11 + $0x78] sm:$0xff]
    %v113 = vld [vmem:[#allocation11 + $0x80] sm:$0xff]
    %v114 = vld [vmem:[#allocation11 + $0x88] sm:$0xff]
    %v115 = vld [vmem:[#allocation11 + $0x90] sm:$0xff]
    %v116 = vld [vmem:[#allocation11 + $0x98] sm:$0xff]
    %v117 = vld [vmem:[#allocation11 + $0xa0] sm:$0xff]
    %v118 = vld [vmem:[#allocation11 + $0xa8] sm:$0xff]
    %v119 = vld [vmem:[#allocation11 + $0xb0] sm:$0xff]
    %v120 = vld [vmem:[#allocation11 + $0xb8] sm:$0xff]
    %v121 = vld [vmem:[#allocation11 + $0xc0] sm:$0xff]
    %v122 = vld [vmem:[#allocation11 + $0xc8] sm:$0xff]
    %v123 = vld [vmem:[#allocation11 + $0xd0] sm:$0xff]
    %v124 = vld [vmem:[#allocation11 + $0xd8] sm:$0xff]
    %v125 = vld [vmem:[#allocation11 + $0xe0] sm:$0xff]
    %v126 = vld [vmem:[#allocation11 + $0xe8] sm:$0xff]
    %v127 = vld [vmem:[#allocation11 + $0xf0] sm:$0xff]
    %v128 = vld [vmem:[#allocation11 + $0xf8] sm:$0xff]
    %v129 = vld [vmem:[#allocation12] sm:$0xff]
    %v130 = vld [vmem:[#allocation12 + $0x8] sm:$0xff]
    %v131 = vld [vmem:[#allocation12 + $0x10] sm:$0xff]
    %v132 = vld [vmem:[#allocation12 + $0x18] sm:$0xff]
    %v133 = vld [vmem:[#allocation12 + $0x20] sm:$0xff]
    %v134 = vld [vmem:[#allocation12 + $0x28] sm:$0xff]
    %v135 = vld [vmem:[#allocation12 + $0x30] sm:$0xff]
    %v136 = vld [vmem:[#allocation12 + $0x38] sm:$0xff]
    %v137 = vld [vmem:[#allocation12 + $0x40] sm:$0xff]
    %v138 = vld [vmem:[#allocation12 + $0x48] sm:$0xff]
    %v139 = vld [vmem:[#allocation12 + $0x50] sm:$0xff]
    %v140 = vld [vmem:[#allocation12 + $0x58] sm:$0xff]
    %v141 = vld [vmem:[#allocation12 + $0x60] sm:$0xff]
    %v142 = vld [vmem:[#allocation12 + $0x68] sm:$0xff]
    %v143 = vld [vmem:[#allocation12 + $0x70] sm:$0xff]
    %v144 = vld [vmem:[#allocation12 + $0x78] sm:$0xff]
    %v145 = vld [vmem:[#allocation12 + $0x80] sm:$0xff]
    %v146 = vld [vmem:[#allocation12 + $0x88] sm:$0xff]
    %v147 = vld [vmem:[#allocation12 + $0x90] sm:$0xff]
    %v148 = vld [vmem:[#allocation12 + $0x98] sm:$0xff]
    %v149 = vld [vmem:[#allocation12 + $0xa0] sm:$0xff]
    %v150 = vld [vmem:[#allocation12 + $0xa8] sm:$0xff]
    %v151 = vld [vmem:[#allocation12 + $0xb0] sm:$0xff]
    %v152 = vld [vmem:[#allocation12 + $0xb8] sm:$0xff]
    %v153 = vld [vmem:[#allocation12 + $0xc0] sm:$0xff]
    %v154 = vld [vmem:[#allocation12 + $0xc8] sm:$0xff]
    %v155 = vld [vmem:[#allocation12 + $0xd0] sm:$0xff]
    %v156 = vld [vmem:[#allocation12 + $0xd8] sm:$0xff]
    %v157 = vld [vmem:[#allocation12 + $0xe0] sm:$0xff]
    %v158 = vld [vmem:[#allocation12 + $0xe8] sm:$0xff]
    %v159 = vld [vmem:[#allocation12 + $0xf0] sm:$0xff]
    %v160 = vld [vmem:[#allocation12 + $0xf8] sm:$0xff]
    %v161 = vld [vmem:[#allocation2] sm:$0xff]
    %v162 = vld [vmem:[#allocation3] sm:$0xff]
    %v163 = vld [vmem:[#allocation4] sm:$0xff]
    %v164 = vld [vmem:[#allocation5] sm:$0xff]
    %v165 = vld [vmem:[#allocation6] sm:$0xff]
    %v166 = vld [vmem:[#allocation6 + $0x8] sm:$0xff]
    %v167 = vld [vmem:[#allocation6 + $0x10] sm:$0xff]
    %v168 = vld [vmem:[#allocation6 + $0x18] sm:$0xff]
    %v169 = vpack.c.bf16 %v161, %v161
    %v202 = vunpack.c.l.b16 %v97
    %v203 = vunpack.c.h.b16 %v97
    %v204 = vunpack.c.l.b16 %v98
    %v205 = vunpack.c.h.b16 %v98
    %v206 = vunpack.c.l.b16 %v99
    %v207 = vunpack.c.h.b16 %v99
    %v208 = vunpack.c.l.b16 %v100
    %v209 = vunpack.c.h.b16 %v100
    %v210 = vunpack.c.l.b16 %v101
    %v211 = vunpack.c.h.b16 %v101
    %v212 = vunpack.c.l.b16 %v102
    %v213 = vunpack.c.h.b16 %v102
    %v214 = vunpack.c.l.b16 %v103
    %v215 = vunpack.c.h.b16 %v103
    %v216 = vunpack.c.l.b16 %v104
    %v217 = vunpack.c.h.b16 %v104
    %v218 = vunpack.c.l.b16 %v105
    %v219 = vunpack.c.h.b16 %v105
    %v220 = vunpack.c.l.b16 %v106
    %v221 = vunpack.c.h.b16 %v106
    %v222 = vunpack.c.l.b16 %v107
    %v223 = vunpack.c.h.b16 %v107
    %v224 = vunpack.c.l.b16 %v108
    %v225 = vunpack.c.h.b16 %v108
    %v226 = vunpack.c.l.b16 %v109
    %v227 = vunpack.c.h.b16 %v109
    %v228 = vunpack.c.l.b16 %v110
    %v229 = vunpack.c.h.b16 %v110
    %v230 = vunpack.c.l.b16 %v111
    %v231 = vunpack.c.h.b16 %v111
    %v232 = vunpack.c.l.b16 %v112
    %v233 = vunpack.c.h.b16 %v112
    %v234 = vunpack.c.l.b16 %v113
    %v235 = vunpack.c.h.b16 %v113
    %v236 = vunpack.c.l.b16 %v114
    %v237 = vunpack.c.h.b16 %v114
    %v238 = vunpack.c.l.b16 %v115
    %v239 = vunpack.c.h.b16 %v115
    %v240 = vunpack.c.l.b16 %v116
    %v241 = vunpack.c.h.b16 %v116
    %v242 = vunpack.c.l.b16 %v117
    %v243 = vunpack.c.h.b16 %v117
    %v244 = vunpack.c.l.b16 %v118
    %v245 = vunpack.c.h.b16 %v118
    %v246 = vunpack.c.l.b16 %v119
    %v247 = vunpack.c.h.b16 %v119
    %v248 = vunpack.c.l.b16 %v120
    %v249 = vunpack.c.h.b16 %v120
    %v250 = vunpack.c.l.b16 %v121
    %v251 = vunpack.c.h.b16 %v121
    %v252 = vunpack.c.l.b16 %v122
    %v253 = vunpack.c.h.b16 %v122
    %v254 = vunpack.c.l.b16 %v123
    %v255 = vunpack.c.h.b16 %v123
    %v256 = vunpack.c.l.b16 %v124
    %v257 = vunpack.c.h.b16 %v124
    %v258 = vunpack.c.l.b16 %v125
    %v259 = vunpack.c.h.b16 %v125
    %v260 = vunpack.c.l.b16 %v126
    %v261 = vunpack.c.h.b16 %v126
    %v262 = vunpack.c.l.b16 %v127
    %v263 = vunpack.c.h.b16 %v127
    %v264 = vunpack.c.l.b16 %v128
    %v265 = vunpack.c.h.b16 %v128
    %v266 = vpack.c.b16 %v206, %v202
    %v267 = vpack.c.b16 %v207, %v203
    %v268 = vpack.c.b16 %v208, %v204
    %v269 = vpack.c.b16 %v209, %v205
    %v270 = vpack.c.b16 %v214, %v210
    %v271 = vpack.c.b16 %v215, %v211
    %v272 = vpack.c.b16 %v216, %v212
    %v273 = vpack.c.b16 %v217, %v213
    %v274 = vpack.c.b16 %v222, %v218
    %v275 = vpack.c.b16 %v223, %v219
    %v276 = vpack.c.b16 %v224, %v220
    %v277 = vpack.c.b16 %v225, %v221
    %v278 = vpack.c.b16 %v230, %v226
    %v279 = vpack.c.b16 %v231, %v227
    %v280 = vpack.c.b16 %v232, %v228
    %v281 = vpack.c.b16 %v233, %v229
    %v282 = vpack.c.b16 %v238, %v234
    %v283 = vpack.c.b16 %v239, %v235
    %v284 = vpack.c.b16 %v240, %v236
    %v285 = vpack.c.b16 %v241, %v237
    %v286 = vpack.c.b16 %v246, %v242
    %v287 = vpack.c.b16 %v247, %v243
    %v288 = vpack.c.b16 %v248, %v244
    %v289 = vpack.c.b16 %v249, %v245
    %v290 = vpack.c.b16 %v254, %v250
    %v291 = vpack.c.b16 %v255, %v251
    %v292 = vpack.c.b16 %v256, %v252
    %v293 = vpack.c.b16 %v257, %v253
    %v294 = vpack.c.b16 %v262, %v258
    %v295 = vpack.c.b16 %v263, %v259
    %v296 = vpack.c.b16 %v264, %v260
    %v297 = vpack.c.b16 %v265, %v261
    %330 = vmatprep.subr.bf16.mxu0 %v267
    %331 = vmatpush1.bf16.msra.mxu0 %v266
    %332 = vmatprep.subr.bf16.mxu0 %v271
    %333 = vmatpush1.bf16.msra.mxu0 %v270
    %334 = vmatprep.subr.bf16.mxu0 %v275
    %335 = vmatpush1.bf16.msra.mxu0 %v274
    %336 = vmatprep.subr.bf16.mxu0 %v279
    %337 = vmatpush1.bf16.msra.mxu0 %v278
    %338 = vmatprep.subr.bf16.mxu0 %v283
    %339 = vmatpush1.bf16.msra.mxu0 %v282
    %340 = vmatprep.subr.bf16.mxu0 %v287
    %341 = vmatpush1.bf16.msra.mxu0 %v286
    %342 = vmatprep.subr.bf16.mxu0 %v291
    %343 = vmatpush1.bf16.msra.mxu0 %v290
    %344 = vmatprep.subr.bf16.mxu0 %v295
    %345 = vmatpush1.bf16.msra.mxu0 %v294
    %346 = vmatprep.subr.bf16.mxu0 0
    %347 = vmatpush1.bf16.msra.mxu0 0
    %348 = vmatprep.subr.bf16.mxu0 0
    %349 = vmatpush1.bf16.msra.mxu0 0
    %350 = vmatprep.subr.bf16.mxu0 0
    %351 = vmatpush1.bf16.msra.mxu0 0
    %352 = vmatprep.subr.bf16.mxu0 0
    %353 = vmatpush1.bf16.msra.mxu0 0
    %354 = vmatprep.subr.bf16.mxu0 0
    %355 = vmatpush1.bf16.msra.mxu0 0
    %356 = vmatprep.subr.bf16.mxu0 0
    %357 = vmatpush1.bf16.msra.mxu0 0
    %358 = vmatprep.subr.bf16.mxu0 0
    %359 = vmatpush1.bf16.msra.mxu0 0
    %360 = vmatprep.subr.bf16.mxu0 0
    %361 = vmatpush1.bf16.msra.mxu0 0
    %362 = vmatprep.mubr.bf16.mxu0 0
    %363 = vmatmul.mubr.bf16.gmra.mrb[0].mxu0 %v169
    %v364 = vpop.f32.mrb[0].mxu0
    %v365 = vadd.f32 0.0, %v364
    %v366 = vpop.f32.mrb[0].mxu0
    %v367 = vadd.f32 0.0, %v366
    %v368 = vpop.f32.mrb[0].mxu0
    %v369 = vpop.f32.mrb[0].mxu0
    %370 = vdwg.mxu0
    %371 = vmatprep.subr.bf16.mxu0 %v269
    %372 = vmatpush1.bf16.msra.mxu0 %v268
    %373 = vmatprep.subr.bf16.mxu0 %v273
    %374 = vmatpush1.bf16.msra.mxu0 %v272
    %375 = vmatprep.subr.bf16.mxu0 %v277
    %376 = vmatpush1.bf16.msra.mxu0 %v276
    %377 = vmatprep.subr.bf16.mxu0 %v281
    %378 = vmatpush1.bf16.msra.mxu0 %v280
    %379 = vmatprep.subr.bf16.mxu0 %v285
    %380 = vmatpush1.bf16.msra.mxu0 %v284
    %381 = vmatprep.subr.bf16.mxu0 %v289
    %382 = vmatpush1.bf16.msra.mxu0 %v288
    %383 = vmatprep.subr.bf16.mxu0 %v293
    %384 = vmatpush1.bf16.msra.mxu0 %v292
    %385 = vmatprep.subr.bf16.mxu0 %v297
    %386 = vmatpush1.bf16.msra.mxu0 %v296
    %387 = vmatprep.subr.bf16.mxu0 0
    %388 = vmatpush1.bf16.msra.mxu0 0
    %389 = vmatprep.subr.bf16.mxu0 0
    %390 = vmatpush1.bf16.msra.mxu0 0
    %391 = vmatprep.subr.bf16.mxu0 0
    %392 = vmatpush1.bf16.msra.mxu0 0
    %393 = vmatprep.subr.bf16.mxu0 0
    %394 = vmatpush1.bf16.msra.mxu0 0
    %395 = vmatprep.subr.bf16.mxu0 0
    %396 = vmatpush1.bf16.msra.mxu0 0
    %397 = vmatprep.subr.bf16.mxu0 0
    %398 = vmatpush1.bf16.msra.mxu0 0
    %399 = vmatprep.subr.bf16.mxu0 0
    %400 = vmatpush1.bf16.msra.mxu0 0
    %401 = vmatprep.subr.bf16.mxu0 0
    %402 = vmatpush1.bf16.msra.mxu0 0
    %403 = vmatprep.mubr.bf16.mxu0 0
    %404 = vmatmul.mubr.bf16.gmra.mrb[0].mxu0 %v169
    %v405 = vpop.f32.mrb[0].mxu0
    %v406 = vadd.f32 0.0, %v405
    %v407 = vpop.f32.mrb[0].mxu0
    %v408 = vadd.f32 0.0, %v407
    %v409 = vpop.f32.mrb[0].mxu0
    %v410 = vpop.f32.mrb[0].mxu0
    %411 = vdwg.mxu0
    %v412 = vadd.f32 %v165, %v365
    %v413 = vadd.f32 %v166, %v367
    %v414 = vadd.f32 %v167, %v406
    %v415 = vadd.f32 %v168, %v408
    %s416 = scalar_lea.vmem [#allocation9], 224
    %v417 = vld [vmem:[%s416] sm:$0xff]
    %v418 = vld [vmem:[%s416 + $0x8] sm:$0xff]
    %v419 = vld [vmem:[%s416 + $0x10] sm:$0xff]
    %v420 = vld [vmem:[%s416 + $0x18] sm:$0xff]
    %v421 = vpack.c.bf16 %v163, %v163
    %v454 = vunpack.c.l.b16 %v129
    %v455 = vunpack.c.h.b16 %v129
    %v456 = vunpack.c.l.b16 %v130
    %v457 = vunpack.c.h.b16 %v130
    %v458 = vunpack.c.l.b16 %v131
    %v459 = vunpack.c.h.b16 %v131
    %v460 = vunpack.c.l.b16 %v132
    %v461 = vunpack.c.h.b16 %v132
    %v462 = vunpack.c.l.b16 %v133
    %v463 = vunpack.c.h.b16 %v133
    %v464 = vunpack.c.l.b16 %v134
    %v465 = vunpack.c.h.b16 %v134
    %v466 = vunpack.c.l.b16 %v135
    %v467 = vunpack.c.h.b16 %v135
    %v468 = vunpack.c.l.b16 %v136
    %v469 = vunpack.c.h.b16 %v136
    %v470 = vunpack.c.l.b16 %v137
    %v471 = vunpack.c.h.b16 %v137
    %v472 = vunpack.c.l.b16 %v138
    %v473 = vunpack.c.h.b16 %v138
    %v474 = vunpack.c.l.b16 %v139
    %v475 = vunpack.c.h.b16 %v139
    %v476 = vunpack.c.l.b16 %v140
    %v477 = vunpack.c.h.b16 %v140
    %v478 = vunpack.c.l.b16 %v141
    %v479 = vunpack.c.h.b16 %v141
    %v480 = vunpack.c.l.b16 %v142
    %v481 = vunpack.c.h.b16 %v142
    %v482 = vunpack.c.l.b16 %v143
    %v483 = vunpack.c.h.b16 %v143
    %v484 = vunpack.c.l.b16 %v144
    %v485 = vunpack.c.h.b16 %v144
    %v486 = vunpack.c.l.b16 %v145
    %v487 = vunpack.c.h.b16 %v145
    %v488 = vunpack.c.l.b16 %v146
    %v489 = vunpack.c.h.b16 %v146
    %v490 = vunpack.c.l.b16 %v147
    %v491 = vunpack.c.h.b16 %v147
    %v492 = vunpack.c.l.b16 %v148
    %v493 = vunpack.c.h.b16 %v148
    %v494 = vunpack.c.l.b16 %v149
    %v495 = vunpack.c.h.b16 %v149
    %v496 = vunpack.c.l.b16 %v150
    %v497 = vunpack.c.h.b16 %v150
    %v498 = vunpack.c.l.b16 %v151
    %v499 = vunpack.c.h.b16 %v151
    %v500 = vunpack.c.l.b16 %v152
    %v501 = vunpack.c.h.b16 %v152
    %v502 = vunpack.c.l.b16 %v153
    %v503 = vunpack.c.h.b16 %v153
    %v504 = vunpack.c.l.b16 %v154
    %v505 = vunpack.c.h.b16 %v154
    %v506 = vunpack.c.l.b16 %v155
    %v507 = vunpack.c.h.b16 %v155
    %v508 = vunpack.c.l.b16 %v156
    %v509 = vunpack.c.h.b16 %v156
    %v510 = vunpack.c.l.b16 %v157
    %v511 = vunpack.c.h.b16 %v157
    %v512 = vunpack.c.l.b16 %v158
    %v513 = vunpack.c.h.b16 %v158
    %v514 = vunpack.c.l.b16 %v159
    %v515 = vunpack.c.h.b16 %v159
    %v516 = vunpack.c.l.b16 %v160
    %v517 = vunpack.c.h.b16 %v160
    %v518 = vpack.c.b16 %v458, %v454
    %v519 = vpack.c.b16 %v459, %v455
    %v520 = vpack.c.b16 %v460, %v456
    %v521 = vpack.c.b16 %v461, %v457
    %v522 = vpack.c.b16 %v466, %v462
    %v523 = vpack.c.b16 %v467, %v463
    %v524 = vpack.c.b16 %v468, %v464
    %v525 = vpack.c.b16 %v469, %v465
    %v526 = vpack.c.b16 %v474, %v470
    %v527 = vpack.c.b16 %v475, %v471
    %v528 = vpack.c.b16 %v476, %v472
    %v529 = vpack.c.b16 %v477, %v473
    %v530 = vpack.c.b16 %v482, %v478
    %v531 = vpack.c.b16 %v483, %v479
    %v532 = vpack.c.b16 %v484, %v480
    %v533 = vpack.c.b16 %v485, %v481
    %v534 = vpack.c.b16 %v490, %v486
    %v535 = vpack.c.b16 %v491, %v487
    %v536 = vpack.c.b16 %v492, %v488
    %v537 = vpack.c.b16 %v493, %v489
    %v538 = vpack.c.b16 %v498, %v494
    %v539 = vpack.c.b16 %v499, %v495
    %v540 = vpack.c.b16 %v500, %v496
    %v541 = vpack.c.b16 %v501, %v497
    %v542 = vpack.c.b16 %v506, %v502
    %v543 = vpack.c.b16 %v507, %v503
    %v544 = vpack.c.b16 %v508, %v504
    %v545 = vpack.c.b16 %v509, %v505
    %v546 = vpack.c.b16 %v514, %v510
    %v547 = vpack.c.b16 %v515, %v511
    %v548 = vpack.c.b16 %v516, %v512
    %v549 = vpack.c.b16 %v517, %v513
    %582 = vmatprep.subr.bf16.mxu0 %v519
    %583 = vmatpush1.bf16.msra.mxu0 %v518
    %584 = vmatprep.subr.bf16.mxu0 %v523
    %585 = vmatpush1.bf16.msra.mxu0 %v522
    %586 = vmatprep.subr.bf16.mxu0 %v527
    %587 = vmatpush1.bf16.msra.mxu0 %v526
    %588 = vmatprep.subr.bf16.mxu0 %v531
    %589 = vmatpush1.bf16.msra.mxu0 %v530
    %590 = vmatprep.subr.bf16.mxu0 %v535
    %591 = vmatpush1.bf16.msra.mxu0 %v534
    %592 = vmatprep.subr.bf16.mxu0 %v539
    %593 = vmatpush1.bf16.msra.mxu0 %v538
    %594 = vmatprep.subr.bf16.mxu0 %v543
    %595 = vmatpush1.bf16.msra.mxu0 %v542
    %596 = vmatprep.subr.bf16.mxu0 %v547
    %597 = vmatpush1.bf16.msra.mxu0 %v546
    %598 = vmatprep.subr.bf16.mxu0 0
    %599 = vmatpush1.bf16.msra.mxu0 0
    %600 = vmatprep.subr.bf16.mxu0 0
    %601 = vmatpush1.bf16.msra.mxu0 0
    %602 = vmatprep.subr.bf16.mxu0 0
    %603 = vmatpush1.bf16.msra.mxu0 0
    %604 = vmatprep.subr.bf16.mxu0 0
    %605 = vmatpush1.bf16.msra.mxu0 0
    %606 = vmatprep.subr.bf16.mxu0 0
    %607 = vmatpush1.bf16.msra.mxu0 0
    %608 = vmatprep.subr.bf16.mxu0 0
    %609 = vmatpush1.bf16.msra.mxu0 0
    %610 = vmatprep.subr.bf16.mxu0 0
    %611 = vmatpush1.bf16.msra.mxu0 0
    %612 = vmatprep.subr.bf16.mxu0 0
    %613 = vmatpush1.bf16.msra.mxu0 0
    %614 = vmatprep.mubr.bf16.mxu0 0
    %615 = vmatmul.mubr.bf16.gmra.mrb[0].mxu0 %v421
    %v616 = vpop.f32.mrb[0].mxu0
    %v617 = vadd.f32 0.0, %v616
    %v618 = vpop.f32.mrb[0].mxu0
    %v619 = vadd.f32 0.0, %v618
    %v620 = vpop.f32.mrb[0].mxu0
    %v621 = vpop.f32.mrb[0].mxu0
    %622 = vdwg.mxu0
    %623 = vmatprep.subr.bf16.mxu0 %v521
    %624 = vmatpush1.bf16.msra.mxu0 %v520
    %625 = vmatprep.subr.bf16.mxu0 %v525
    %626 = vmatpush1.bf16.msra.mxu0 %v524
    %627 = vmatprep.subr.bf16.mxu0 %v529
    %628 = vmatpush1.bf16.msra.mxu0 %v528
    %629 = vmatprep.subr.bf16.mxu0 %v533
    %630 = vmatpush1.bf16.msra.mxu0 %v532
    %631 = vmatprep.subr.bf16.mxu0 %v537
    %632 = vmatpush1.bf16.msra.mxu0 %v536
    %633 = vmatprep.subr.bf16.mxu0 %v541
    %634 = vmatpush1.bf16.msra.mxu0 %v540
    %635 = vmatprep.subr.bf16.mxu0 %v545
    %636 = vmatpush1.bf16.msra.mxu0 %v544
    %637 = vmatprep.subr.bf16.mxu0 %v549
    %638 = vmatpush1.bf16.msra.mxu0 %v548
    %639 = vmatprep.subr.bf16.mxu0 0
    %640 = vmatpush1.bf16.msra.mxu0 0
    %641 = vmatprep.subr.bf16.mxu0 0
    %642 = vmatpush1.bf16.msra.mxu0 0
    %643 = vmatprep.subr.bf16.mxu0 0
    %644 = vmatpush1.bf16.msra.mxu0 0
    %645 = vmatprep.subr.bf16.mxu0 0
    %646 = vmatpush1.bf16.msra.mxu0 0
    %647 = vmatprep.subr.bf16.mxu0 0
    %648 = vmatpush1.bf16.msra.mxu0 0
    %649 = vmatprep.subr.bf16.mxu0 0
    %650 = vmatpush1.bf16.msra.mxu0 0
    %651 = vmatprep.subr.bf16.mxu0 0
    %652 = vmatpush1.bf16.msra.mxu0 0
    %653 = vmatprep.subr.bf16.mxu0 0
    %654 = vmatpush1.bf16.msra.mxu0 0
    %655 = vmatprep.mubr.bf16.mxu0 0
    %656 = vmatmul.mubr.bf16.gmra.mrb[0].mxu0 %v421
    %v657 = vpop.f32.mrb[0].mxu0
    %v658 = vadd.f32 0.0, %v657
    %v659 = vpop.f32.mrb[0].mxu0
    %v660 = vadd.f32 0.0, %v659
    %v661 = vpop.f32.mrb[0].mxu0
    %v662 = vpop.f32.mrb[0].mxu0
    %663 = vdwg.mxu0
    %v664 = vadd.f32 %v417, %v617
    %v665 = vadd.f32 %v418, %v619
    %v666 = vadd.f32 %v419, %v658
    %v667 = vadd.f32 %v420, %v660
    %v668 = vxor.u32 %v412, 2147483648
    %v669 = vmul.f32 %v668, 1.442695
    %v670 = vpow.pop %v669
    %v671 = vadd.f32 %v670, 1.0
    %v672 = vrcp.pop %v671
    %v673 = vmul.f32 1.0, %v672
    %v674 = vxor.u32 %v413, 2147483648
    %v675 = vmul.f32 %v674, 1.442695
    %v676 = vpow.pop %v675
    %v677 = vadd.f32 %v676, 1.0
    %v678 = vrcp.pop %v677
    %v679 = vmul.f32 1.0, %v678
    %v680 = vtanh.pop %v414
    %v681 = vxor.u32 %v415, 2147483648
    %v682 = vmul.f32 %v681, 1.442695
    %v683 = vpow.pop %v682
    %v684 = vadd.f32 %v683, 1.0
    %v685 = vrcp.pop %v684
    %v686 = vmul.f32 1.0, %v685
    %v687 = vxor.u32 %v664, 2147483648
    %v688 = vmul.f32 %v687, 1.442695
    %v689 = vpow.pop %v688
    %v690 = vadd.f32 %v689, 1.0
    %v691 = vrcp.pop %v690
    %v692 = vmul.f32 1.0, %v691
    %v693 = vxor.u32 %v665, 2147483648
    %v694 = vmul.f32 %v693, 1.442695
    %v695 = vpow.pop %v694
    %v696 = vadd.f32 %v695, 1.0
    %v697 = vrcp.pop %v696
    %v698 = vmul.f32 1.0, %v697
    %v699 = vtanh.pop %v666
    %v700 = vxor.u32 %v667, 2147483648
    %v701 = vmul.f32 %v700, 1.442695
    %v702 = vpow.pop %v701
    %v703 = vadd.f32 %v702, 1.0
    %v704 = vrcp.pop %v703
    %v705 = vmul.f32 1.0, %v704
    %v706 = vmul.f32 %v679, %v162
    %v707 = vmul.f32 %v673, %v680
    %v708 = vadd.f32 %v706, %v707
    %v709 = vtanh.pop %v708
    %v710 = vmul.f32 %v686, %v709
    %v711 = vmul.f32 %v698, %v164
    %v712 = vmul.f32 %v692, %v699
    %v713 = vadd.f32 %v711, %v712
    %v714 = vtanh.pop %v713
    %v715 = vmul.f32 %v705, %v714
    %716 = vst [vmem:[#allocation14] sm:$0xff] %v710
    %s717 = scalar_lea.vmem [#allocation15], 56
    %718 = vst [vmem:[%s717] sm:$0xff] %v715
    %s719 = scalar_lea.vmem [#allocation6], 32
    %v720 = vld [vmem:[%s719] sm:$0xff]
    %v721 = vld [vmem:[%s719 + $0x8] sm:$0xff]
    %v722 = vld [vmem:[%s719 + $0x10] sm:$0xff]
    %v723 = vld [vmem:[%s719 + $0x18] sm:$0xff]
    %v724 = vpack.c.bf16 %v710, %v710
    %725 = vmatprep.subr.bf16.mxu0 %v267
    %726 = vmatpush1.bf16.msra.mxu0 %v266
    %727 = vmatprep.subr.bf16.mxu0 %v271
    %728 = vmatpush1.bf16.msra.mxu0 %v270
    %729 = vmatprep.subr.bf16.mxu0 %v275
    %730 = vmatpush1.bf16.msra.mxu0 %v274
    %731 = vmatprep.subr.bf16.mxu0 %v279
    %732 = vmatpush1.bf16.msra.mxu0 %v278
    %733 = vmatprep.subr.bf16.mxu0 %v283
    %734 = vmatpush1.bf16.msra.mxu0 %v282
    %735 = vmatprep.subr.bf16.mxu0 %v287
    %736 = vmatpush1.bf16.msra.mxu0 %v286
    %737 = vmatprep.subr.bf16.mxu0 %v291
    %738 = vmatpush1.bf16.msra.mxu0 %v290
    %739 = vmatprep.subr.bf16.mxu0 %v295
    %740 = vmatpush1.bf16.msra.mxu0 %v294
    %741 = vmatprep.subr.bf16.mxu0 0
    %742 = vmatpush1.bf16.msra.mxu0 0
    %743 = vmatprep.subr.bf16.mxu0 0
    %744 = vmatpush1.bf16.msra.mxu0 0
    %745 = vmatprep.subr.bf16.mxu0 0
    %746 = vmatpush1.bf16.msra.mxu0 0
    %747 = vmatprep.subr.bf16.mxu0 0
    %748 = vmatpush1.bf16.msra.mxu0 0
    %749 = vmatprep.subr.bf16.mxu0 0
    %750 = vmatpush1.bf16.msra.mxu0 0
    %751 = vmatprep.subr.bf16.mxu0 0
    %752 = vmatpush1.bf16.msra.mxu0 0
    %753 = vmatprep.subr.bf16.mxu0 0
    %754 = vmatpush1.bf16.msra.mxu0 0
    %755 = vmatprep.subr.bf16.mxu0 0
    %756 = vmatpush1.bf16.msra.mxu0 0
    %757 = vmatprep.mubr.bf16.mxu0 0
    %758 = vmatmul.mubr.bf16.gmra.mrb[0].mxu0 %v724
    %v759 = vpop.f32.mrb[0].mxu0
    %v760 = vadd.f32 0.0, %v759
    %v761 = vpop.f32.mrb[0].mxu0
    %v762 = vadd.f32 0.0, %v761
    %v763 = vpop.f32.mrb[0].mxu0
    %v764 = vpop.f32.mrb[0].mxu0
    %765 = vdwg.mxu0
    %766 = vmatprep.subr.bf16.mxu0 %v269
    %767 = vmatpush1.bf16.msra.mxu0 %v268
    %768 = vmatprep.subr.bf16.mxu0 %v273
    %769 = vmatpush1.bf16.msra.mxu0 %v272
    %770 = vmatprep.subr.bf16.mxu0 %v277
    %771 = vmatpush1.bf16.msra.mxu0 %v276
    %772 = vmatprep.subr.bf16.mxu0 %v281
    %773 = vmatpush1.bf16.msra.mxu0 %v280
    %774 = vmatprep.subr.bf16.mxu0 %v285
    %775 = vmatpush1.bf16.msra.mxu0 %v284
    %776 = vmatprep.subr.bf16.mxu0 %v289
    %777 = vmatpush1.bf16.msra.mxu0 %v288
    %778 = vmatprep.subr.bf16.mxu0 %v293
    %779 = vmatpush1.bf16.msra.mxu0 %v292
    %780 = vmatprep.subr.bf16.mxu0 %v297
    %781 = vmatpush1.bf16.msra.mxu0 %v296
    %782 = vmatprep.subr.bf16.mxu0 0
    %783 = vmatpush1.bf16.msra.mxu0 0
    %784 = vmatprep.subr.bf16.mxu0 0
    %785 = vmatpush1.bf16.msra.mxu0 0
    %786 = vmatprep.subr.bf16.mxu0 0
    %787 = vmatpush1.bf16.msra.mxu0 0
    %788 = vmatprep.subr.bf16.mxu0 0
    %789 = vmatpush1.bf16.msra.mxu0 0
    %790 = vmatprep.subr.bf16.mxu0 0
    %791 = vmatpush1.bf16.msra.mxu0 0
    %792 = vmatprep.subr.bf16.mxu0 0
    %793 = vmatpush1.bf16.msra.mxu0 0
    %794 = vmatprep.subr.bf16.mxu0 0
    %795 = vmatpush1.bf16.msra.mxu0 0
    %796 = vmatprep.subr.bf16.mxu0 0
    %797 = vmatpush1.bf16.msra.mxu0 0
    %798 = vmatprep.mubr.bf16.mxu0 0
    %799 = vmatmul.mubr.bf16.gmra.mrb[0].mxu0 %v724
    %v800 = vpop.f32.mrb[0].mxu0
    %v801 = vadd.f32 0.0, %v800
    %v802 = vpop.f32.mrb[0].mxu0
    %v803 = vadd.f32 0.0, %v802
    %v804 = vpop.f32.mrb[0].mxu0
    %v805 = vpop.f32.mrb[0].mxu0
    %806 = vdwg.mxu0
    %v807 = vadd.f32 %v720, %v760
    %v808 = vadd.f32 %v721, %v762
    %v809 = vadd.f32 %v722, %v801
    %v810 = vadd.f32 %v723, %v803
    %s811 = scalar_lea.vmem [#allocation9], 192
    %v812 = vld [vmem:[%s811] sm:$0xff]
    %v813 = vld [vmem:[%s811 + $0x8] sm:$0xff]
    %v814 = vld [vmem:[%s811 + $0x10] sm:$0xff]
    %v815 = vld [vmem:[%s811 + $0x18] sm:$0xff]
    %v816 = vpack.c.bf16 %v715, %v715
    %817 = vmatprep.subr.bf16.mxu0 %v519
    %818 = vmatpush1.bf16.msra.mxu0 %v518
    %819 = vmatprep.subr.bf16.mxu0 %v523
    %820 = vmatpush1.bf16.msra.mxu0 %v522
    %821 = vmatprep.subr.bf16.mxu0 %v527
    %822 = vmatpush1.bf16.msra.mxu0 %v526
    %823 = vmatprep.subr.bf16.mxu0 %v531
    %824 = vmatpush1.bf16.msra.mxu0 %v530
    %825 = vmatprep.subr.bf16.mxu0 %v535
    %826 = vmatpush1.bf16.msra.mxu0 %v534
    %827 = vmatprep.subr.bf16.mxu0 %v539
    %828 = vmatpush1.bf16.msra.mxu0 %v538
    %829 = vmatprep.subr.bf16.mxu0 %v543
    %830 = vmatpush1.bf16.msra.mxu0 %v542
    %831 = vmatprep.subr.bf16.mxu0 %v547
    %832 = vmatpush1.bf16.msra.mxu0 %v546
    %833 = vmatprep.subr.bf16.mxu0 0
    %834 = vmatpush1.bf16.msra.mxu0 0
    %835 = vmatprep.subr.bf16.mxu0 0
    %836 = vmatpush1.bf16.msra.mxu0 0
    %837 = vmatprep.subr.bf16.mxu0 0
    %838 = vmatpush1.bf16.msra.mxu0 0
    %839 = vmatprep.subr.bf16.mxu0 0
    %840 = vmatpush1.bf16.msra.mxu0 0
    %841 = vmatprep.subr.bf16.mxu0 0
    %842 = vmatpush1.bf16.msra.mxu0 0
    %843 = vmatprep.subr.bf16.mxu0 0
    %844 = vmatpush1.bf16.msra.mxu0 0
    %845 = vmatprep.subr.bf16.mxu0 0
    %846 = vmatpush1.bf16.msra.mxu0 0
    %847 = vmatprep.subr.bf16.mxu0 0
    %848 = vmatpush1.bf16.msra.mxu0 0
    %849 = vmatprep.mubr.bf16.mxu0 0
    %850 = vmatmul.mubr.bf16.gmra.mrb[0].mxu0 %v816
    %v851 = vpop.f32.mrb[0].mxu0
    %v852 = vadd.f32 0.0, %v851
    %v853 = vpop.f32.mrb[0].mxu0
    %v854 = vadd.f32 0.0, %v853
    %v855 = vpop.f32.mrb[0].mxu0
    %v856 = vpop.f32.mrb[0].mxu0
    %857 = vdwg.mxu0
    %858 = vmatprep.subr.bf16.mxu0 %v521
    %859 = vmatpush1.bf16.msra.mxu0 %v520
    %860 = vmatprep.subr.bf16.mxu0 %v525
    %861 = vmatpush1.bf16.msra.mxu0 %v524
    %862 = vmatprep.subr.bf16.mxu0 %v529
    %863 = vmatpush1.bf16.msra.mxu0 %v528
    %864 = vmatprep.subr.bf16.mxu0 %v533
    %865 = vmatpush1.bf16.msra.mxu0 %v532
    %866 = vmatprep.subr.bf16.mxu0 %v537
    %867 = vmatpush1.bf16.msra.mxu0 %v536
    %868 = vmatprep.subr.bf16.mxu0 %v541
    %869 = vmatpush1.bf16.msra.mxu0 %v540
    %870 = vmatprep.subr.bf16.mxu0 %v545
    %871 = vmatpush1.bf16.msra.mxu0 %v544
    %872 = vmatprep.subr.bf16.mxu0 %v549
    %873 = vmatpush1.bf16.msra.mxu0 %v548
    %874 = vmatprep.subr.bf16.mxu0 0
    %875 = vmatpush1.bf16.msra.mxu0 0
    %876 = vmatprep.subr.bf16.mxu0 0
    %877 = vmatpush1.bf16.msra.mxu0 0
    %878 = vmatprep.subr.bf16.mxu0 0
    %879 = vmatpush1.bf16.msra.mxu0 0
    %880 = vmatprep.subr.bf16.mxu0 0
    %881 = vmatpush1.bf16.msra.mxu0 0
    %882 = vmatprep.subr.bf16.mxu0 0
    %883 = vmatpush1.bf16.msra.mxu0 0
    %884 = vmatprep.subr.bf16.mxu0 0
    %885 = vmatpush1.bf16.msra.mxu0 0
    %886 = vmatprep.subr.bf16.mxu0 0
    %887 = vmatpush1.bf16.msra.mxu0 0
    %888 = vmatprep.subr.bf16.mxu0 0
    %889 = vmatpush1.bf16.msra.mxu0 0
    %890 = vmatprep.mubr.bf16.mxu0 0
    %891 = vmatmul.mubr.bf16.gmra.mrb[0].mxu0 %v816
    %v892 = vpop.f32.mrb[0].mxu0
    %v893 = vadd.f32 0.0, %v892
    %v894 = vpop.f32.mrb[0].mxu0
    %v895 = vadd.f32 0.0, %v894
    %v896 = vpop.f32.mrb[0].mxu0
    %v897 = vpop.f32.mrb[0].mxu0
    %898 = vdwg.mxu0
    %v899 = vadd.f32 %v812, %v852
    %v900 = vadd.f32 %v813, %v854
    %v901 = vadd.f32 %v814, %v893
    %v902 = vadd.f32 %v815, %v895
    %v903 = vxor.u32 %v807, 2147483648
    %v904 = vmul.f32 %v903, 1.442695
    %v905 = vpow.pop %v904
    %v906 = vadd.f32 %v905, 1.0
    %v907 = vrcp.pop %v906
    %v908 = vmul.f32 1.0, %v907
    %v909 = vxor.u32 %v808, 2147483648
    %v910 = vmul.f32 %v909, 1.442695
    %v911 = vpow.pop %v910
    %v912 = vadd.f32 %v911, 1.0
    %v913 = vrcp.pop %v912
    %v914 = vmul.f32 1.0, %v913
    %v915 = vtanh.pop %v809
    %v916 = vxor.u32 %v810, 2147483648
    %v917 = vmul.f32 %v916, 1.442695
    %v918 = vpow.pop %v917
    %v919 = vadd.f32 %v918, 1.0
    %v920 = vrcp.pop %v919
    %v921 = vmul.f32 1.0, %v920
    %v922 = vxor.u32 %v899, 2147483648
    %v923 = vmul.f32 %v922, 1.442695
    %v924 = vpow.pop %v923
    %v925 = vadd.f32 %v924, 1.0
    %v926 = vrcp.pop %v925
    %v927 = vmul.f32 1.0, %v926
    %v928 = vxor.u32 %v900, 2147483648
    %v929 = vmul.f32 %v928, 1.442695
    %v930 = vpow.pop %v929
    %v931 = vadd.f32 %v930, 1.0
    %v932 = vrcp.pop %v931
    %v933 = vmul.f32 1.0, %v932
    %v934 = vtanh.pop %v901
    %v935 = vxor.u32 %v902, 2147483648
    %v936 = vmul.f32 %v935, 1.442695
    %v937 = vpow.pop %v936
    %v938 = vadd.f32 %v937, 1.0
    %v939 = vrcp.pop %v938
    %v940 = vmul.f32 1.0, %v939
    %v941 = vmul.f32 %v914, %v708
    %v942 = vmul.f32 %v908, %v915
    %v943 = vadd.f32 %v941, %v942
    %v944 = vtanh.pop %v943
    %v945 = vmul.f32 %v921, %v944
    %v946 = vmul.f32 %v933, %v713
    %v947 = vmul.f32 %v927, %v934
    %v948 = vadd.f32 %v946, %v947
    %v949 = vtanh.pop %v948
    %v950 = vmul.f32 %v940, %v949
    %s951 = scalar_lea.vmem [#allocation14], 8
    %952 = vst [vmem:[%s951] sm:$0xff] %v945
    %s953 = scalar_lea.vmem [#allocation15], 48
    %954 = vst [vmem:[%s953] sm:$0xff] %v950
    %s955 = scalar_lea.vmem [#allocation6], 64
    %v956 = vld [vmem:[%s955] sm:$0xff]
    %v957 = vld [vmem:[%s955 + $0x8] sm:$0xff]
    %v958 = vld [vmem:[%s955 + $0x10] sm:$0xff]
    %v959 = vld [vmem:[%s955 + $0x18] sm:$0xff]
    %v960 = vpack.c.bf16 %v945, %v945
    %961 = vmatprep.subr.bf16.mxu0 %v267
    %962 = vmatpush1.bf16.msra.mxu0 %v266
    %963 = vmatprep.subr.bf16.mxu0 %v271
    %964 = vmatpush1.bf16.msra.mxu0 %v270
    %965 = vmatprep.subr.bf16.mxu0 %v275
    %966 = vmatpush1.bf16.msra.mxu0 %v274
    %967 = vmatprep.subr.bf16.mxu0 %v279
    %968 = vmatpush1.bf16.msra.mxu0 %v278
    %969 = vmatprep.subr.bf16.mxu0 %v283
    %970 = vmatpush1.bf16.msra.mxu0 %v282
    %971 = vmatprep.subr.bf16.mxu0 %v287
    %972 = vmatpush1.bf16.msra.mxu0 %v286
    %973 = vmatprep.subr.bf16.mxu0 %v291
    %974 = vmatpush1.bf16.msra.mxu0 %v290
    %975 = vmatprep.subr.bf16.mxu0 %v295
    %976 = vmatpush1.bf16.msra.mxu0 %v294
    %977 = vmatprep.subr.bf16.mxu0 0
    %978 = vmatpush1.bf16.msra.mxu0 0
    %979 = vmatprep.subr.bf16.mxu0 0
    %980 = vmatpush1.bf16.msra.mxu0 0
    %981 = vmatprep.subr.bf16.mxu0 0
    %982 = vmatpush1.bf16.msra.mxu0 0
    %983 = vmatprep.subr.bf16.mxu0 0
    %984 = vmatpush1.bf16.msra.mxu0 0
    %985 = vmatprep.subr.bf16.mxu0 0
    %986 = vmatpush1.bf16.msra.mxu0 0
    %987 = vmatprep.subr.bf16.mxu0 0
    %988 = vmatpush1.bf16.msra.mxu0 0
    %989 = vmatprep.subr.bf16.mxu0 0
    %990 = vmatpush1.bf16.msra.mxu0 0
    %991 = vmatprep.subr.bf16.mxu0 0
    %992 = vmatpush1.bf16.msra.mxu0 0
    %993 = vmatprep.mubr.bf16.mxu0 0
    %994 = vmatmul.mubr.bf16.gmra.mrb[0].mxu0 %v960
    %v995 = vpop.f32.mrb[0].mxu0
    %v996 = vadd.f32 0.0, %v995
    %v997 = vpop.f32.mrb[0].mxu0
    %v998 = vadd.f32 0.0, %v997
    %v999 = vpop.f32.mrb[0].mxu0
    %v1000 = vpop.f32.mrb[0].mxu0
    %1001 = vdwg.mxu0
    %1002 = vmatprep.subr.bf16.mxu0 %v269
    %1003 = vmatpush1.bf16.msra.mxu0 %v268
    %1004 = vmatprep.subr.bf16.mxu0 %v273
    %1005 = vmatpush1.bf16.msra.mxu0 %v272
    %1006 = vmatprep.subr.bf16.mxu0 %v277
    %1007 = vmatpush1.bf16.msra.mxu0 %v276
    %1008 = vmatprep.subr.bf16.mxu0 %v281
    %1009 = vmatpush1.bf16.msra.mxu0 %v280
    %1010 = vmatprep.subr.bf16.mxu0 %v285
    %1011 = vmatpush1.bf16.msra.mxu0 %v284
    %1012 = vmatprep.subr.bf16.mxu0 %v289
    %1013 = vmatpush1.bf16.msra.mxu0 %v288
    %1014 = vmatprep.subr.bf16.mxu0 %v293
    %1015 = vmatpush1.bf16.msra.mxu0 %v292
    %1016 = vmatprep.subr.bf16.mxu0 %v297
    %1017 = vmatpush1.bf16.msra.mxu0 %v296
    %1018 = vmatprep.subr.bf16.mxu0 0
    %1019 = vmatpush1.bf16.msra.mxu0 0
    %1020 = vmatprep.subr.bf16.mxu0 0
    %1021 = vmatpush1.bf16.msra.mxu0 0
    %1022 = vmatprep.subr.bf16.mxu0 0
    %1023 = vmatpush1.bf16.msra.mxu0 0
    %1024 = vmatprep.subr.bf16.mxu0 0
    %1025 = vmatpush1.bf16.msra.mxu0 0
    %1026 = vmatprep.subr.bf16.mxu0 0
    %1027 = vmatpush1.bf16.msra.mxu0 0
    %1028 = vmatprep.subr.bf16.mxu0 0
    %1029 = vmatpush1.bf16.msra.mxu0 0
    %1030 = vmatprep.subr.bf16.mxu0 0
    %1031 = vmatpush1.bf16.msra.mxu0 0
    %1032 = vmatprep.subr.bf16.mxu0 0
    %1033 = vmatpush1.bf16.msra.mxu0 0
    %1034 = vmatprep.mubr.bf16.mxu0 0
    %1035 = vmatmul.mubr.bf16.gmra.mrb[0].mxu0 %v960
    %v1036 = vpop.f32.mrb[0].mxu0
    %v1037 = vadd.f32 0.0, %v1036
    %v1038 = vpop.f32.mrb[0].mxu0
    %v1039 = vadd.f32 0.0, %v1038
    %v1040 = vpop.f32.mrb[0].mxu0
    %v1041 = vpop.f32.mrb[0].mxu0
    %1042 = vdwg.mxu0
    %v1043 = vadd.f32 %v956, %v996
    %v1044 = vadd.f32 %v957, %v998
    %v1045 = vadd.f32 %v958, %v1037
    %v1046 = vadd.f32 %v959, %v1039
    %s1047 = scalar_lea.vmem [#allocation9], 160
    %v1048 = vld [vmem:[%s1047] sm:$0xff]
    %v1049 = vld [vmem:[%s1047 + $0x8] sm:$0xff]
    %v1050 = vld [vmem:[%s1047 + $0x10] sm:$0xff]
    %v1051 = vld [vmem:[%s1047 + $0x18] sm:$0xff]
    %v1052 = vpack.c.bf16 %v950, %v950
    %1053 = vmatprep.subr.bf16.mxu0 %v519
    %1054 = vmatpush1.bf16.msra.mxu0 %v518
    %1055 = vmatprep.subr.bf16.mxu0 %v523
    %1056 = vmatpush1.bf16.msra.mxu0 %v522
    %1057 = vmatprep.subr.bf16.mxu0 %v527
    %1058 = vmatpush1.bf16.msra.mxu0 %v526
    %1059 = vmatprep.subr.bf16.mxu0 %v531
    %1060 = vmatpush1.bf16.msra.mxu0 %v530
    %1061 = vmatprep.subr.bf16.mxu0 %v535
    %1062 = vmatpush1.bf16.msra.mxu0 %v534
    %1063 = vmatprep.subr.bf16.mxu0 %v539
    %1064 = vmatpush1.bf16.msra.mxu0 %v538
    %1065 = vmatprep.subr.bf16.mxu0 %v543
    %1066 = vmatpush1.bf16.msra.mxu0 %v542
    %1067 = vmatprep.subr.bf16.mxu0 %v547
    %1068 = vmatpush1.bf16.msra.mxu0 %v546
    %1069 = vmatprep.subr.bf16.mxu0 0
    %1070 = vmatpush1.bf16.msra.mxu0 0
    %1071 = vmatprep.subr.bf16.mxu0 0
    %1072 = vmatpush1.bf16.msra.mxu0 0
    %1073 = vmatprep.subr.bf16.mxu0 0
    %1074 = vmatpush1.bf16.msra.mxu0 0
    %1075 = vmatprep.subr.bf16.mxu0 0
    %1076 = vmatpush1.bf16.msra.mxu0 0
    %1077 = vmatprep.subr.bf16.mxu0 0
    %1078 = vmatpush1.bf16.msra.mxu0 0
    %1079 = vmatprep.subr.bf16.mxu0 0
    %1080 = vmatpush1.bf16.msra.mxu0 0
    %1081 = vmatprep.subr.bf16.mxu0 0
    %1082 = vmatpush1.bf16.msra.mxu0 0
    %1083 = vmatprep.subr.bf16.mxu0 0
    %1084 = vmatpush1.bf16.msra.mxu0 0
    %1085 = vmatprep.mubr.bf16.mxu0 0
    %1086 = vmatmul.mubr.bf16.gmra.mrb[0].mxu0 %v1052
    %v1087 = vpop.f32.mrb[0].mxu0
    %v1088 = vadd.f32 0.0, %v1087
    %v1089 = vpop.f32.mrb[0].mxu0
    %v1090 = vadd.f32 0.0, %v1089
    %v1091 = vpop.f32.mrb[0].mxu0
    %v1092 = vpop.f32.mrb[0].mxu0
    %1093 = vdwg.mxu0
    %1094 = vmatprep.subr.bf16.mxu0 %v521
    %1095 = vmatpush1.bf16.msra.mxu0 %v520
    %1096 = vmatprep.subr.bf16.mxu0 %v525
    %1097 = vmatpush1.bf16.msra.mxu0 %v524
    %1098 = vmatprep.subr.bf16.mxu0 %v529
    %1099 = vmatpush1.bf16.msra.mxu0 %v528
    %1100 = vmatprep.subr.bf16.mxu0 %v533
    %1101 = vmatpush1.bf16.msra.mxu0 %v532
    %1102 = vmatprep.subr.bf16.mxu0 %v537
    %1103 = vmatpush1.bf16.msra.mxu0 %v536
    %1104 = vmatprep.subr.bf16.mxu0 %v541
    %1105 = vmatpush1.bf16.msra.mxu0 %v540
    %1106 = vmatprep.subr.bf16.mxu0 %v545
    %1107 = vmatpush1.bf16.msra.mxu0 %v544
    %1108 = vmatprep.subr.bf16.mxu0 %v549
    %1109 = vmatpush1.bf16.msra.mxu0 %v548
    %1110 = vmatprep.subr.bf16.mxu0 0
    %1111 = vmatpush1.bf16.msra.mxu0 0
    %1112 = vmatprep.subr.bf16.mxu0 0
    %1113 = vmatpush1.bf16.msra.mxu0 0
    %1114 = vmatprep.subr.bf16.mxu0 0
    %1115 = vmatpush1.bf16.msra.mxu0 0
    %1116 = vmatprep.subr.bf16.mxu0 0
    %1117 = vmatpush1.bf16.msra.mxu0 0
    %1118 = vmatprep.subr.bf16.mxu0 0
    %1119 = vmatpush1.bf16.msra.mxu0 0
    %1120 = vmatprep.subr.bf16.mxu0 0
    %1121 = vmatpush1.bf16.msra.mxu0 0
    %1122 = vmatprep.subr.bf16.mxu0 0
    %1123 = vmatpush1.bf16.msra.mxu0 0
    %1124 = vmatprep.subr.bf16.mxu0 0
    %1125 = vmatpush1.bf16.msra.mxu0 0
    %1126 = vmatprep.mubr.bf16.mxu0 0
    %1127 = vmatmul.mubr.bf16.gmra.mrb[0].mxu0 %v1052
    %v1128 = vpop.f32.mrb[0].mxu0
    %v1129 = vadd.f32 0.0, %v1128
    %v1130 = vpop.f32.mrb[0].mxu0
    %v1131 = vadd.f32 0.0, %v1130
    %v1132 = vpop.f32.mrb[0].mxu0
    %v1133 = vpop.f32.mrb[0].mxu0
    %1134 = vdwg.mxu0
    %v1135 = vadd.f32 %v1048, %v1088
    %v1136 = vadd.f32 %v1049, %v1090
    %v1137 = vadd.f32 %v1050, %v1129
    %v1138 = vadd.f32 %v1051, %v1131
    %v1139 = vxor.u32 %v1043, 2147483648
    %v1140 = vmul.f32 %v1139, 1.442695
    %v1141 = vpow.pop %v1140
    %v1142 = vadd.f32 %v1141, 1.0
    %v1143 = vrcp.pop %v1142
    %v1144 = vmul.f32 1.0, %v1143
    %v1145 = vxor.u32 %v1044, 2147483648
    %v1146 = vmul.f32 %v1145, 1.442695
    %v1147 = vpow.pop %v1146
    %v1148 = vadd.f32 %v1147, 1.0
    %v1149 = vrcp.pop %v1148
    %v1150 = vmul.f32 1.0, %v1149
    %v1151 = vtanh.pop %v1045
    %v1152 = vxor.u32 %v1046, 2147483648
    %v1153 = vmul.f32 %v1152, 1.442695
    %v1154 = vpow.pop %v1153
    %v1155 = vadd.f32 %v1154, 1.0
    %v1156 = vrcp.pop %v1155
    %v1157 = vmul.f32 1.0, %v1156
    %v1158 = vxor.u32 %v1135, 2147483648
    %v1159 = vmul.f32 %v1158, 1.442695
    %v1160 = vpow.pop %v1159
    %v1161 = vadd.f32 %v1160, 1.0
    %v1162 = vrcp.pop %v1161
    %v1163 = vmul.f32 1.0, %v1162
    %v1164 = vxor.u32 %v1136, 2147483648
    %v1165 = vmul.f32 %v1164, 1.442695
    %v1166 = vpow.pop %v1165
    %v1167 = vadd.f32 %v1166, 1.0
    %v1168 = vrcp.pop %v1167
    %v1169 = vmul.f32 1.0, %v1168
    %v1170 = vtanh.pop %v1137
    %v1171 = vxor.u32 %v1138, 2147483648
    %v1172 = vmul.f32 %v1171, 1.442695
    %v1173 = vpow.pop %v1172
    %v1174 = vadd.f32 %v1173, 1.0
    %v1175 = vrcp.pop %v1174
    %v1176 = vmul.f32 1.0, %v1175
    %v1177 = vmul.f32 %v1150, %v943
    %v1178 = vmul.f32 %v1144, %v1151
    %v1179 = vadd.f32 %v1177, %v1178
    %v1180 = vtanh.pop %v1179
    %v1181 = vmul.f32 %v1157, %v1180
    %v1182 = vmul.f32 %v1169, %v948
    %v1183 = vmul.f32 %v1163, %v1170
    %v1184 = vadd.f32 %v1182, %v1183
    %v1185 = vtanh.pop %v1184
    %v1186 = vmul.f32 %v1176, %v1185
    %s1187 = scalar_lea.vmem [#allocation14], 16
    %1188 = vst [vmem:[%s1187] sm:$0xff] %v1181
    %s1189 = scalar_lea.vmem [#allocation15], 40
    %1190 = vst [vmem:[%s1189] sm:$0xff] %v1186
    %s1191 = scalar_lea.vmem [#allocation6], 96
    %v1192 = vld [vmem:[%s1191] sm:$0xff]
    %v1193 = vld [vmem:[%s1191 + $0x8] sm:$0xff]
    %v1194 = vld [vmem:[%s1191 + $0x10] sm:$0xff]
    %v1195 = vld [vmem:[%s1191 + $0x18] sm:$0xff]
    %v1196 = vpack.c.bf16 %v1181, %v1181
    %1197 = vmatprep.subr.bf16.mxu0 %v267
    %1198 = vmatpush1.bf16.msra.mxu0 %v266
    %1199 = vmatprep.subr.bf16.mxu0 %v271
    %1200 = vmatpush1.bf16.msra.mxu0 %v270
    %1201 = vmatprep.subr.bf16.mxu0 %v275
    %1202 = vmatpush1.bf16.msra.mxu0 %v274
    %1203 = vmatprep.subr.bf16.mxu0 %v279
    %1204 = vmatpush1.bf16.msra.mxu0 %v278
    %1205 = vmatprep.subr.bf16.mxu0 %v283
    %1206 = vmatpush1.bf16.msra.mxu0 %v282
    %1207 = vmatprep.subr.bf16.mxu0 %v287
    %1208 = vmatpush1.bf16.msra.mxu0 %v286
    %1209 = vmatprep.subr.bf16.mxu0 %v291
    %1210 = vmatpush1.bf16.msra.mxu0 %v290
    %1211 = vmatprep.subr.bf16.mxu0 %v295
    %1212 = vmatpush1.bf16.msra.mxu0 %v294
    %1213 = vmatprep.subr.bf16.mxu0 0
    %1214 = vmatpush1.bf16.msra.mxu0 0
    %1215 = vmatprep.subr.bf16.mxu0 0
    %1216 = vmatpush1.bf16.msra.mxu0 0
    %1217 = vmatprep.subr.bf16.mxu0 0
    %1218 = vmatpush1.bf16.msra.mxu0 0
    %1219 = vmatprep.subr.bf16.mxu0 0
    %1220 = vmatpush1.bf16.msra.mxu0 0
    %1221 = vmatprep.subr.bf16.mxu0 0
    %1222 = vmatpush1.bf16.msra.mxu0 0
    %1223 = vmatprep.subr.bf16.mxu0 0
    %1224 = vmatpush1.bf16.msra.mxu0 0
    %1225 = vmatprep.subr.bf16.mxu0 0
    %1226 = vmatpush1.bf16.msra.mxu0 0
    %1227 = vmatprep.subr.bf16.mxu0 0
    %1228 = vmatpush1.bf16.msra.mxu0 0
    %1229 = vmatprep.mubr.bf16.mxu0 0
    %1230 = vmatmul.mubr.bf16.gmra.mrb[0].mxu0 %v1196
    %v1231 = vpop.f32.mrb[0].mxu0
    %v1232 = vadd.f32 0.0, %v1231
    %v1233 = vpop.f32.mrb[0].mxu0
    %v1234 = vadd.f32 0.0, %v1233
    %v1235 = vpop.f32.mrb[0].mxu0
    %v1236 = vpop.f32.mrb[0].mxu0
    %1237 = vdwg.mxu0
    %1238 = vmatprep.subr.bf16.mxu0 %v269
    %1239 = vmatpush1.bf16.msra.mxu0 %v268
    %1240 = vmatprep.subr.bf16.mxu0 %v273
    %1241 = vmatpush1.bf16.msra.mxu0 %v272
    %1242 = vmatprep.subr.bf16.mxu0 %v277
    %1243 = vmatpush1.bf16.msra.mxu0 %v276
    %1244 = vmatprep.subr.bf16.mxu0 %v281
    %1245 = vmatpush1.bf16.msra.mxu0 %v280
    %1246 = vmatprep.subr.bf16.mxu0 %v285
    %1247 = vmatpush1.bf16.msra.mxu0 %v284
    %1248 = vmatprep.subr.bf16.mxu0 %v289
    %1249 = vmatpush1.bf16.msra.mxu0 %v288
    %1250 = vmatprep.subr.bf16.mxu0 %v293
    %1251 = vmatpush1.bf16.msra.mxu0 %v292
    %1252 = vmatprep.subr.bf16.mxu0 %v297
    %1253 = vmatpush1.bf16.msra.mxu0 %v296
    %1254 = vmatprep.subr.bf16.mxu0 0
    %1255 = vmatpush1.bf16.msra.mxu0 0
    %1256 = vmatprep.subr.bf16.mxu0 0
    %1257 = vmatpush1.bf16.msra.mxu0 0
    %1258 = vmatprep.subr.bf16.mxu0 0
    %1259 = vmatpush1.bf16.msra.mxu0 0
    %1260 = vmatprep.subr.bf16.mxu0 0
    %1261 = vmatpush1.bf16.msra.mxu0 0
    %1262 = vmatprep.subr.bf16.mxu0 0
    %1263 = vmatpush1.bf16.msra.mxu0 0
    %1264 = vmatprep.subr.bf16.mxu0 0
    %1265 = vmatpush1.bf16.msra.mxu0 0
    %1266 = vmatprep.subr.bf16.mxu0 0
    %1267 = vmatpush1.bf16.msra.mxu0 0
    %1268 = vmatprep.subr.bf16.mxu0 0
    %1269 = vmatpush1.bf16.msra.mxu0 0
    %1270 = vmatprep.mubr.bf16.mxu0 0
    %1271 = vmatmul.mubr.bf16.gmra.mrb[0].mxu0 %v1196
    %v1272 = vpop.f32.mrb[0].mxu0
    %v1273 = vadd.f32 0.0, %v1272
    %v1274 = vpop.f32.mrb[0].mxu0
    %v1275 = vadd.f32 0.0, %v1274
    %v1276 = vpop.f32.mrb[0].mxu0
    %v1277 = vpop.f32.mrb[0].mxu0
    %1278 = vdwg.mxu0
    %v1279 = vadd.f32 %v1192, %v1232
    %v1280 = vadd.f32 %v1193, %v1234
    %v1281 = vadd.f32 %v1194, %v1273
    %v1282 = vadd.f32 %v1195, %v1275
    %s1283 = scalar_lea.vmem [#allocation9], 128
    %v1284 = vld [vmem:[%s1283] sm:$0xff]
    %v1285 = vld [vmem:[%s1283 + $0x8] sm:$0xff]
    %v1286 = vld [vmem:[%s1283 + $0x10] sm:$0xff]
    %v1287 = vld [vmem:[%s1283 + $0x18] sm:$0xff]
    %v1288 = vpack.c.bf16 %v1186, %v1186
    %1289 = vmatprep.subr.bf16.mxu0 %v519
    %1290 = vmatpush1.bf16.msra.mxu0 %v518
    %1291 = vmatprep.subr.bf16.mxu0 %v523
    %1292 = vmatpush1.bf16.msra.mxu0 %v522
    %1293 = vmatprep.subr.bf16.mxu0 %v527
    %1294 = vmatpush1.bf16.msra.mxu0 %v526
    %1295 = vmatprep.subr.bf16.mxu0 %v531
    %1296 = vmatpush1.bf16.msra.mxu0 %v530
    %1297 = vmatprep.subr.bf16.mxu0 %v535
    %1298 = vmatpush1.bf16.msra.mxu0 %v534
    %1299 = vmatprep.subr.bf16.mxu0 %v539
    %1300 = vmatpush1.bf16.msra.mxu0 %v538
    %1301 = vmatprep.subr.bf16.mxu0 %v543
    %1302 = vmatpush1.bf16.msra.mxu0 %v542
    %1303 = vmatprep.subr.bf16.mxu0 %v547
    %1304 = vmatpush1.bf16.msra.mxu0 %v546
    %1305 = vmatprep.subr.bf16.mxu0 0
    %1306 = vmatpush1.bf16.msra.mxu0 0
    %1307 = vmatprep.subr.bf16.mxu0 0
    %1308 = vmatpush1.bf16.msra.mxu0 0
    %1309 = vmatprep.subr.bf16.mxu0 0
    %1310 = vmatpush1.bf16.msra.mxu0 0
    %1311 = vmatprep.subr.bf16.mxu0 0
    %1312 = vmatpush1.bf16.msra.mxu0 0
    %1313 = vmatprep.subr.bf16.mxu0 0
    %1314 = vmatpush1.bf16.msra.mxu0 0
    %1315 = vmatprep.subr.bf16.mxu0 0
    %1316 = vmatpush1.bf16.msra.mxu0 0
    %1317 = vmatprep.subr.bf16.mxu0 0
    %1318 = vmatpush1.bf16.msra.mxu0 0
    %1319 = vmatprep.subr.bf16.mxu0 0
    %1320 = vmatpush1.bf16.msra.mxu0 0
    %1321 = vmatprep.mubr.bf16.mxu0 0
    %1322 = vmatmul.mubr.bf16.gmra.mrb[0].mxu0 %v1288
    %v1323 = vpop.f32.mrb[0].mxu0
    %v1324 = vadd.f32 0.0, %v1323
    %v1325 = vpop.f32.mrb[0].mxu0
    %v1326 = vadd.f32 0.0, %v1325
    %v1327 = vpop.f32.mrb[0].mxu0
    %v1328 = vpop.f32.mrb[0].mxu0
    %1329 = vdwg.mxu0
    %1330 = vmatprep.subr.bf16.mxu0 %v521
    %1331 = vmatpush1.bf16.msra.mxu0 %v520
    %1332 = vmatprep.subr.bf16.mxu0 %v525
    %1333 = vmatpush1.bf16.msra.mxu0 %v524
    %1334 = vmatprep.subr.bf16.mxu0 %v529
    %1335 = vmatpush1.bf16.msra.mxu0 %v528
    %1336 = vmatprep.subr.bf16.mxu0 %v533
    %1337 = vmatpush1.bf16.msra.mxu0 %v532
    %1338 = vmatprep.subr.bf16.mxu0 %v537
    %1339 = vmatpush1.bf16.msra.mxu0 %v536
    %1340 = vmatprep.subr.bf16.mxu0 %v541
    %1341 = vmatpush1.bf16.msra.mxu0 %v540
    %1342 = vmatprep.subr.bf16.mxu0 %v545
    %1343 = vmatpush1.bf16.msra.mxu0 %v544
    %1344 = vmatprep.subr.bf16.mxu0 %v549
    %1345 = vmatpush1.bf16.msra.mxu0 %v548
    %1346 = vmatprep.subr.bf16.mxu0 0
    %1347 = vmatpush1.bf16.msra.mxu0 0
    %1348 = vmatprep.subr.bf16.mxu0 0
    %1349 = vmatpush1.bf16.msra.mxu0 0
    %1350 = vmatprep.subr.bf16.mxu0 0
    %1351 = vmatpush1.bf16.msra.mxu0 0
    %1352 = vmatprep.subr.bf16.mxu0 0
    %1353 = vmatpush1.bf16.msra.mxu0 0
    %1354 = vmatprep.subr.bf16.mxu0 0
    %1355 = vmatpush1.bf16.msra.mxu0 0
    %1356 = vmatprep.subr.bf16.mxu0 0
    %1357 = vmatpush1.bf16.msra.mxu0 0
    %1358 = vmatprep.subr.bf16.mxu0 0
    %1359 = vmatpush1.bf16.msra.mxu0 0
    %1360 = vmatprep.subr.bf16.mxu0 0
    %1361 = vmatpush1.bf16.msra.mxu0 0
    %1362 = vmatprep.mubr.bf16.mxu0 0
    %1363 = vmatmul.mubr.bf16.gmra.mrb[0].mxu0 %v1288
    %v1364 = vpop.f32.mrb[0].mxu0
    %v1365 = vadd.f32 0.0, %v1364
    %v1366 = vpop.f32.mrb[0].mxu0
    %v1367 = vadd.f32 0.0, %v1366
    %v1368 = vpop.f32.mrb[0].mxu0
    %v1369 = vpop.f32.mrb[0].mxu0
    %1370 = vdwg.mxu0
    %v1371 = vadd.f32 %v1284, %v1324
    %v1372 = vadd.f32 %v1285, %v1326
    %v1373 = vadd.f32 %v1286, %v1365
    %v1374 = vadd.f32 %v1287, %v1367
    %v1375 = vxor.u32 %v1279, 2147483648
    %v1376 = vmul.f32 %v1375, 1.442695
    %v1377 = vpow.pop %v1376
    %v1378 = vadd.f32 %v1377, 1.0
    %v1379 = vrcp.pop %v1378
    %v1380 = vmul.f32 1.0, %v1379
    %v1381 = vxor.u32 %v1280, 2147483648
    %v1382 = vmul.f32 %v1381, 1.442695
    %v1383 = vpow.pop %v1382
    %v1384 = vadd.f32 %v1383, 1.0
    %v1385 = vrcp.pop %v1384
    %v1386 = vmul.f32 1.0, %v1385
    %v1387 = vtanh.pop %v1281
    %v1388 = vxor.u32 %v1282, 2147483648
    %v1389 = vmul.f32 %v1388, 1.442695
    %v1390 = vpow.pop %v1389
    %v1391 = vadd.f32 %v1390, 1.0
    %v1392 = vrcp.pop %v1391
    %v1393 = vmul.f32 1.0, %v1392
    %v1394 = vxor.u32 %v1371, 2147483648
    %v1395 = vmul.f32 %v1394, 1.442695
    %v1396 = vpow.pop %v1395
    %v1397 = vadd.f32 %v1396, 1.0
    %v1398 = vrcp.pop %v1397
    %v1399 = vmul.f32 1.0, %v1398
    %v1400 = vxor.u32 %v1372, 2147483648
    %v1401 = vmul.f32 %v1400, 1.442695
    %v1402 = vpow.pop %v1401
    %v1403 = vadd.f32 %v1402, 1.0
    %v1404 = vrcp.pop %v1403
    %v1405 = vmul.f32 1.0, %v1404
    %v1406 = vtanh.pop %v1373
    %v1407 = vxor.u32 %v1374, 2147483648
    %v1408 = vmul.f32 %v1407, 1.442695
    %v1409 = vpow.pop %v1408
    %v1410 = vadd.f32 %v1409, 1.0
    %v1411 = vrcp.pop %v1410
    %v1412 = vmul.f32 1.0, %v1411
    %v1413 = vmul.f32 %v1386, %v1179
    %v1414 = vmul.f32 %v1380, %v1387
    %v1415 = vadd.f32 %v1413, %v1414
    %v1416 = vtanh.pop %v1415
    %v1417 = vmul.f32 %v1393, %v1416
    %v1418 = vmul.f32 %v1405, %v1184
    %v1419 = vmul.f32 %v1399, %v1406
    %v1420 = vadd.f32 %v1418, %v1419
    %v1421 = vtanh.pop %v1420
    %v1422 = vmul.f32 %v1412, %v1421
    %s1423 = scalar_lea.vmem [#allocation14], 24
    %1424 = vst [vmem:[%s1423] sm:$0xff] %v1417
    %s1425 = scalar_lea.vmem [#allocation15], 32
    %1426 = vst [vmem:[%s1425] sm:$0xff] %v1422
    %s1427 = scalar_lea.vmem [#allocation6], 128
    %v1428 = vld [vmem:[%s1427] sm:$0xff]
    %v1429 = vld [vmem:[%s1427 + $0x8] sm:$0xff]
    %v1430 = vld [vmem:[%s1427 + $0x10] sm:$0xff]
    %v1431 = vld [vmem:[%s1427 + $0x18] sm:$0xff]
    %v1432 = vpack.c.bf16 %v1417, %v1417
    %1433 = vmatprep.subr.bf16.mxu0 %v267
    %1434 = vmatpush1.bf16.msra.mxu0 %v266
    %1435 = vmatprep.subr.bf16.mxu0 %v271
    %1436 = vmatpush1.bf16.msra.mxu0 %v270
    %1437 = vmatprep.subr.bf16.mxu0 %v275
    %1438 = vmatpush1.bf16.msra.mxu0 %v274
    %1439 = vmatprep.subr.bf16.mxu0 %v279
    %1440 = vmatpush1.bf16.msra.mxu0 %v278
    %1441 = vmatprep.subr.bf16.mxu0 %v283
    %1442 = vmatpush1.bf16.msra.mxu0 %v282
    %1443 = vmatprep.subr.bf16.mxu0 %v287
    %1444 = vmatpush1.bf16.msra.mxu0 %v286
    %1445 = vmatprep.subr.bf16.mxu0 %v291
    %1446 = vmatpush1.bf16.msra.mxu0 %v290
    %1447 = vmatprep.subr.bf16.mxu0 %v295
    %1448 = vmatpush1.bf16.msra.mxu0 %v294
    %1449 = vmatprep.subr.bf16.mxu0 0
    %1450 = vmatpush1.bf16.msra.mxu0 0
    %1451 = vmatprep.subr.bf16.mxu0 0
    %1452 = vmatpush1.bf16.msra.mxu0 0
    %1453 = vmatprep.subr.bf16.mxu0 0
    %1454 = vmatpush1.bf16.msra.mxu0 0
    %1455 = vmatprep.subr.bf16.mxu0 0
    %1456 = vmatpush1.bf16.msra.mxu0 0
    %1457 = vmatprep.subr.bf16.mxu0 0
    %1458 = vmatpush1.bf16.msra.mxu0 0
    %1459 = vmatprep.subr.bf16.mxu0 0
    %1460 = vmatpush1.bf16.msra.mxu0 0
    %1461 = vmatprep.subr.bf16.mxu0 0
    %1462 = vmatpush1.bf16.msra.mxu0 0
    %1463 = vmatprep.subr.bf16.mxu0 0
    %1464 = vmatpush1.bf16.msra.mxu0 0
    %1465 = vmatprep.mubr.bf16.mxu0 0
    %1466 = vmatmul.mubr.bf16.gmra.mrb[0].mxu0 %v1432
    %v1467 = vpop.f32.mrb[0].mxu0
    %v1468 = vadd.f32 0.0, %v1467
    %v1469 = vpop.f32.mrb[0].mxu0
    %v1470 = vadd.f32 0.0, %v1469
    %v1471 = vpop.f32.mrb[0].mxu0
    %v1472 = vpop.f32.mrb[0].mxu0
    %1473 = vdwg.mxu0
    %1474 = vmatprep.subr.bf16.mxu0 %v269
    %1475 = vmatpush1.bf16.msra.mxu0 %v268
    %1476 = vmatprep.subr.bf16.mxu0 %v273
    %1477 = vmatpush1.bf16.msra.mxu0 %v272
    %1478 = vmatprep.subr.bf16.mxu0 %v277
    %1479 = vmatpush1.bf16.msra.mxu0 %v276
    %1480 = vmatprep.subr.bf16.mxu0 %v281
    %1481 = vmatpush1.bf16.msra.mxu0 %v280
    %1482 = vmatprep.subr.bf16.mxu0 %v285
    %1483 = vmatpush1.bf16.msra.mxu0 %v284
    %1484 = vmatprep.subr.bf16.mxu0 %v289
    %1485 = vmatpush1.bf16.msra.mxu0 %v288
    %1486 = vmatprep.subr.bf16.mxu0 %v293
    %1487 = vmatpush1.bf16.msra.mxu0 %v292
    %1488 = vmatprep.subr.bf16.mxu0 %v297
    %1489 = vmatpush1.bf16.msra.mxu0 %v296
    %1490 = vmatprep.subr.bf16.mxu0 0
    %1491 = vmatpush1.bf16.msra.mxu0 0
    %1492 = vmatprep.subr.bf16.mxu0 0
    %1493 = vmatpush1.bf16.msra.mxu0 0
    %1494 = vmatprep.subr.bf16.mxu0 0
    %1495 = vmatpush1.bf16.msra.mxu0 0
    %1496 = vmatprep.subr.bf16.mxu0 0
    %1497 = vmatpush1.bf16.msra.mxu0 0
    %1498 = vmatprep.subr.bf16.mxu0 0
    %1499 = vmatpush1.bf16.msra.mxu0 0
    %1500 = vmatprep.subr.bf16.mxu0 0
    %1501 = vmatpush1.bf16.msra.mxu0 0
    %1502 = vmatprep.subr.bf16.mxu0 0
    %1503 = vmatpush1.bf16.msra.mxu0 0
    %1504 = vmatprep.subr.bf16.mxu0 0
    %1505 = vmatpush1.bf16.msra.mxu0 0
    %1506 = vmatprep.mubr.bf16.mxu0 0
    %1507 = vmatmul.mubr.bf16.gmra.mrb[0].mxu0 %v1432
    %v1508 = vpop.f32.mrb[0].mxu0
    %v1509 = vadd.f32 0.0, %v1508
    %v1510 = vpop.f32.mrb[0].mxu0
    %v1511 = vadd.f32 0.0, %v1510
    %v1512 = vpop.f32.mrb[0].mxu0
    %v1513 = vpop.f32.mrb[0].mxu0
    %1514 = vdwg.mxu0
    %v1515 = vadd.f32 %v1428, %v1468
    %v1516 = vadd.f32 %v1429, %v1470
    %v1517 = vadd.f32 %v1430, %v1509
    %v1518 = vadd.f32 %v1431, %v1511
    %s1519 = scalar_lea.vmem [#allocation9], 96
    %v1520 = vld [vmem:[%s1519] sm:$0xff]
    %v1521 = vld [vmem:[%s1519 + $0x8] sm:$0xff]
    %v1522 = vld [vmem:[%s1519 + $0x10] sm:$0xff]
    %v1523 = vld [vmem:[%s1519 + $0x18] sm:$0xff]
    %v1524 = vpack.c.bf16 %v1422, %v1422
    %1525 = vmatprep.subr.bf16.mxu0 %v519
    %1526 = vmatpush1.bf16.msra.mxu0 %v518
    %1527 = vmatprep.subr.bf16.mxu0 %v523
    %1528 = vmatpush1.bf16.msra.mxu0 %v522
    %1529 = vmatprep.subr.bf16.mxu0 %v527
    %1530 = vmatpush1.bf16.msra.mxu0 %v526
    %1531 = vmatprep.subr.bf16.mxu0 %v531
    %1532 = vmatpush1.bf16.msra.mxu0 %v530
    %1533 = vmatprep.subr.bf16.mxu0 %v535
    %1534 = vmatpush1.bf16.msra.mxu0 %v534
    %1535 = vmatprep.subr.bf16.mxu0 %v539
    %1536 = vmatpush1.bf16.msra.mxu0 %v538
    %1537 = vmatprep.subr.bf16.mxu0 %v543
    %1538 = vmatpush1.bf16.msra.mxu0 %v542
    %1539 = vmatprep.subr.bf16.mxu0 %v547
    %1540 = vmatpush1.bf16.msra.mxu0 %v546
    %1541 = vmatprep.subr.bf16.mxu0 0
    %1542 = vmatpush1.bf16.msra.mxu0 0
    %1543 = vmatprep.subr.bf16.mxu0 0
    %1544 = vmatpush1.bf16.msra.mxu0 0
    %1545 = vmatprep.subr.bf16.mxu0 0
    %1546 = vmatpush1.bf16.msra.mxu0 0
    %1547 = vmatprep.subr.bf16.mxu0 0
    %1548 = vmatpush1.bf16.msra.mxu0 0
    %1549 = vmatprep.subr.bf16.mxu0 0
    %1550 = vmatpush1.bf16.msra.mxu0 0
    %1551 = vmatprep.subr.bf16.mxu0 0
    %1552 = vmatpush1.bf16.msra.mxu0 0
    %1553 = vmatprep.subr.bf16.mxu0 0
    %1554 = vmatpush1.bf16.msra.mxu0 0
    %1555 = vmatprep.subr.bf16.mxu0 0
    %1556 = vmatpush1.bf16.msra.mxu0 0
    %1557 = vmatprep.mubr.bf16.mxu0 0
    %1558 = vmatmul.mubr.bf16.gmra.mrb[0].mxu0 %v1524
    %v1559 = vpop.f32.mrb[0].mxu0
    %v1560 = vadd.f32 0.0, %v1559
    %v1561 = vpop.f32.mrb[0].mxu0
    %v1562 = vadd.f32 0.0, %v1561
    %v1563 = vpop.f32.mrb[0].mxu0
    %v1564 = vpop.f32.mrb[0].mxu0
    %1565 = vdwg.mxu0
    %1566 = vmatprep.subr.bf16.mxu0 %v521
    %1567 = vmatpush1.bf16.msra.mxu0 %v520
    %1568 = vmatprep.subr.bf16.mxu0 %v525
    %1569 = vmatpush1.bf16.msra.mxu0 %v524
    %1570 = vmatprep.subr.bf16.mxu0 %v529
    %1571 = vmatpush1.bf16.msra.mxu0 %v528
    %1572 = vmatprep.subr.bf16.mxu0 %v533
    %1573 = vmatpush1.bf16.msra.mxu0 %v532
    %1574 = vmatprep.subr.bf16.mxu0 %v537
    %1575 = vmatpush1.bf16.msra.mxu0 %v536
    %1576 = vmatprep.subr.bf16.mxu0 %v541
    %1577 = vmatpush1.bf16.msra.mxu0 %v540
    %1578 = vmatprep.subr.bf16.mxu0 %v545
    %1579 = vmatpush1.bf16.msra.mxu0 %v544
    %1580 = vmatprep.subr.bf16.mxu0 %v549
    %1581 = vmatpush1.bf16.msra.mxu0 %v548
    %1582 = vmatprep.subr.bf16.mxu0 0
    %1583 = vmatpush1.bf16.msra.mxu0 0
    %1584 = vmatprep.subr.bf16.mxu0 0
    %1585 = vmatpush1.bf16.msra.mxu0 0
    %1586 = vmatprep.subr.bf16.mxu0 0
    %1587 = vmatpush1.bf16.msra.mxu0 0
    %1588 = vmatprep.subr.bf16.mxu0 0
    %1589 = vmatpush1.bf16.msra.mxu0 0
    %1590 = vmatprep.subr.bf16.mxu0 0
    %1591 = vmatpush1.bf16.msra.mxu0 0
    %1592 = vmatprep.subr.bf16.mxu0 0
    %1593 = vmatpush1.bf16.msra.mxu0 0
    %1594 = vmatprep.subr.bf16.mxu0 0
    %1595 = vmatpush1.bf16.msra.mxu0 0
    %1596 = vmatprep.subr.bf16.mxu0 0
    %1597 = vmatpush1.bf16.msra.mxu0 0
    %1598 = vmatprep.mubr.bf16.mxu0 0
    %1599 = vmatmul.mubr.bf16.gmra.mrb[0].mxu0 %v1524
    %v1600 = vpop.f32.mrb[0].mxu0
    %v1601 = vadd.f32 0.0, %v1600
    %v1602 = vpop.f32.mrb[0].mxu0
    %v1603 = vadd.f32 0.0, %v1602
    %v1604 = vpop.f32.mrb[0].mxu0
    %v1605 = vpop.f32.mrb[0].mxu0
    %1606 = vdwg.mxu0
    %v1607 = vadd.f32 %v1520, %v1560
    %v1608 = vadd.f32 %v1521, %v1562
    %v1609 = vadd.f32 %v1522, %v1601
    %v1610 = vadd.f32 %v1523, %v1603
    %v1611 = vxor.u32 %v1515, 2147483648
    %v1612 = vmul.f32 %v1611, 1.442695
    %v1613 = vpow.pop %v1612
    %v1614 = vadd.f32 %v1613, 1.0
    %v1615 = vrcp.pop %v1614
    %v1616 = vmul.f32 1.0, %v1615
    %v1617 = vxor.u32 %v1516, 2147483648
    %v1618 = vmul.f32 %v1617, 1.442695
    %v1619 = vpow.pop %v1618
    %v1620 = vadd.f32 %v1619, 1.0
    %v1621 = vrcp.pop %v1620
    %v1622 = vmul.f32 1.0, %v1621
    %v1623 = vtanh.pop %v1517
    %v1624 = vxor.u32 %v1518, 2147483648
    %v1625 = vmul.f32 %v1624, 1.442695
    %v1626 = vpow.pop %v1625
    %v1627 = vadd.f32 %v1626, 1.0
    %v1628 = vrcp.pop %v1627
    %v1629 = vmul.f32 1.0, %v1628
    %v1630 = vxor.u32 %v1607, 2147483648
    %v1631 = vmul.f32 %v1630, 1.442695
    %v1632 = vpow.pop %v1631
    %v1633 = vadd.f32 %v1632, 1.0
    %v1634 = vrcp.pop %v1633
    %v1635 = vmul.f32 1.0, %v1634
    %v1636 = vxor.u32 %v1608, 2147483648
    %v1637 = vmul.f32 %v1636, 1.442695
    %v1638 = vpow.pop %v1637
    %v1639 = vadd.f32 %v1638, 1.0
    %v1640 = vrcp.pop %v1639
    %v1641 = vmul.f32 1.0, %v1640
    %v1642 = vtanh.pop %v1609
    %v1643 = vxor.u32 %v1610, 2147483648
    %v1644 = vmul.f32 %v1643, 1.442695
    %v1645 = vpow.pop %v1644
    %v1646 = vadd.f32 %v1645, 1.0
    %v1647 = vrcp.pop %v1646
    %v1648 = vmul.f32 1.0, %v1647
    %v1649 = vmul.f32 %v1622, %v1415
    %v1650 = vmul.f32 %v1616, %v1623
    %v1651 = vadd.f32 %v1649, %v1650
    %v1652 = vtanh.pop %v1651
    %v1653 = vmul.f32 %v1629, %v1652
    %v1654 = vmul.f32 %v1641, %v1420
    %v1655 = vmul.f32 %v1635, %v1642
    %v1656 = vadd.f32 %v1654, %v1655
    %v1657 = vtanh.pop %v1656
    %v1658 = vmul.f32 %v1648, %v1657
    %s1659 = scalar_lea.vmem [#allocation14], 32
    %1660 = vst [vmem:[%s1659] sm:$0xff] %v1653
    %s1661 = scalar_lea.vmem [#allocation15], 24
    %1662 = vst [vmem:[%s1661] sm:$0xff] %v1658
    %s1663 = scalar_lea.vmem [#allocation6], 160
    %v1664 = vld [vmem:[%s1663] sm:$0xff]
    %v1665 = vld [vmem:[%s1663 + $0x8] sm:$0xff]
    %v1666 = vld [vmem:[%s1663 + $0x10] sm:$0xff]
    %v1667 = vld [vmem:[%s1663 + $0x18] sm:$0xff]
    %v1668 = vpack.c.bf16 %v1653, %v1653
    %1669 = vmatprep.subr.bf16.mxu0 %v267
    %1670 = vmatpush1.bf16.msra.mxu0 %v266
    %1671 = vmatprep.subr.bf16.mxu0 %v271
    %1672 = vmatpush1.bf16.msra.mxu0 %v270
    %1673 = vmatprep.subr.bf16.mxu0 %v275
    %1674 = vmatpush1.bf16.msra.mxu0 %v274
    %1675 = vmatprep.subr.bf16.mxu0 %v279
    %1676 = vmatpush1.bf16.msra.mxu0 %v278
    %1677 = vmatprep.subr.bf16.mxu0 %v283
    %1678 = vmatpush1.bf16.msra.mxu0 %v282
    %1679 = vmatprep.subr.bf16.mxu0 %v287
    %1680 = vmatpush1.bf16.msra.mxu0 %v286
    %1681 = vmatprep.subr.bf16.mxu0 %v291
    %1682 = vmatpush1.bf16.msra.mxu0 %v290
    %1683 = vmatprep.subr.bf16.mxu0 %v295
    %1684 = vmatpush1.bf16.msra.mxu0 %v294
    %1685 = vmatprep.subr.bf16.mxu0 0
    %1686 = vmatpush1.bf16.msra.mxu0 0
    %1687 = vmatprep.subr.bf16.mxu0 0
    %1688 = vmatpush1.bf16.msra.mxu0 0
    %1689 = vmatprep.subr.bf16.mxu0 0
    %1690 = vmatpush1.bf16.msra.mxu0 0
    %1691 = vmatprep.subr.bf16.mxu0 0
    %1692 = vmatpush1.bf16.msra.mxu0 0
    %1693 = vmatprep.subr.bf16.mxu0 0
    %1694 = vmatpush1.bf16.msra.mxu0 0
    %1695 = vmatprep.subr.bf16.mxu0 0
    %1696 = vmatpush1.bf16.msra.mxu0 0
    %1697 = vmatprep.subr.bf16.mxu0 0
    %1698 = vmatpush1.bf16.msra.mxu0 0
    %1699 = vmatprep.subr.bf16.mxu0 0
    %1700 = vmatpush1.bf16.msra.mxu0 0
    %1701 = vmatprep.mubr.bf16.mxu0 0
    %1702 = vmatmul.mubr.bf16.gmra.mrb[0].mxu0 %v1668
    %v1703 = vpop.f32.mrb[0].mxu0
    %v1704 = vadd.f32 0.0, %v1703
    %v1705 = vpop.f32.mrb[0].mxu0
    %v1706 = vadd.f32 0.0, %v1705
    %v1707 = vpop.f32.mrb[0].mxu0
    %v1708 = vpop.f32.mrb[0].mxu0
    %1709 = vdwg.mxu0
    %1710 = vmatprep.subr.bf16.mxu0 %v269
    %1711 = vmatpush1.bf16.msra.mxu0 %v268
    %1712 = vmatprep.subr.bf16.mxu0 %v273
    %1713 = vmatpush1.bf16.msra.mxu0 %v272
    %1714 = vmatprep.subr.bf16.mxu0 %v277
    %1715 = vmatpush1.bf16.msra.mxu0 %v276
    %1716 = vmatprep.subr.bf16.mxu0 %v281
    %1717 = vmatpush1.bf16.msra.mxu0 %v280
    %1718 = vmatprep.subr.bf16.mxu0 %v285
    %1719 = vmatpush1.bf16.msra.mxu0 %v284
    %1720 = vmatprep.subr.bf16.mxu0 %v289
    %1721 = vmatpush1.bf16.msra.mxu0 %v288
    %1722 = vmatprep.subr.bf16.mxu0 %v293
    %1723 = vmatpush1.bf16.msra.mxu0 %v292
    %1724 = vmatprep.subr.bf16.mxu0 %v297
    %1725 = vmatpush1.bf16.msra.mxu0 %v296
    %1726 = vmatprep.subr.bf16.mxu0 0
    %1727 = vmatpush1.bf16.msra.mxu0 0
    %1728 = vmatprep.subr.bf16.mxu0 0
    %1729 = vmatpush1.bf16.msra.mxu0 0
    %1730 = vmatprep.subr.bf16.mxu0 0
    %1731 = vmatpush1.bf16.msra.mxu0 0
    %1732 = vmatprep.subr.bf16.mxu0 0
    %1733 = vmatpush1.bf16.msra.mxu0 0
    %1734 = vmatprep.subr.bf16.mxu0 0
    %1735 = vmatpush1.bf16.msra.mxu0 0
    %1736 = vmatprep.subr.bf16.mxu0 0
    %1737 = vmatpush1.bf16.msra.mxu0 0
    %1738 = vmatprep.subr.bf16.mxu0 0
    %1739 = vmatpush1.bf16.msra.mxu0 0
    %1740 = vmatprep.subr.bf16.mxu0 0
    %1741 = vmatpush1.bf16.msra.mxu0 0
    %1742 = vmatprep.mubr.bf16.mxu0 0
    %1743 = vmatmul.mubr.bf16.gmra.mrb[0].mxu0 %v1668
    %v1744 = vpop.f32.mrb[0].mxu0
    %v1745 = vadd.f32 0.0, %v1744
    %v1746 = vpop.f32.mrb[0].mxu0
    %v1747 = vadd.f32 0.0, %v1746
    %v1748 = vpop.f32.mrb[0].mxu0
    %v1749 = vpop.f32.mrb[0].mxu0
    %1750 = vdwg.mxu0
    %v1751 = vadd.f32 %v1664, %v1704
    %v1752 = vadd.f32 %v1665, %v1706
    %v1753 = vadd.f32 %v1666, %v1745
    %v1754 = vadd.f32 %v1667, %v1747
    %s1755 = scalar_lea.vmem [#allocation9], 64
    %v1756 = vld [vmem:[%s1755] sm:$0xff]
    %v1757 = vld [vmem:[%s1755 + $0x8] sm:$0xff]
    %v1758 = vld [vmem:[%s1755 + $0x10] sm:$0xff]
    %v1759 = vld [vmem:[%s1755 + $0x18] sm:$0xff]
    %v1760 = vpack.c.bf16 %v1658, %v1658
    %1761 = vmatprep.subr.bf16.mxu0 %v519
    %1762 = vmatpush1.bf16.msra.mxu0 %v518
    %1763 = vmatprep.subr.bf16.mxu0 %v523
    %1764 = vmatpush1.bf16.msra.mxu0 %v522
    %1765 = vmatprep.subr.bf16.mxu0 %v527
    %1766 = vmatpush1.bf16.msra.mxu0 %v526
    %1767 = vmatprep.subr.bf16.mxu0 %v531
    %1768 = vmatpush1.bf16.msra.mxu0 %v530
    %1769 = vmatprep.subr.bf16.mxu0 %v535
    %1770 = vmatpush1.bf16.msra.mxu0 %v534
    %1771 = vmatprep.subr.bf16.mxu0 %v539
    %1772 = vmatpush1.bf16.msra.mxu0 %v538
    %1773 = vmatprep.subr.bf16.mxu0 %v543
    %1774 = vmatpush1.bf16.msra.mxu0 %v542
    %1775 = vmatprep.subr.bf16.mxu0 %v547
    %1776 = vmatpush1.bf16.msra.mxu0 %v546
    %1777 = vmatprep.subr.bf16.mxu0 0
    %1778 = vmatpush1.bf16.msra.mxu0 0
    %1779 = vmatprep.subr.bf16.mxu0 0
    %1780 = vmatpush1.bf16.msra.mxu0 0
    %1781 = vmatprep.subr.bf16.mxu0 0
    %1782 = vmatpush1.bf16.msra.mxu0 0
    %1783 = vmatprep.subr.bf16.mxu0 0
    %1784 = vmatpush1.bf16.msra.mxu0 0
    %1785 = vmatprep.subr.bf16.mxu0 0
    %1786 = vmatpush1.bf16.msra.mxu0 0
    %1787 = vmatprep.subr.bf16.mxu0 0
    %1788 = vmatpush1.bf16.msra.mxu0 0
    %1789 = vmatprep.subr.bf16.mxu0 0
    %1790 = vmatpush1.bf16.msra.mxu0 0
    %1791 = vmatprep.subr.bf16.mxu0 0
    %1792 = vmatpush1.bf16.msra.mxu0 0
    %1793 = vmatprep.mubr.bf16.mxu0 0
    %1794 = vmatmul.mubr.bf16.gmra.mrb[0].mxu0 %v1760
    %v1795 = vpop.f32.mrb[0].mxu0
    %v1796 = vadd.f32 0.0, %v1795
    %v1797 = vpop.f32.mrb[0].mxu0
    %v1798 = vadd.f32 0.0, %v1797
    %v1799 = vpop.f32.mrb[0].mxu0
    %v1800 = vpop.f32.mrb[0].mxu0
    %1801 = vdwg.mxu0
    %1802 = vmatprep.subr.bf16.mxu0 %v521
    %1803 = vmatpush1.bf16.msra.mxu0 %v520
    %1804 = vmatprep.subr.bf16.mxu0 %v525
    %1805 = vmatpush1.bf16.msra.mxu0 %v524
    %1806 = vmatprep.subr.bf16.mxu0 %v529
    %1807 = vmatpush1.bf16.msra.mxu0 %v528
    %1808 = vmatprep.subr.bf16.mxu0 %v533
    %1809 = vmatpush1.bf16.msra.mxu0 %v532
    %1810 = vmatprep.subr.bf16.mxu0 %v537
    %1811 = vmatpush1.bf16.msra.mxu0 %v536
    %1812 = vmatprep.subr.bf16.mxu0 %v541
    %1813 = vmatpush1.bf16.msra.mxu0 %v540
    %1814 = vmatprep.subr.bf16.mxu0 %v545
    %1815 = vmatpush1.bf16.msra.mxu0 %v544
    %1816 = vmatprep.subr.bf16.mxu0 %v549
    %1817 = vmatpush1.bf16.msra.mxu0 %v548
    %1818 = vmatprep.subr.bf16.mxu0 0
    %1819 = vmatpush1.bf16.msra.mxu0 0
    %1820 = vmatprep.subr.bf16.mxu0 0
    %1821 = vmatpush1.bf16.msra.mxu0 0
    %1822 = vmatprep.subr.bf16.mxu0 0
    %1823 = vmatpush1.bf16.msra.mxu0 0
    %1824 = vmatprep.subr.bf16.mxu0 0
    %1825 = vmatpush1.bf16.msra.mxu0 0
    %1826 = vmatprep.subr.bf16.mxu0 0
    %1827 = vmatpush1.bf16.msra.mxu0 0
    %1828 = vmatprep.subr.bf16.mxu0 0
    %1829 = vmatpush1.bf16.msra.mxu0 0
    %1830 = vmatprep.subr.bf16.mxu0 0
    %1831 = vmatpush1.bf16.msra.mxu0 0
    %1832 = vmatprep.subr.bf16.mxu0 0
    %1833 = vmatpush1.bf16.msra.mxu0 0
    %1834 = vmatprep.mubr.bf16.mxu0 0
    %1835 = vmatmul.mubr.bf16.gmra.mrb[0].mxu0 %v1760
    %v1836 = vpop.f32.mrb[0].mxu0
    %v1837 = vadd.f32 0.0, %v1836
    %v1838 = vpop.f32.mrb[0].mxu0
    %v1839 = vadd.f32 0.0, %v1838
    %v1840 = vpop.f32.mrb[0].mxu0
    %v1841 = vpop.f32.mrb[0].mxu0
    %1842 = vdwg.mxu0
    %v1843 = vadd.f32 %v1756, %v1796
    %v1844 = vadd.f32 %v1757, %v1798
    %v1845 = vadd.f32 %v1758, %v1837
    %v1846 = vadd.f32 %v1759, %v1839
    %v1847 = vxor.u32 %v1751, 2147483648
    %v1848 = vmul.f32 %v1847, 1.442695
    %v1849 = vpow.pop %v1848
    %v1850 = vadd.f32 %v1849, 1.0
    %v1851 = vrcp.pop %v1850
    %v1852 = vmul.f32 1.0, %v1851
    %v1853 = vxor.u32 %v1752, 2147483648
    %v1854 = vmul.f32 %v1853, 1.442695
    %v1855 = vpow.pop %v1854
    %v1856 = vadd.f32 %v1855, 1.0
    %v1857 = vrcp.pop %v1856
    %v1858 = vmul.f32 1.0, %v1857
    %v1859 = vtanh.pop %v1753
    %v1860 = vxor.u32 %v1754, 2147483648
    %v1861 = vmul.f32 %v1860, 1.442695
    %v1862 = vpow.pop %v1861
    %v1863 = vadd.f32 %v1862, 1.0
    %v1864 = vrcp.pop %v1863
    %v1865 = vmul.f32 1.0, %v1864
    %v1866 = vxor.u32 %v1843, 2147483648
    %v1867 = vmul.f32 %v1866, 1.442695
    %v1868 = vpow.pop %v1867
    %v1869 = vadd.f32 %v1868, 1.0
    %v1870 = vrcp.pop %v1869
    %v1871 = vmul.f32 1.0, %v1870
    %v1872 = vxor.u32 %v1844, 2147483648
    %v1873 = vmul.f32 %v1872, 1.442695
    %v1874 = vpow.pop %v1873
    %v1875 = vadd.f32 %v1874, 1.0
    %v1876 = vrcp.pop %v1875
    %v1877 = vmul.f32 1.0, %v1876
    %v1878 = vtanh.pop %v1845
    %v1879 = vxor.u32 %v1846, 2147483648
    %v1880 = vmul.f32 %v1879, 1.442695
    %v1881 = vpow.pop %v1880
    %v1882 = vadd.f32 %v1881, 1.0
    %v1883 = vrcp.pop %v1882
    %v1884 = vmul.f32 1.0, %v1883
    %v1885 = vmul.f32 %v1858, %v1651
    %v1886 = vmul.f32 %v1852, %v1859
    %v1887 = vadd.f32 %v1885, %v1886
    %v1888 = vtanh.pop %v1887
    %v1889 = vmul.f32 %v1865, %v1888
    %v1890 = vmul.f32 %v1877, %v1656
    %v1891 = vmul.f32 %v1871, %v1878
    %v1892 = vadd.f32 %v1890, %v1891
    %v1893 = vtanh.pop %v1892
    %v1894 = vmul.f32 %v1884, %v1893
    %s1895 = scalar_lea.vmem [#allocation14], 40
    %1896 = vst [vmem:[%s1895] sm:$0xff] %v1889
    %s1897 = scalar_lea.vmem [#allocation15], 16
    %1898 = vst [vmem:[%s1897] sm:$0xff] %v1894
    %s1899 = scalar_lea.vmem [#allocation6], 192
    %v1900 = vld [vmem:[%s1899] sm:$0xff]
    %v1901 = vld [vmem:[%s1899 + $0x8] sm:$0xff]
    %v1902 = vld [vmem:[%s1899 + $0x10] sm:$0xff]
    %v1903 = vld [vmem:[%s1899 + $0x18] sm:$0xff]
    %v1904 = vpack.c.bf16 %v1889, %v1889
    %1905 = vmatprep.subr.bf16.mxu0 %v267
    %1906 = vmatpush1.bf16.msra.mxu0 %v266
    %1907 = vmatprep.subr.bf16.mxu0 %v271
    %1908 = vmatpush1.bf16.msra.mxu0 %v270
    %1909 = vmatprep.subr.bf16.mxu0 %v275
    %1910 = vmatpush1.bf16.msra.mxu0 %v274
    %1911 = vmatprep.subr.bf16.mxu0 %v279
    %1912 = vmatpush1.bf16.msra.mxu0 %v278
    %1913 = vmatprep.subr.bf16.mxu0 %v283
    %1914 = vmatpush1.bf16.msra.mxu0 %v282
    %1915 = vmatprep.subr.bf16.mxu0 %v287
    %1916 = vmatpush1.bf16.msra.mxu0 %v286
    %1917 = vmatprep.subr.bf16.mxu0 %v291
    %1918 = vmatpush1.bf16.msra.mxu0 %v290
    %1919 = vmatprep.subr.bf16.mxu0 %v295
    %1920 = vmatpush1.bf16.msra.mxu0 %v294
    %1921 = vmatprep.subr.bf16.mxu0 0
    %1922 = vmatpush1.bf16.msra.mxu0 0
    %1923 = vmatprep.subr.bf16.mxu0 0
    %1924 = vmatpush1.bf16.msra.mxu0 0
    %1925 = vmatprep.subr.bf16.mxu0 0
    %1926 = vmatpush1.bf16.msra.mxu0 0
    %1927 = vmatprep.subr.bf16.mxu0 0
    %1928 = vmatpush1.bf16.msra.mxu0 0
    %1929 = vmatprep.subr.bf16.mxu0 0
    %1930 = vmatpush1.bf16.msra.mxu0 0
    %1931 = vmatprep.subr.bf16.mxu0 0
    %1932 = vmatpush1.bf16.msra.mxu0 0
    %1933 = vmatprep.subr.bf16.mxu0 0
    %1934 = vmatpush1.bf16.msra.mxu0 0
    %1935 = vmatprep.subr.bf16.mxu0 0
    %1936 = vmatpush1.bf16.msra.mxu0 0
    %1937 = vmatprep.mubr.bf16.mxu0 0
    %1938 = vmatmul.mubr.bf16.gmra.mrb[0].mxu0 %v1904
    %v1939 = vpop.f32.mrb[0].mxu0
    %v1940 = vadd.f32 0.0, %v1939
    %v1941 = vpop.f32.mrb[0].mxu0
    %v1942 = vadd.f32 0.0, %v1941
    %v1943 = vpop.f32.mrb[0].mxu0
    %v1944 = vpop.f32.mrb[0].mxu0
    %1945 = vdwg.mxu0
    %1946 = vmatprep.subr.bf16.mxu0 %v269
    %1947 = vmatpush1.bf16.msra.mxu0 %v268
    %1948 = vmatprep.subr.bf16.mxu0 %v273
    %1949 = vmatpush1.bf16.msra.mxu0 %v272
    %1950 = vmatprep.subr.bf16.mxu0 %v277
    %1951 = vmatpush1.bf16.msra.mxu0 %v276
    %1952 = vmatprep.subr.bf16.mxu0 %v281
    %1953 = vmatpush1.bf16.msra.mxu0 %v280
    %1954 = vmatprep.subr.bf16.mxu0 %v285
    %1955 = vmatpush1.bf16.msra.mxu0 %v284
    %1956 = vmatprep.subr.bf16.mxu0 %v289
    %1957 = vmatpush1.bf16.msra.mxu0 %v288
    %1958 = vmatprep.subr.bf16.mxu0 %v293
    %1959 = vmatpush1.bf16.msra.mxu0 %v292
    %1960 = vmatprep.subr.bf16.mxu0 %v297
    %1961 = vmatpush1.bf16.msra.mxu0 %v296
    %1962 = vmatprep.subr.bf16.mxu0 0
    %1963 = vmatpush1.bf16.msra.mxu0 0
    %1964 = vmatprep.subr.bf16.mxu0 0
    %1965 = vmatpush1.bf16.msra.mxu0 0
    %1966 = vmatprep.subr.bf16.mxu0 0
    %1967 = vmatpush1.bf16.msra.mxu0 0
    %1968 = vmatprep.subr.bf16.mxu0 0
    %1969 = vmatpush1.bf16.msra.mxu0 0
    %1970 = vmatprep.subr.bf16.mxu0 0
    %1971 = vmatpush1.bf16.msra.mxu0 0
    %1972 = vmatprep.subr.bf16.mxu0 0
    %1973 = vmatpush1.bf16.msra.mxu0 0
    %1974 = vmatprep.subr.bf16.mxu0 0
    %1975 = vmatpush1.bf16.msra.mxu0 0
    %1976 = vmatprep.subr.bf16.mxu0 0
    %1977 = vmatpush1.bf16.msra.mxu0 0
    %1978 = vmatprep.mubr.bf16.mxu0 0
    %1979 = vmatmul.mubr.bf16.gmra.mrb[0].mxu0 %v1904
    %v1980 = vpop.f32.mrb[0].mxu0
    %v1981 = vadd.f32 0.0, %v1980
    %v1982 = vpop.f32.mrb[0].mxu0
    %v1983 = vadd.f32 0.0, %v1982
    %v1984 = vpop.f32.mrb[0].mxu0
    %v1985 = vpop.f32.mrb[0].mxu0
    %1986 = vdwg.mxu0
    %v1987 = vadd.f32 %v1900, %v1940
    %v1988 = vadd.f32 %v1901, %v1942
    %v1989 = vadd.f32 %v1902, %v1981
    %v1990 = vadd.f32 %v1903, %v1983
    %s1991 = scalar_lea.vmem [#allocation9], 32
    %v1992 = vld [vmem:[%s1991] sm:$0xff]
    %v1993 = vld [vmem:[%s1991 + $0x8] sm:$0xff]
    %v1994 = vld [vmem:[%s1991 + $0x10] sm:$0xff]
    %v1995 = vld [vmem:[%s1991 + $0x18] sm:$0xff]
    %v1996 = vpack.c.bf16 %v1894, %v1894
    %1997 = vmatprep.subr.bf16.mxu0 %v519
    %1998 = vmatpush1.bf16.msra.mxu0 %v518
    %1999 = vmatprep.subr.bf16.mxu0 %v523
    %2000 = vmatpush1.bf16.msra.mxu0 %v522
    %2001 = vmatprep.subr.bf16.mxu0 %v527
    %2002 = vmatpush1.bf16.msra.mxu0 %v526
    %2003 = vmatprep.subr.bf16.mxu0 %v531
    %2004 = vmatpush1.bf16.msra.mxu0 %v530
    %2005 = vmatprep.subr.bf16.mxu0 %v535
    %2006 = vmatpush1.bf16.msra.mxu0 %v534
    %2007 = vmatprep.subr.bf16.mxu0 %v539
    %2008 = vmatpush1.bf16.msra.mxu0 %v538
    %2009 = vmatprep.subr.bf16.mxu0 %v543
    %2010 = vmatpush1.bf16.msra.mxu0 %v542
    %2011 = vmatprep.subr.bf16.mxu0 %v547
    %2012 = vmatpush1.bf16.msra.mxu0 %v546
    %2013 = vmatprep.subr.bf16.mxu0 0
    %2014 = vmatpush1.bf16.msra.mxu0 0
    %2015 = vmatprep.subr.bf16.mxu0 0
    %2016 = vmatpush1.bf16.msra.mxu0 0
    %2017 = vmatprep.subr.bf16.mxu0 0
    %2018 = vmatpush1.bf16.msra.mxu0 0
    %2019 = vmatprep.subr.bf16.mxu0 0
    %2020 = vmatpush1.bf16.msra.mxu0 0
    %2021 = vmatprep.subr.bf16.mxu0 0
    %2022 = vmatpush1.bf16.msra.mxu0 0
    %2023 = vmatprep.subr.bf16.mxu0 0
    %2024 = vmatpush1.bf16.msra.mxu0 0
    %2025 = vmatprep.subr.bf16.mxu0 0
    %2026 = vmatpush1.bf16.msra.mxu0 0
    %2027 = vmatprep.subr.bf16.mxu0 0
    %2028 = vmatpush1.bf16.msra.mxu0 0
    %2029 = vmatprep.mubr.bf16.mxu0 0
    %2030 = vmatmul.mubr.bf16.gmra.mrb[0].mxu0 %v1996
    %v2031 = vpop.f32.mrb[0].mxu0
    %v2032 = vadd.f32 0.0, %v2031
    %v2033 = vpop.f32.mrb[0].mxu0
    %v2034 = vadd.f32 0.0, %v2033
    %v2035 = vpop.f32.mrb[0].mxu0
    %v2036 = vpop.f32.mrb[0].mxu0
    %2037 = vdwg.mxu0
    %2038 = vmatprep.subr.bf16.mxu0 %v521
    %2039 = vmatpush1.bf16.msra.mxu0 %v520
    %2040 = vmatprep.subr.bf16.mxu0 %v525
    %2041 = vmatpush1.bf16.msra.mxu0 %v524
    %2042 = vmatprep.subr.bf16.mxu0 %v529
    %2043 = vmatpush1.bf16.msra.mxu0 %v528
    %2044 = vmatprep.subr.bf16.mxu0 %v533
    %2045 = vmatpush1.bf16.msra.mxu0 %v532
    %2046 = vmatprep.subr.bf16.mxu0 %v537
    %2047 = vmatpush1.bf16.msra.mxu0 %v536
    %2048 = vmatprep.subr.bf16.mxu0 %v541
    %2049 = vmatpush1.bf16.msra.mxu0 %v540
    %2050 = vmatprep.subr.bf16.mxu0 %v545
    %2051 = vmatpush1.bf16.msra.mxu0 %v544
    %2052 = vmatprep.subr.bf16.mxu0 %v549
    %2053 = vmatpush1.bf16.msra.mxu0 %v548
    %2054 = vmatprep.subr.bf16.mxu0 0
    %2055 = vmatpush1.bf16.msra.mxu0 0
    %2056 = vmatprep.subr.bf16.mxu0 0
    %2057 = vmatpush1.bf16.msra.mxu0 0
    %2058 = vmatprep.subr.bf16.mxu0 0
    %2059 = vmatpush1.bf16.msra.mxu0 0
    %2060 = vmatprep.subr.bf16.mxu0 0
    %2061 = vmatpush1.bf16.msra.mxu0 0
    %2062 = vmatprep.subr.bf16.mxu0 0
    %2063 = vmatpush1.bf16.msra.mxu0 0
    %2064 = vmatprep.subr.bf16.mxu0 0
    %2065 = vmatpush1.bf16.msra.mxu0 0
    %2066 = vmatprep.subr.bf16.mxu0 0
    %2067 = vmatpush1.bf16.msra.mxu0 0
    %2068 = vmatprep.subr.bf16.mxu0 0
    %2069 = vmatpush1.bf16.msra.mxu0 0
    %2070 = vmatprep.mubr.bf16.mxu0 0
    %2071 = vmatmul.mubr.bf16.gmra.mrb[0].mxu0 %v1996
    %v2072 = vpop.f32.mrb[0].mxu0
    %v2073 = vadd.f32 0.0, %v2072
    %v2074 = vpop.f32.mrb[0].mxu0
    %v2075 = vadd.f32 0.0, %v2074
    %v2076 = vpop.f32.mrb[0].mxu0
    %v2077 = vpop.f32.mrb[0].mxu0
    %2078 = vdwg.mxu0
    %v2079 = vadd.f32 %v1992, %v2032
    %v2080 = vadd.f32 %v1993, %v2034
    %v2081 = vadd.f32 %v1994, %v2073
    %v2082 = vadd.f32 %v1995, %v2075
    %v2083 = vxor.u32 %v1987, 2147483648
    %v2084 = vmul.f32 %v2083, 1.442695
    %v2085 = vpow.pop %v2084
    %v2086 = vadd.f32 %v2085, 1.0
    %v2087 = vrcp.pop %v2086
    %v2088 = vmul.f32 1.0, %v2087
    %v2089 = vxor.u32 %v1988, 2147483648
    %v2090 = vmul.f32 %v2089, 1.442695
    %v2091 = vpow.pop %v2090
    %v2092 = vadd.f32 %v2091, 1.0
    %v2093 = vrcp.pop %v2092
    %v2094 = vmul.f32 1.0, %v2093
    %v2095 = vtanh.pop %v1989
    %v2096 = vxor.u32 %v1990, 2147483648
    %v2097 = vmul.f32 %v2096, 1.442695
    %v2098 = vpow.pop %v2097
    %v2099 = vadd.f32 %v2098, 1.0
    %v2100 = vrcp.pop %v2099
    %v2101 = vmul.f32 1.0, %v2100
    %v2102 = vxor.u32 %v2079, 2147483648
    %v2103 = vmul.f32 %v2102, 1.442695
    %v2104 = vpow.pop %v2103
    %v2105 = vadd.f32 %v2104, 1.0
    %v2106 = vrcp.pop %v2105
    %v2107 = vmul.f32 1.0, %v2106
    %v2108 = vxor.u32 %v2080, 2147483648
    %v2109 = vmul.f32 %v2108, 1.442695
    %v2110 = vpow.pop %v2109
    %v2111 = vadd.f32 %v2110, 1.0
    %v2112 = vrcp.pop %v2111
    %v2113 = vmul.f32 1.0, %v2112
    %v2114 = vtanh.pop %v2081
    %v2115 = vxor.u32 %v2082, 2147483648
    %v2116 = vmul.f32 %v2115, 1.442695
    %v2117 = vpow.pop %v2116
    %v2118 = vadd.f32 %v2117, 1.0
    %v2119 = vrcp.pop %v2118
    %v2120 = vmul.f32 1.0, %v2119
    %v2121 = vmul.f32 %v2094, %v1887
    %v2122 = vmul.f32 %v2088, %v2095
    %v2123 = vadd.f32 %v2121, %v2122
    %v2124 = vtanh.pop %v2123
    %v2125 = vmul.f32 %v2101, %v2124
    %v2126 = vmul.f32 %v2113, %v1892
    %v2127 = vmul.f32 %v2107, %v2114
    %v2128 = vadd.f32 %v2126, %v2127
    %v2129 = vtanh.pop %v2128
    %v2130 = vmul.f32 %v2120, %v2129
    %s2131 = scalar_lea.vmem [#allocation14], 48
    %2132 = vst [vmem:[%s2131] sm:$0xff] %v2125
    %s2133 = scalar_lea.vmem [#allocation15], 8
    %2134 = vst [vmem:[%s2133] sm:$0xff] %v2130
    %s2135 = scalar_lea.vmem [#allocation6], 224
    %v2136 = vld [vmem:[%s2135] sm:$0xff]
    %v2137 = vld [vmem:[%s2135 + $0x8] sm:$0xff]
    %v2138 = vld [vmem:[%s2135 + $0x10] sm:$0xff]
    %v2139 = vld [vmem:[%s2135 + $0x18] sm:$0xff]
    %v2140 = vpack.c.bf16 %v2125, %v2125
    %2141 = vmatprep.subr.bf16.mxu0 %v267
    %2142 = vmatpush1.bf16.msra.mxu0 %v266
    %2143 = vmatprep.subr.bf16.mxu0 %v271
    %2144 = vmatpush1.bf16.msra.mxu0 %v270
    %2145 = vmatprep.subr.bf16.mxu0 %v275
    %2146 = vmatpush1.bf16.msra.mxu0 %v274
    %2147 = vmatprep.subr.bf16.mxu0 %v279
    %2148 = vmatpush1.bf16.msra.mxu0 %v278
    %2149 = vmatprep.subr.bf16.mxu0 %v283
    %2150 = vmatpush1.bf16.msra.mxu0 %v282
    %2151 = vmatprep.subr.bf16.mxu0 %v287
    %2152 = vmatpush1.bf16.msra.mxu0 %v286
    %2153 = vmatprep.subr.bf16.mxu0 %v291
    %2154 = vmatpush1.bf16.msra.mxu0 %v290
    %2155 = vmatprep.subr.bf16.mxu0 %v295
    %2156 = vmatpush1.bf16.msra.mxu0 %v294
    %2157 = vmatprep.subr.bf16.mxu0 0
    %2158 = vmatpush1.bf16.msra.mxu0 0
    %2159 = vmatprep.subr.bf16.mxu0 0
    %2160 = vmatpush1.bf16.msra.mxu0 0
    %2161 = vmatprep.subr.bf16.mxu0 0
    %2162 = vmatpush1.bf16.msra.mxu0 0
    %2163 = vmatprep.subr.bf16.mxu0 0
    %2164 = vmatpush1.bf16.msra.mxu0 0
    %2165 = vmatprep.subr.bf16.mxu0 0
    %2166 = vmatpush1.bf16.msra.mxu0 0
    %2167 = vmatprep.subr.bf16.mxu0 0
    %2168 = vmatpush1.bf16.msra.mxu0 0
    %2169 = vmatprep.subr.bf16.mxu0 0
    %2170 = vmatpush1.bf16.msra.mxu0 0
    %2171 = vmatprep.subr.bf16.mxu0 0
    %2172 = vmatpush1.bf16.msra.mxu0 0
    %2173 = vmatprep.mubr.bf16.mxu0 0
    %2174 = vmatmul.mubr.bf16.gmra.mrb[0].mxu0 %v2140
    %v2175 = vpop.f32.mrb[0].mxu0
    %v2176 = vadd.f32 0.0, %v2175
    %v2177 = vpop.f32.mrb[0].mxu0
    %v2178 = vadd.f32 0.0, %v2177
    %v2179 = vpop.f32.mrb[0].mxu0
    %v2180 = vpop.f32.mrb[0].mxu0
    %2181 = vdwg.mxu0
    %2182 = vmatprep.subr.bf16.mxu0 %v269
    %2183 = vmatpush1.bf16.msra.mxu0 %v268
    %2184 = vmatprep.subr.bf16.mxu0 %v273
    %2185 = vmatpush1.bf16.msra.mxu0 %v272
    %2186 = vmatprep.subr.bf16.mxu0 %v277
    %2187 = vmatpush1.bf16.msra.mxu0 %v276
    %2188 = vmatprep.subr.bf16.mxu0 %v281
    %2189 = vmatpush1.bf16.msra.mxu0 %v280
    %2190 = vmatprep.subr.bf16.mxu0 %v285
    %2191 = vmatpush1.bf16.msra.mxu0 %v284
    %2192 = vmatprep.subr.bf16.mxu0 %v289
    %2193 = vmatpush1.bf16.msra.mxu0 %v288
    %2194 = vmatprep.subr.bf16.mxu0 %v293
    %2195 = vmatpush1.bf16.msra.mxu0 %v292
    %2196 = vmatprep.subr.bf16.mxu0 %v297
    %2197 = vmatpush1.bf16.msra.mxu0 %v296
    %2198 = vmatprep.subr.bf16.mxu0 0
    %2199 = vmatpush1.bf16.msra.mxu0 0
    %2200 = vmatprep.subr.bf16.mxu0 0
    %2201 = vmatpush1.bf16.msra.mxu0 0
    %2202 = vmatprep.subr.bf16.mxu0 0
    %2203 = vmatpush1.bf16.msra.mxu0 0
    %2204 = vmatprep.subr.bf16.mxu0 0
    %2205 = vmatpush1.bf16.msra.mxu0 0
    %2206 = vmatprep.subr.bf16.mxu0 0
    %2207 = vmatpush1.bf16.msra.mxu0 0
    %2208 = vmatprep.subr.bf16.mxu0 0
    %2209 = vmatpush1.bf16.msra.mxu0 0
    %2210 = vmatprep.subr.bf16.mxu0 0
    %2211 = vmatpush1.bf16.msra.mxu0 0
    %2212 = vmatprep.subr.bf16.mxu0 0
    %2213 = vmatpush1.bf16.msra.mxu0 0
    %2214 = vmatprep.mubr.bf16.mxu0 0
    %2215 = vmatmul.mubr.bf16.gmra.mrb[0].mxu0 %v2140
    %v2216 = vpop.f32.mrb[0].mxu0
    %v2217 = vadd.f32 0.0, %v2216
    %v2218 = vpop.f32.mrb[0].mxu0
    %v2219 = vadd.f32 0.0, %v2218
    %v2220 = vpop.f32.mrb[0].mxu0
    %v2221 = vpop.f32.mrb[0].mxu0
    %2222 = vdwg.mxu0
    %v2223 = vadd.f32 %v2136, %v2176
    %v2224 = vadd.f32 %v2137, %v2178
    %v2225 = vadd.f32 %v2138, %v2217
    %v2226 = vadd.f32 %v2139, %v2219
    %v2227 = vld [vmem:[#allocation9] sm:$0xff]
    %v2228 = vld [vmem:[#allocation9 + $0x8] sm:$0xff]
    %v2229 = vld [vmem:[#allocation9 + $0x10] sm:$0xff]
    %v2230 = vld [vmem:[#allocation9 + $0x18] sm:$0xff]
    %v2231 = vpack.c.bf16 %v2130, %v2130
    %2232 = vmatprep.subr.bf16.mxu0 %v519
    %2233 = vmatpush1.bf16.msra.mxu0 %v518
    %2234 = vmatprep.subr.bf16.mxu0 %v523
    %2235 = vmatpush1.bf16.msra.mxu0 %v522
    %2236 = vmatprep.subr.bf16.mxu0 %v527
    %2237 = vmatpush1.bf16.msra.mxu0 %v526
    %2238 = vmatprep.subr.bf16.mxu0 %v531
    %2239 = vmatpush1.bf16.msra.mxu0 %v530
    %2240 = vmatprep.subr.bf16.mxu0 %v535
    %2241 = vmatpush1.bf16.msra.mxu0 %v534
    %2242 = vmatprep.subr.bf16.mxu0 %v539
    %2243 = vmatpush1.bf16.msra.mxu0 %v538
    %2244 = vmatprep.subr.bf16.mxu0 %v543
    %2245 = vmatpush1.bf16.msra.mxu0 %v542
    %2246 = vmatprep.subr.bf16.mxu0 %v547
    %2247 = vmatpush1.bf16.msra.mxu0 %v546
    %2248 = vmatprep.subr.bf16.mxu0 0
    %2249 = vmatpush1.bf16.msra.mxu0 0
    %2250 = vmatprep.subr.bf16.mxu0 0
    %2251 = vmatpush1.bf16.msra.mxu0 0
    %2252 = vmatprep.subr.bf16.mxu0 0
    %2253 = vmatpush1.bf16.msra.mxu0 0
    %2254 = vmatprep.subr.bf16.mxu0 0
    %2255 = vmatpush1.bf16.msra.mxu0 0
    %2256 = vmatprep.subr.bf16.mxu0 0
    %2257 = vmatpush1.bf16.msra.mxu0 0
    %2258 = vmatprep.subr.bf16.mxu0 0
    %2259 = vmatpush1.bf16.msra.mxu0 0
    %2260 = vmatprep.subr.bf16.mxu0 0
    %2261 = vmatpush1.bf16.msra.mxu0 0
    %2262 = vmatprep.subr.bf16.mxu0 0
    %2263 = vmatpush1.bf16.msra.mxu0 0
    %2264 = vmatprep.mubr.bf16.mxu0 0
    %2265 = vmatmul.mubr.bf16.gmra.mrb[0].mxu0 %v2231
    %v2266 = vpop.f32.mrb[0].mxu0
    %v2267 = vadd.f32 0.0, %v2266
    %v2268 = vpop.f32.mrb[0].mxu0
    %v2269 = vadd.f32 0.0, %v2268
    %v2270 = vpop.f32.mrb[0].mxu0
    %v2271 = vpop.f32.mrb[0].mxu0
    %2272 = vdwg.mxu0
    %2273 = vmatprep.subr.bf16.mxu0 %v521
    %2274 = vmatpush1.bf16.msra.mxu0 %v520
    %2275 = vmatprep.subr.bf16.mxu0 %v525
    %2276 = vmatpush1.bf16.msra.mxu0 %v524
    %2277 = vmatprep.subr.bf16.mxu0 %v529
    %2278 = vmatpush1.bf16.msra.mxu0 %v528
    %2279 = vmatprep.subr.bf16.mxu0 %v533
    %2280 = vmatpush1.bf16.msra.mxu0 %v532
    %2281 = vmatprep.subr.bf16.mxu0 %v537
    %2282 = vmatpush1.bf16.msra.mxu0 %v536
    %2283 = vmatprep.subr.bf16.mxu0 %v541
    %2284 = vmatpush1.bf16.msra.mxu0 %v540
    %2285 = vmatprep.subr.bf16.mxu0 %v545
    %2286 = vmatpush1.bf16.msra.mxu0 %v544
    %2287 = vmatprep.subr.bf16.mxu0 %v549
    %2288 = vmatpush1.bf16.msra.mxu0 %v548
    %2289 = vmatprep.subr.bf16.mxu0 0
    %2290 = vmatpush1.bf16.msra.mxu0 0
    %2291 = vmatprep.subr.bf16.mxu0 0
    %2292 = vmatpush1.bf16.msra.mxu0 0
    %2293 = vmatprep.subr.bf16.mxu0 0
    %2294 = vmatpush1.bf16.msra.mxu0 0
    %2295 = vmatprep.subr.bf16.mxu0 0
    %2296 = vmatpush1.bf16.msra.mxu0 0
    %2297 = vmatprep.subr.bf16.mxu0 0
    %2298 = vmatpush1.bf16.msra.mxu0 0
    %2299 = vmatprep.subr.bf16.mxu0 0
    %2300 = vmatpush1.bf16.msra.mxu0 0
    %2301 = vmatprep.subr.bf16.mxu0 0
    %2302 = vmatpush1.bf16.msra.mxu0 0
    %2303 = vmatprep.subr.bf16.mxu0 0
    %2304 = vmatpush1.bf16.msra.mxu0 0
    %2305 = vmatprep.mubr.bf16.mxu0 0
    %2306 = vmatmul.mubr.bf16.gmra.mrb[0].mxu0 %v2231
    %v2307 = vpop.f32.mrb[0].mxu0
    %v2308 = vadd.f32 0.0, %v2307
    %v2309 = vpop.f32.mrb[0].mxu0
    %v2310 = vadd.f32 0.0, %v2309
    %v2311 = vpop.f32.mrb[0].mxu0
    %v2312 = vpop.f32.mrb[0].mxu0
    %2313 = vdwg.mxu0
    %v2314 = vadd.f32 %v2227, %v2267
    %v2315 = vadd.f32 %v2228, %v2269
    %v2316 = vadd.f32 %v2229, %v2308
    %v2317 = vadd.f32 %v2230, %v2310
    %v2318 = vxor.u32 %v2223, 2147483648
    %v2319 = vmul.f32 %v2318, 1.442695
    %v2320 = vpow.pop %v2319
    %v2321 = vadd.f32 %v2320, 1.0
    %v2322 = vrcp.pop %v2321
    %v2323 = vmul.f32 1.0, %v2322
    %v2324 = vxor.u32 %v2224, 2147483648
    %v2325 = vmul.f32 %v2324, 1.442695
    %v2326 = vpow.pop %v2325
    %v2327 = vadd.f32 %v2326, 1.0
    %v2328 = vrcp.pop %v2327
    %v2329 = vmul.f32 1.0, %v2328
    %v2330 = vtanh.pop %v2225
    %v2331 = vxor.u32 %v2226, 2147483648
    %v2332 = vmul.f32 %v2331, 1.442695
    %v2333 = vpow.pop %v2332
    %v2334 = vadd.f32 %v2333, 1.0
    %v2335 = vrcp.pop %v2334
    %v2336 = vmul.f32 1.0, %v2335
    %v2337 = vxor.u32 %v2314, 2147483648
    %v2338 = vmul.f32 %v2337, 1.442695
    %v2339 = vpow.pop %v2338
    %v2340 = vadd.f32 %v2339, 1.0
    %v2341 = vrcp.pop %v2340
    %v2342 = vmul.f32 1.0, %v2341
    %v2343 = vxor.u32 %v2315, 2147483648
    %v2344 = vmul.f32 %v2343, 1.442695
    %v2345 = vpow.pop %v2344
    %v2346 = vadd.f32 %v2345, 1.0
    %v2347 = vrcp.pop %v2346
    %v2348 = vmul.f32 1.0, %v2347
    %v2349 = vtanh.pop %v2316
    %v2350 = vxor.u32 %v2317, 2147483648
    %v2351 = vmul.f32 %v2350, 1.442695
    %v2352 = vpow.pop %v2351
    %v2353 = vadd.f32 %v2352, 1.0
    %v2354 = vrcp.pop %v2353
    %v2355 = vmul.f32 1.0, %v2354
    %v2356 = vmul.f32 %v2329, %v2123
    %v2357 = vmul.f32 %v2323, %v2330
    %v2358 = vadd.f32 %v2356, %v2357
    %v2359 = vtanh.pop %v2358
    %v2360 = vmul.f32 %v2336, %v2359
    %v2361 = vmul.f32 %v2348, %v2128
    %v2362 = vmul.f32 %v2342, %v2349
    %v2363 = vadd.f32 %v2361, %v2362
    %v2364 = vtanh.pop %v2363
    %v2365 = vmul.f32 %v2355, %v2364
    %s2366 = scalar_lea.vmem [#allocation14], 56
    %2367 = vst [vmem:[%s2366] sm:$0xff] %v2360
    %2368 = vst [vmem:[#allocation15] sm:$0xff] %v2365
    %2369 = vst [vmem:[#allocation2] sm:$0xff] %v2360
    %2370 = vst [vmem:[#allocation3] sm:$0xff] %v2358
    %2371 = vst [vmem:[#allocation4] sm:$0xff] %v2365
    %2372 = vst [vmem:[#allocation5] sm:$0xff] %v2363
    // Predicated region
    $region38: #{rnn_model_forward.6} parent=1 // pred_check
      %p2373 = pneg %p89
    $region39: #{rnn_model_forward.6} parent=1 // pred_check_branch
      %2375 = sbr.rel (%p2373) target = $region41
    $region40: #{rnn_model_forward.6} parent=1 // pred_region
      %2376 = vst [vmem:[#allocation17] sm:$0xff] %v2360
      %2377 = vst [vmem:[#allocation18] sm:$0xff] %v2365
    $region41: #{rnn_model_forward.6} parent=1 // pred_fallthru
      _
    // Predicated region
    $region42: #{rnn_model_forward.6} parent=1 // pred_check
      _
    $region43: #{rnn_model_forward.6} parent=1 // pred_check_branch
      %2379 = sbr.rel (0) target = $region45
    $region44: #{rnn_model_forward.6} parent=1 // pred_region
      %s2381 = ssub.s32 1024, 1024
      %2382 = vsyncadd [#allocation8], %s2381
      %s2383 = sshll.u32 [#allocation14], 4
      %s2384 = int_to_ptr.vmem [resolvable:$true] %s2383
      %2389 = dma.vmem_to_hbm [thread:$0]  %s2384, 1024, %s4, [#allocation8], 128, 128, 8
    $region45: #{rnn_model_forward.6} parent=1 // pred_fallthru
      _
    // Predicated region
    $region46: #{rnn_model_forward.6} parent=1 // pred_check
      _
    $region47: #{rnn_model_forward.6} parent=1 // pred_check_branch
      %2391 = sbr.rel (0) target = $region49
    $region48: #{rnn_model_forward.6} parent=1 // pred_region
      %s2392 = ssub.s32 0, 0
      %s2393 = smul.u32 8, %s2392
      %s2395 = ssub.s32 1024, 1024
      %2396 = vsyncadd [#allocation16], %s2395
      %s2397 = smul.addr %s2393, 128
      %s2398 = scalar_lea.hbm %s5, %s2397
      %s2399 = sshll.u32 [#allocation15], 4
      %s2400 = int_to_ptr.vmem [resolvable:$true] %s2399
      %2405 = dma.vmem_to_hbm [thread:$0]  %s2400, 1024, %s2398, [#allocation16], 128, 128, 8
    $region49: #{rnn_model_forward.6} parent=1 // pred_fallthru
      _
    // Predicated region
    $region50: #{rnn_model_forward.6} parent=1 // pred_check
      _
    $region51: #{rnn_model_forward.6} parent=1 // pred_check_branch
      %2407 = sbr.rel (0) target = $region53
    $region52: #{rnn_model_forward.6} parent=1 // pred_region
      %s2409 = ssub.s32 128, 128
      %2410 = vsyncadd [#allocation16], %s2409
      %s2412 = sshll.u32 [#allocation17], 4
      %s2413 = int_to_ptr.vmem [resolvable:$true] %s2412
      %2415 = dma.vmem_to_hbm [thread:$0]  %s2413, 128, %s6, [#allocation16]
    $region53: #{rnn_model_forward.6} parent=1 // pred_fallthru
      _
    // Predicated region
    $region54: #{rnn_model_forward.6} parent=1 // pred_check
      _
    $region55: #{rnn_model_forward.6} parent=1 // pred_check_branch
      %2417 = sbr.rel (0) target = $region57
    $region56: #{rnn_model_forward.6} parent=1 // pred_region
      %s2419 = ssub.s32 128, 128
      %2420 = vsyncadd [#allocation19], %s2419
      %s2422 = sshll.u32 [#allocation18], 4
      %s2423 = int_to_ptr.vmem [resolvable:$true] %s2422
      %2425 = dma.vmem_to_hbm [thread:$0]  %s2423, 128, %s7, [#allocation19]
    $region57: #{rnn_model_forward.6} parent=1 // pred_fallthru
      _
    // Predicated region
    $region58: #{rnn_model_forward.6} parent=1 // pred_check
      _
    $region59: #{rnn_model_forward.6} parent=1 // pred_check_branch
      %2427 = sbr.rel (0) target = $region61
    $region60: #{rnn_model_forward.6} parent=1 // pred_region
      %2428 = dma.done [#allocation8], 1024
    $region61: #{rnn_model_forward.6} parent=1 // pred_fallthru
      _
    // Predicated region
    $region62: #{rnn_model_forward.6} parent=1 // pred_check
      _
    $region63: #{rnn_model_forward.6} parent=1 // pred_check_branch
      %2430 = sbr.rel (0) target = $region65
    $region64: #{rnn_model_forward.6} parent=1 // pred_region
      %2431 = dma.done [#allocation16], 1024
    $region65: #{rnn_model_forward.6} parent=1 // pred_fallthru
      _
    // Predicated region
    $region66: #{rnn_model_forward.6} parent=1 // pred_check
      _
    $region67: #{rnn_model_forward.6} parent=1 // pred_check_branch
      %2433 = sbr.rel (0) target = $region69
    $region68: #{rnn_model_forward.6} parent=1 // pred_region
      %2434 = dma.done [#allocation16], 128
    $region69: #{rnn_model_forward.6} parent=1 // pred_fallthru
      _
    // Predicated region
    $region70: #{rnn_model_forward.6} parent=1 // pred_check
      _
    $region71: #{rnn_model_forward.6} parent=1 // pred_check_branch
      %2436 = sbr.rel (0) target = $region73
    $region72: #{rnn_model_forward.6} parent=1 // pred_region
      %2437 = dma.done [#allocation19], 128
    $region73: #{rnn_model_forward.6} parent=1 // pred_fallthru
      _
    %2438 = vsyncpa [#allocation7], 1
    %2439 = vsyncpa [#allocation10], 1
    %2440 = vsyncpa [#allocation13], 1
    %2441 = vsyncpa [#allocation8], 1
    %2442 = vsyncpa [#allocation16], 1
    %2443 = vsyncpa [#allocation19], 1

</llo_original>
